<compile_context>
chip_gen: v6e
topology: v6e:2x2x1
jax: 0.10.0
libtpu: 0.0.40
codegen_flags: <defaults>
</compile_context>

<pallas_src>
import functools

import jax
import jax.numpy as jnp
from jax.experimental import pallas as pl
from jax.experimental.pallas import tpu as pltpu

EPS = 1e-5
LANE = 128
STATS_ROWS = 8          # per-tile stats block: row 0 = sum, row 1 = sum(y*y)
MAX_TM = 512            # conv M-tile rows; (512,128) f32 = 256 KiB per buffer
MXU_DTYPE = jnp.bfloat16  # bf16 operands -> native MXU path on v5e/v6e/v7x

_VMEM_LIMIT = 32 * 1024 * 1024  # safe on v5e/v6e/v7x at these tile sizes
_GRID_PARAMS = pltpu.CompilerParams(
    dimension_semantics=("parallel",), vmem_limit_bytes=_VMEM_LIMIT)
_SINGLE_PARAMS = pltpu.CompilerParams(vmem_limit_bytes=_VMEM_LIMIT)


# ----------------------------------------------------------------------------
# small padding helpers
# ----------------------------------------------------------------------------
def _round_up(x, m):
    return (x + m - 1) // m * m


def _pad_cols(a, n, fill=0.0):
    pad = n - a.shape[-1]
    if pad <= 0:
        return a
    width = [(0, 0)] * (a.ndim - 1) + [(0, pad)]
    return jnp.pad(a, width, constant_values=fill)


def _pad_rows(a, n, fill=0.0):
    pad = n - a.shape[0]
    if pad <= 0:
        return a
    width = [(0, pad)] + [(0, 0)] * (a.ndim - 1)
    return jnp.pad(a, width, constant_values=fill)


def _pad_vec(v, n, fill=0.0):
    pad = n - v.shape[0]
    if pad <= 0:
        return v
    return jnp.pad(v, (0, pad), constant_values=fill)


# ----------------------------------------------------------------------------
# Pallas kernels
# ----------------------------------------------------------------------------
def _conv_mm_stats_kernel(x_ref, w_ref, y_ref, stats_ref):
    """Phase 1: y-tile = x-tile @ w (bf16 MXU, f32 accumulate) plus per-tile
    column sum / sum-of-squares partials for the GLOBAL BatchNorm statistics.
    Zero-padded rows / K-columns contribute exactly 0 to y and the partials."""
    y = jnp.dot(x_ref[...], w_ref[...], preferred_element_type=jnp.float32)
    y_ref[...] = y
    s = jnp.sum(y, axis=0, keepdims=True)                 # (1, Np)
    ss = jnp.sum(y * y, axis=0, keepdims=True)            # (1, Np) single-pass
    pad = jnp.zeros((STATS_ROWS - 2, y.shape[1]), jnp.float32)
    stats_ref[...] = jnp.concatenate([s, ss, pad], axis=0)


def _bn_sigmoid_apply_kernel(y_ref, ac_ref, o_ref):
    """Phase 2: z = y*a + c (folded BatchNorm affine), sigmoid, bf16 store.
    exp -> EUP, approx reciprocal -> EUP: elementwise tail stays off the VALU."""
    z = y_ref[...] * ac_ref[0:1, :] + ac_ref[1:2, :]
    o_ref[...] = pl.reciprocal(1.0 + jnp.exp(-z), approx=True).astype(o_ref.dtype)


def _bn_sigmoid_rows(y, gamma, beta):
    """Training-mode BatchNorm over axis 0 (single-pass variance) + sigmoid."""
    m = y.shape[0]
    mean = jnp.sum(y, axis=0, keepdims=True) / m
    var = jnp.maximum(jnp.sum(y * y, axis=0, keepdims=True) / m - mean * mean, 0.0)
    a = gamma * jax.lax.rsqrt(var + EPS)
    c = beta - mean * a
    z = y * a + c
    return pl.reciprocal(1.0 + jnp.exp(-z), approx=True)


def _classifier_kernel(x_ref, w1_ref, gb1_ref, w2_ref, gb2_ref, w3_ref, b3_ref,
                       o_ref):
    """Fused fc1+BN+sigmoid -> fc2+BN+sigmoid -> fc3 (+bias). All hidden
    intermediates are lane-dense (N, 128) and stay in VMEM/vregs."""
    h = jnp.dot(x_ref[...], w1_ref[...], preferred_element_type=jnp.float32)
    h = _bn_sigmoid_rows(h, gb1_ref[0:1, :], gb1_ref[1:2, :])
    h = jnp.dot(h.astype(MXU_DTYPE), w2_ref[...], preferred_element_type=jnp.float32)
    h = _bn_sigmoid_rows(h, gb2_ref[0:1, :], gb2_ref[1:2, :])
    o_ref[...] = (jnp.dot(h.astype(MXU_DTYPE), w3_ref[...],
                          preferred_element_type=jnp.float32) + b3_ref[...])


# ----------------------------------------------------------------------------
# pallas_call wrappers
# ----------------------------------------------------------------------------
def conv_bn_sigmoid(cols, w, gamma, beta):
    """sigmoid(batchnorm(cols @ w)) with BatchNorm stats over ALL M rows.

    cols : (M, K)  f32 im2col patches (un-padded).
    w    : (Kp,Np) bf16 packed weights, Kp/Np multiples of 128.
    gamma/beta : (Np,) f32 lane-padded affine params.
    Returns (M, Np) bf16; the caller slices the real output channels."""
    m_true = cols.shape[0]
    kp, np_ = w.shape
    # K zero-padding -> aligned, unmasked loads / MXU K passes; free in the dot.
    cols = _pad_cols(cols, kp).astype(MXU_DTYPE)
    # M tiling; zero-padded rows contribute exactly 0 to the partials (no bias).
    tm = min(MAX_TM, _round_up(m_true, 8))
    mp = _round_up(m_true, tm)
    cols = _pad_rows(cols, mp)
    nt = mp // tm

    y, stats = pl.pallas_call(
        _conv_mm_stats_kernel,
        out_shape=(jax.ShapeDtypeStruct((mp, np_), jnp.float32),
                   jax.ShapeDtypeStruct((nt * STATS_ROWS, np_), jnp.float32)),
        grid=(nt,),
        in_specs=[
            pl.BlockSpec((tm, kp), lambda i: (i, 0)),
            pl.BlockSpec((kp, np_), lambda i: (0, 0)),   # resident: fetched once
        ],
        out_specs=(
            pl.BlockSpec((tm, np_), lambda i: (i, 0)),
            pl.BlockSpec((STATS_ROWS, np_), lambda i: (i, 0)),
        ),
        compiler_params=_GRID_PARAMS,
    )(cols, w)

    # Tiny global combine (Np-wide vectors) + fold BN affine: z = y*a + c.
    stats = stats.reshape(nt, STATS_ROWS, np_)
    total = jnp.sum(stats[:, 0, :], axis=0)
    total_sq = jnp.sum(stats[:, 1, :], axis=0)
    mean = total / m_true
    var = jnp.maximum(total_sq / m_true - mean * mean, 0.0)
    a = gamma * jax.lax.rsqrt(var + EPS)
    c = beta - mean * a
    ac = jnp.stack([a, c], axis=0)                       # (2, Np)

    out = pl.pallas_call(
        _bn_sigmoid_apply_kernel,
        out_shape=jax.ShapeDtypeStruct((mp, np_), jnp.bfloat16),
        grid=(nt,),
        in_specs=[
            pl.BlockSpec((tm, np_), lambda i: (i, 0)),
            pl.BlockSpec((2, np_), lambda i: (0, 0)),    # resident
        ],
        out_specs=pl.BlockSpec((tm, np_), lambda i: (i, 0)),
        compiler_params=_GRID_PARAMS,
    )(y, ac)
    return out[:m_true]


def classifier_fused(flat, p):
    """fc1+BN+sigmoid -> fc2+BN+sigmoid -> fc3, one kernel launch."""
    n = flat.shape[0]
    kp = p["fc1_w"].shape[0]                              # 640
    np_ = p["fc3_w"].shape[1]                             # 128
    flat = _pad_cols(flat, kp).astype(MXU_DTYPE)
    args = (flat, p["fc1_w"], p["bn3_gb"], p["fc2_w"], p["bn4_gb"],
            p["fc3_w"], p["fc3_b"])
    in_specs = [pl.BlockSpec(a.shape, lambda i, nd=a.ndim: (0,) * nd)
                for a in args]
    return pl.pallas_call(
        _classifier_kernel,
        out_shape=jax.ShapeDtypeStruct((n, np_), jnp.float32),
        grid=(1,),
        in_specs=in_specs,
        out_specs=pl.BlockSpec((n, np_), lambda i: (0, 0)),
        compiler_params=_SINGLE_PARAMS,
    )(*args)


# ----------------------------------------------------------------------------
# JAX glue: im2col, pooling (pure data movement, kept in XLA)
# ----------------------------------------------------------------------------
def im2col_nhwc(x, kh, kw, pad):
    """x: (N,H,W,C) -> patches (N*Ho*Wo, kh*kw*C), column order (kh, kw, c)."""
    if pad:
        x = jnp.pad(x, ((0, 0), (pad, pad), (pad, pad), (0, 0)))
    N, Hp, Wp, C = x.shape
    Ho, Wo = Hp - kh + 1, Wp - kw + 1
    cols = [x[:, i:i + Ho, j:j + Wo, :] for i in range(kh) for j in range(kw)]
    patches = jnp.concatenate(cols, axis=-1)              # (N, Ho, Wo, kh*kw*C)
    return patches.reshape(N * Ho * Wo, kh * kw * C), (N, Ho, Wo)


def avg_pool_2x2(x):
    """NHWC 2x2 average pool, stride 2."""
    N, H, W, C = x.shape
    return x.reshape(N, H // 2, 2, W // 2, 2, C).mean(axis=(2, 4))


# ----------------------------------------------------------------------------
# Parameters: torch-layout init + one-time packing into kernel layouts
# ----------------------------------------------------------------------------
def init_params(key, num_classes=10):
    ks = jax.random.split(key, 8)
    return {
        "conv1_w": 0.1 * jax.random.normal(ks[0], (6, 3, 5, 5), jnp.float32),
        "conv1_b": 0.1 * jax.random.normal(ks[1], (6,), jnp.float32),
        "conv2_w": 0.1 * jax.random.normal(ks[2], (16, 6, 5, 5), jnp.float32),
        "conv2_b": 0.1 * jax.random.normal(ks[3], (16,), jnp.float32),
        "fc1_w": 0.1 * jax.random.normal(ks[4], (576, 120), jnp.float32),
        "fc1_b": jnp.zeros((120,), jnp.float32),
        "fc2_w": 0.1 * jax.random.normal(ks[5], (120, 84), jnp.float32),
        "fc2_b": jnp.zeros((84,), jnp.float32),
        "fc3_w": 0.1 * jax.random.normal(ks[6], (84, num_classes), jnp.float32),
        "fc3_b": jnp.zeros((num_classes,), jnp.float32),
        "bn1_g": jnp.ones((6,), jnp.float32), "bn1_b": jnp.zeros((6,), jnp.float32),
        "bn2_g": jnp.ones((16,), jnp.float32), "bn2_b": jnp.zeros((16,), jnp.float32),
        "bn3_g": jnp.ones((120,), jnp.float32), "bn3_b": jnp.zeros((120,), jnp.float32),
        "bn4_g": jnp.ones((84,), jnp.float32), "bn4_b": jnp.zeros((84,), jnp.float32),
    }


def pack_params(p):
    """One-time repacking of torch-layout params into kernel-ready arrays.

    * conv weights (O,I,KH,KW) -> (KH*KW*I, O) matching im2col column order.
    * Contracted K dims zero-padded to multiples of 128 (75->128, 150->256,
      576->640); matching activation columns are also zero-padded -> dot is
      unchanged, loads / MXU K-passes are aligned.
    * Output / hidden widths lane-padded to 128 with zero weights.  Padded
      columns come out of BN+sigmoid as 0.5, so the NEXT layer's padded K rows
      are zero (fc2_w / fc3_w), which kills any leakage.
    * conv / fc1 / fc2 biases are dropped: training-mode BatchNorm subtracts
      the per-channel batch mean, so an additive channel bias cancels exactly.
    * MXU operands stored in bf16; BN affine params / fc3 bias kept in f32.
    """
    def conv_w(w):
        o, i, kh, kw = w.shape
        return w.transpose(2, 3, 1, 0).reshape(kh * kw * i, o)

    def pack_w(w):
        w = _pad_rows(w, _round_up(w.shape[0], LANE))
        w = _pad_cols(w, _round_up(w.shape[1], LANE))
        return w.astype(MXU_DTYPE)

    def pack_gb(g, b):
        return jnp.stack([_pad_vec(g, LANE, 1.0), _pad_vec(b, LANE, 0.0)], axis=0)

    return {
        "conv1_w": pack_w(conv_w(p["conv1_w"])),
        "bn1_g": _pad_vec(p["bn1_g"], LANE, 1.0),
        "bn1_b": _pad_vec(p["bn1_b"], LANE, 0.0),
        "conv2_w": pack_w(conv_w(p["conv2_w"])),
        "bn2_g": _pad_vec(p["bn2_g"], LANE, 1.0),
        "bn2_b": _pad_vec(p["bn2_b"], LANE, 0.0),
        "fc1_w": pack_w(p["fc1_w"]),
        "bn3_gb": pack_gb(p["bn3_g"], p["bn3_b"]),
        "fc2_w": pack_w(p["fc2_w"]),
        "bn4_gb": pack_gb(p["bn4_g"], p["bn4_b"]),
        "fc3_w": pack_w(p["fc3_w"]),
        "fc3_b": _pad_vec(p["fc3_b"], LANE, 0.0).reshape(1, LANE),
    }


# ----------------------------------------------------------------------------
# Forward pass
# ----------------------------------------------------------------------------
def bn_lenet_forward(x_nchw, p, num_classes=10):
    x = jnp.transpose(x_nchw, (0, 2, 3, 1))                     # NCHW -> NHWC

    # Conv2d(3,6,k=5,pad=2) + BN2d(6) + Sigmoid  (two M-gridded Pallas phases)
    cols, (n, ho, wo) = im2col_nhwc(x, 5, 5, pad=2)
    y = conv_bn_sigmoid(cols, p["conv1_w"], p["bn1_g"], p["bn1_b"])
    y = y[:, :6].astype(jnp.float32).reshape(n, ho, wo, 6)
    y = avg_pool_2x2(y)                                         # (N,16,16,6)

    # Conv2d(6,16,k=5) + BN2d(16) + Sigmoid
    cols, (n, ho, wo) = im2col_nhwc(y, 5, 5, pad=0)
    y = conv_bn_sigmoid(cols, p["conv2_w"], p["bn2_g"], p["bn2_b"])
    y = y[:, :16].astype(jnp.float32).reshape(n, ho, wo, 16)
    y = avg_pool_2x2(y)                                         # (N,6,6,16)

    # Classifier: Flatten in (C,H,W) order (nn.Flatten on NCHW) -> fused kernel.
    flat = jnp.transpose(y, (0, 3, 1, 2)).reshape(n, -1)        # (N, 576)
    logits = classifier_fused(flat, p)                          # (N, 128)
    return logits[:, :num_classes]


if __name__ == "__main__":
    key = jax.random.PRNGKey(0)
    k_x, k_p = jax.random.split(key)
    # batch=2; spatial must be 32x32 so the flattened dim is 576 as in the module.
    x = jax.random.normal(k_x, (2, 3, 32, 32), jnp.float32)
    params = pack_params(init_params(k_p, num_classes=10))

    fwd = jax.jit(functools.partial(bn_lenet_forward, num_classes=10))
    logits = jax.block_until_ready(fwd(x, params))
    assert logits.shape == (2, 10) and logits.dtype == jnp.float32
    assert bool(jnp.all(jnp.isfinite(logits)))
    print("KERNEL_OK")
</pallas_src>

<mosaic_0001>
module attributes {stable_mosaic.version = 11 : i64} {
  func.func @_conv_mm_stats_kernel(%arg0: i32, %arg1: memref<512x128xbf16, #tpu.memory_space<vmem>>, %arg2: memref<128x128xbf16, #tpu.memory_space<vmem>>, %arg3: memref<512x128xf32, #tpu.memory_space<vmem>>, %arg4: memref<8x128xf32, #tpu.memory_space<vmem>>) attributes {dimension_semantics = [#tpu.dimension_semantics<parallel>], iteration_bounds = array<i64: 4>, scalar_prefetch = 0 : i64, scratch_operands = 0 : i64, tpu.core_type = #tpu.core_type<tc>, window_params = [{transform_indices = @transform_0, window_bounds = array<i64: 512, 128>}, {pipeline_mode = #tpu.pipeline_mode<synchronous>, transform_indices = @transform_1, window_bounds = array<i64: 128, 128>}, {transform_indices = @transform_2, window_bounds = array<i64: 512, 128>}, {transform_indices = @transform_3, window_bounds = array<i64: 8, 128>}]} {
    %c0 = arith.constant 0 : index
    %c0_0 = arith.constant 0 : index
    %0 = vector.load %arg1[%c0, %c0_0] : memref<512x128xbf16, #tpu.memory_space<vmem>>, vector<512x128xbf16>
    %c0_1 = arith.constant 0 : index
    %c0_2 = arith.constant 0 : index
    %1 = vector.load %arg2[%c0_1, %c0_2] : memref<128x128xbf16, #tpu.memory_space<vmem>>, vector<128x128xbf16>
    %cst = arith.constant dense<0.000000e+00> : vector<512x128xf32>
    %2 = tpu.matmul %0, %1, %cst {dimension_numbers = #tpu.dot_dimension_numbers<[1], [0], [0], [1], [0, 0, 1, 1], [], []>} : vector<512x128xbf16>, vector<128x128xbf16>, vector<512x128xf32> -> vector<512x128xf32>
    %c0_3 = arith.constant 0 : index
    %c0_4 = arith.constant 0 : index
    %3 = vector.load %arg3[%c0_3, %c0_4] : memref<512x128xf32, #tpu.memory_space<vmem>>, vector<512x128xf32>
    tpu.vector_store %arg3[%c0_3, %c0_4], %2 {strides = array<i32>} : memref<512x128xf32, #tpu.memory_space<vmem>>, vector<512x128xf32>,
    %cst_5 = arith.constant dense<0.000000e+00> : vector<128xf32>
    %4 = vector.multi_reduction <add>, %2, %cst_5 [0] : vector<512x128xf32> to vector<128xf32>
    %5 = vector.shape_cast %4 : vector<128xf32> to vector<1x128xf32>
    %6 = arith.mulf %2, %2 : vector<512x128xf32>
    %cst_6 = arith.constant dense<0.000000e+00> : vector<128xf32>
    %7 = vector.multi_reduction <add>, %6, %cst_6 [0] : vector<512x128xf32> to vector<128xf32>
    %8 = vector.shape_cast %7 : vector<128xf32> to vector<1x128xf32>
    %cst_7 = arith.constant 0.000000e+00 : f32
    %9 = vector.broadcast %cst_7 : f32 to vector<6x128xf32>
    %10 = tpu.concatenate %5, %8, %9 in 0 : vector<1x128xf32>, vector<1x128xf32>, vector<6x128xf32> -> vector<8x128xf32>
    %c0_8 = arith.constant 0 : index
    %c0_9 = arith.constant 0 : index
    %11 = vector.load %arg4[%c0_8, %c0_9] : memref<8x128xf32, #tpu.memory_space<vmem>>, vector<8x128xf32>
    tpu.vector_store %arg4[%c0_8, %c0_9], %10 {strides = array<i32>} : memref<8x128xf32, #tpu.memory_space<vmem>>, vector<8x128xf32>,
    return
  }
  func.func @transform_0(%arg0: i32) -> (i32, i32) {
    %c0_i32 = arith.constant 0 : i32
    %c0_i32_0 = arith.constant 0 : i32
    return %arg0, %c0_i32 : i32, i32
  }
  func.func @transform_1(%arg0: i32) -> (i32, i32) {
    %c0_i32 = arith.constant 0 : i32
    %c0_i32_0 = arith.constant 0 : i32
    %c0_i32_1 = arith.constant 0 : i32
    return %c0_i32, %c0_i32_0 : i32, i32
  }
  func.func @transform_2(%arg0: i32) -> (i32, i32) {
    %c0_i32 = arith.constant 0 : i32
    %c0_i32_0 = arith.constant 0 : i32
    return %arg0, %c0_i32 : i32, i32
  }
  func.func @transform_3(%arg0: i32) -> (i32, i32) {
    %c0_i32 = arith.constant 0 : i32
    %c0_i32_0 = arith.constant 0 : i32
    return %arg0, %c0_i32 : i32, i32
  }
}

module attributes {stable_mosaic.version = 11 : i64} {
  func.func @_bn_sigmoid_apply_kernel(%arg0: i32, %arg1: memref<512x128xf32, #tpu.memory_space<vmem>>, %arg2: memref<2x128xf32, #tpu.memory_space<vmem>>, %arg3: memref<512x128xbf16, #tpu.memory_space<vmem>>) attributes {dimension_semantics = [#tpu.dimension_semantics<parallel>], iteration_bounds = array<i64: 4>, scalar_prefetch = 0 : i64, scratch_operands = 0 : i64, tpu.core_type = #tpu.core_type<tc>, window_params = [{transform_indices = @transform_0, window_bounds = array<i64: 512, 128>}, {pipeline_mode = #tpu.pipeline_mode<synchronous>, transform_indices = @transform_1, window_bounds = array<i64: 2, 128>}, {transform_indices = @transform_2, window_bounds = array<i64: 512, 128>}]} {
    %c0 = arith.constant 0 : index
    %c0_0 = arith.constant 0 : index
    %0 = vector.load %arg1[%c0, %c0_0] : memref<512x128xf32, #tpu.memory_space<vmem>>, vector<512x128xf32>
    %c0_1 = arith.constant 0 : index
    %c0_2 = arith.constant 0 : index
    %1 = vector.load %arg2[%c0_1, %c0_2] : memref<2x128xf32, #tpu.memory_space<vmem>>, vector<1x128xf32>
    %2 = vector.broadcast %1 : vector<1x128xf32> to vector<512x128xf32>
    %3 = arith.mulf %0, %2 : vector<512x128xf32>
    %c1 = arith.constant 1 : index
    %c0_3 = arith.constant 0 : index
    %4 = vector.load %arg2[%c1, %c0_3] : memref<2x128xf32, #tpu.memory_space<vmem>>, vector<1x128xf32>
    %5 = vector.broadcast %4 : vector<1x128xf32> to vector<512x128xf32>
    %6 = arith.addf %3, %5 : vector<512x128xf32>
    %cst = arith.constant 0.000000e+00 : f32
    %7 = vector.broadcast %cst : f32 to vector<512x128xf32>
    %8 = arith.subf %7, %6 : vector<512x128xf32>
    %9 = math.exp %8 : vector<512x128xf32>
    %cst_4 = arith.constant 1.000000e+00 : f32
    %10 = vector.broadcast %cst_4 : f32 to vector<512x128xf32>
    %11 = arith.addf %10, %9 : vector<512x128xf32>
    %12 = tpu.reciprocal %11 {approx = true} : vector<512x128xf32> -> vector<512x128xf32>
    %13 = arith.truncf %12 : vector<512x128xf32> to vector<512x128xbf16>
    %c0_5 = arith.constant 0 : index
    %c0_6 = arith.constant 0 : index
    %14 = vector.load %arg3[%c0_5, %c0_6] : memref<512x128xbf16, #tpu.memory_space<vmem>>, vector<512x128xbf16>
    tpu.vector_store %arg3[%c0_5, %c0_6], %13 {strides = array<i32>} : memref<512x128xbf16, #tpu.memory_space<vmem>>, vector<512x128xbf16>,
    return
  }
  func.func @transform_0(%arg0: i32) -> (i32, i32) {
    %c0_i32 = arith.constant 0 : i32
    %c0_i32_0 = arith.constant 0 : i32
    return %arg0, %c0_i32 : i32, i32
  }
  func.func @transform_1(%arg0: i32) -> (i32, i32) {
    %c0_i32 = arith.constant 0 : i32
    %c0_i32_0 = arith.constant 0 : i32
    %c0_i32_1 = arith.constant 0 : i32
    return %c0_i32, %c0_i32_0 : i32, i32
  }
  func.func @transform_2(%arg0: i32) -> (i32, i32) {
    %c0_i32 = arith.constant 0 : i32
    %c0_i32_0 = arith.constant 0 : i32
    return %arg0, %c0_i32 : i32, i32
  }
}

module attributes {stable_mosaic.version = 11 : i64} {
  func.func @_conv_mm_stats_kernel(%arg0: i32, %arg1: memref<288x256xbf16, #tpu.memory_space<vmem>>, %arg2: memref<256x128xbf16, #tpu.memory_space<vmem>>, %arg3: memref<288x128xf32, #tpu.memory_space<vmem>>, %arg4: memref<8x128xf32, #tpu.memory_space<vmem>>) attributes {dimension_semantics = [#tpu.dimension_semantics<parallel>], iteration_bounds = array<i64: 1>, scalar_prefetch = 0 : i64, scratch_operands = 0 : i64, tpu.core_type = #tpu.core_type<tc>, window_params = [{transform_indices = @transform_0, window_bounds = array<i64: 288, 256>}, {pipeline_mode = #tpu.pipeline_mode<synchronous>, transform_indices = @transform_1, window_bounds = array<i64: 256, 128>}, {transform_indices = @transform_2, window_bounds = array<i64: 288, 128>}, {transform_indices = @transform_3, window_bounds = array<i64: 8, 128>}]} {
    %c0 = arith.constant 0 : index
    %c0_0 = arith.constant 0 : index
    %0 = vector.load %arg1[%c0, %c0_0] : memref<288x256xbf16, #tpu.memory_space<vmem>>, vector<288x256xbf16>
    %c0_1 = arith.constant 0 : index
    %c0_2 = arith.constant 0 : index
    %1 = vector.load %arg2[%c0_1, %c0_2] : memref<256x128xbf16, #tpu.memory_space<vmem>>, vector<256x128xbf16>
    %cst = arith.constant dense<0.000000e+00> : vector<288x128xf32>
    %2 = tpu.matmul %0, %1, %cst {dimension_numbers = #tpu.dot_dimension_numbers<[1], [0], [0], [1], [0, 0, 1, 1], [], []>} : vector<288x256xbf16>, vector<256x128xbf16>, vector<288x128xf32> -> vector<288x128xf32>
    %c0_3 = arith.constant 0 : index
    %c0_4 = arith.constant 0 : index
    %3 = vector.load %arg3[%c0_3, %c0_4] : memref<288x128xf32, #tpu.memory_space<vmem>>, vector<288x128xf32>
    tpu.vector_store %arg3[%c0_3, %c0_4], %2 {strides = array<i32>} : memref<288x128xf32, #tpu.memory_space<vmem>>, vector<288x128xf32>,
    %cst_5 = arith.constant dense<0.000000e+00> : vector<128xf32>
    %4 = vector.multi_reduction <add>, %2, %cst_5 [0] : vector<288x128xf32> to vector<128xf32>
    %5 = vector.shape_cast %4 : vector<128xf32> to vector<1x128xf32>
    %6 = arith.mulf %2, %2 : vector<288x128xf32>
    %cst_6 = arith.constant dense<0.000000e+00> : vector<128xf32>
    %7 = vector.multi_reduction <add>, %6, %cst_6 [0] : vector<288x128xf32> to vector<128xf32>
    %8 = vector.shape_cast %7 : vector<128xf32> to vector<1x128xf32>
    %cst_7 = arith.constant 0.000000e+00 : f32
    %9 = vector.broadcast %cst_7 : f32 to vector<6x128xf32>
    %10 = tpu.concatenate %5, %8, %9 in 0 : vector<1x128xf32>, vector<1x128xf32>, vector<6x128xf32> -> vector<8x128xf32>
    %c0_8 = arith.constant 0 : index
    %c0_9 = arith.constant 0 : index
    %11 = vector.load %arg4[%c0_8, %c0_9] : memref<8x128xf32, #tpu.memory_space<vmem>>, vector<8x128xf32>
    tpu.vector_store %arg4[%c0_8, %c0_9], %10 {strides = array<i32>} : memref<8x128xf32, #tpu.memory_space<vmem>>, vector<8x128xf32>,
    return
  }
  func.func @transform_0(%arg0: i32) -> (i32, i32) {
    %c0_i32 = arith.constant 0 : i32
    %c0_i32_0 = arith.constant 0 : i32
    return %arg0, %c0_i32 : i32, i32
  }
  func.func @transform_1(%arg0: i32) -> (i32, i32) {
    %c0_i32 = arith.constant 0 : i32
    %c0_i32_0 = arith.constant 0 : i32
    %c0_i32_1 = arith.constant 0 : i32
    return %c0_i32, %c0_i32_0 : i32, i32
  }
  func.func @transform_2(%arg0: i32) -> (i32, i32) {
    %c0_i32 = arith.constant 0 : i32
    %c0_i32_0 = arith.constant 0 : i32
    return %arg0, %c0_i32 : i32, i32
  }
  func.func @transform_3(%arg0: i32) -> (i32, i32) {
    %c0_i32 = arith.constant 0 : i32
    %c0_i32_0 = arith.constant 0 : i32
    return %arg0, %c0_i32 : i32, i32
  }
}

module attributes {stable_mosaic.version = 11 : i64} {
  func.func @_bn_sigmoid_apply_kernel(%arg0: i32, %arg1: memref<288x128xf32, #tpu.memory_space<vmem>>, %arg2: memref<2x128xf32, #tpu.memory_space<vmem>>, %arg3: memref<288x128xbf16, #tpu.memory_space<vmem>>) attributes {dimension_semantics = [#tpu.dimension_semantics<parallel>], iteration_bounds = array<i64: 1>, scalar_prefetch = 0 : i64, scratch_operands = 0 : i64, tpu.core_type = #tpu.core_type<tc>, window_params = [{transform_indices = @transform_0, window_bounds = array<i64: 288, 128>}, {pipeline_mode = #tpu.pipeline_mode<synchronous>, transform_indices = @transform_1, window_bounds = array<i64: 2, 128>}, {transform_indices = @transform_2, window_bounds = array<i64: 288, 128>}]} {
    %c0 = arith.constant 0 : index
    %c0_0 = arith.constant 0 : index
    %0 = vector.load %arg1[%c0, %c0_0] : memref<288x128xf32, #tpu.memory_space<vmem>>, vector<288x128xf32>
    %c0_1 = arith.constant 0 : index
    %c0_2 = arith.constant 0 : index
    %1 = vector.load %arg2[%c0_1, %c0_2] : memref<2x128xf32, #tpu.memory_space<vmem>>, vector<1x128xf32>
    %2 = vector.broadcast %1 : vector<1x128xf32> to vector<288x128xf32>
    %3 = arith.mulf %0, %2 : vector<288x128xf32>
    %c1 = arith.constant 1 : index
    %c0_3 = arith.constant 0 : index
    %4 = vector.load %arg2[%c1, %c0_3] : memref<2x128xf32, #tpu.memory_space<vmem>>, vector<1x128xf32>
    %5 = vector.broadcast %4 : vector<1x128xf32> to vector<288x128xf32>
    %6 = arith.addf %3, %5 : vector<288x128xf32>
    %cst = arith.constant 0.000000e+00 : f32
    %7 = vector.broadcast %cst : f32 to vector<288x128xf32>
    %8 = arith.subf %7, %6 : vector<288x128xf32>
    %9 = math.exp %8 : vector<288x128xf32>
    %cst_4 = arith.constant 1.000000e+00 : f32
    %10 = vector.broadcast %cst_4 : f32 to vector<288x128xf32>
    %11 = arith.addf %10, %9 : vector<288x128xf32>
    %12 = tpu.reciprocal %11 {approx = true} : vector<288x128xf32> -> vector<288x128xf32>
    %13 = arith.truncf %12 : vector<288x128xf32> to vector<288x128xbf16>
    %c0_5 = arith.constant 0 : index
    %c0_6 = arith.constant 0 : index
    %14 = vector.load %arg3[%c0_5, %c0_6] : memref<288x128xbf16, #tpu.memory_space<vmem>>, vector<288x128xbf16>
    tpu.vector_store %arg3[%c0_5, %c0_6], %13 {strides = array<i32>} : memref<288x128xbf16, #tpu.memory_space<vmem>>, vector<288x128xbf16>,
    return
  }
  func.func @transform_0(%arg0: i32) -> (i32, i32) {
    %c0_i32 = arith.constant 0 : i32
    %c0_i32_0 = arith.constant 0 : i32
    return %arg0, %c0_i32 : i32, i32
  }
  func.func @transform_1(%arg0: i32) -> (i32, i32) {
    %c0_i32 = arith.constant 0 : i32
    %c0_i32_0 = arith.constant 0 : i32
    %c0_i32_1 = arith.constant 0 : i32
    return %c0_i32, %c0_i32_0 : i32, i32
  }
  func.func @transform_2(%arg0: i32) -> (i32, i32) {
    %c0_i32 = arith.constant 0 : i32
    %c0_i32_0 = arith.constant 0 : i32
    return %arg0, %c0_i32 : i32, i32
  }
}

module attributes {stable_mosaic.version = 11 : i64} {
  func.func @_classifier_kernel(%arg0: i32, %arg1: memref<2x640xbf16, #tpu.memory_space<vmem>>, %arg2: memref<640x128xbf16, #tpu.memory_space<vmem>>, %arg3: memref<2x128xf32, #tpu.memory_space<vmem>>, %arg4: memref<128x128xbf16, #tpu.memory_space<vmem>>, %arg5: memref<2x128xf32, #tpu.memory_space<vmem>>, %arg6: memref<128x128xbf16, #tpu.memory_space<vmem>>, %arg7: memref<1x128xf32, #tpu.memory_space<vmem>>, %arg8: memref<2x128xf32, #tpu.memory_space<vmem>>) attributes {dimension_semantics = [#tpu.dimension_semantics<arbitrary>], iteration_bounds = array<i64: 1>, scalar_prefetch = 0 : i64, scratch_operands = 0 : i64, tpu.core_type = #tpu.core_type<tc>, window_params = [{pipeline_mode = #tpu.pipeline_mode<synchronous>, transform_indices = @transform_0, window_bounds = array<i64: 2, 640>}, {pipeline_mode = #tpu.pipeline_mode<synchronous>, transform_indices = @transform_1, window_bounds = array<i64: 640, 128>}, {pipeline_mode = #tpu.pipeline_mode<synchronous>, transform_indices = @transform_2, window_bounds = array<i64: 2, 128>}, {pipeline_mode = #tpu.pipeline_mode<synchronous>, transform_indices = @transform_3, window_bounds = array<i64: 128, 128>}, {pipeline_mode = #tpu.pipeline_mode<synchronous>, transform_indices = @transform_4, window_bounds = array<i64: 2, 128>}, {pipeline_mode = #tpu.pipeline_mode<synchronous>, transform_indices = @transform_5, window_bounds = array<i64: 128, 128>}, {pipeline_mode = #tpu.pipeline_mode<synchronous>, transform_indices = @transform_6, window_bounds = array<i64: 1, 128>}, {pipeline_mode = #tpu.pipeline_mode<synchronous>, transform_indices = @transform_7, window_bounds = array<i64: 2, 128>}]} {
    %c0 = arith.constant 0 : index
    %c0_0 = arith.constant 0 : index
    %0 = vector.load %arg1[%c0, %c0_0] : memref<2x640xbf16, #tpu.memory_space<vmem>>, vector<2x640xbf16>
    %c0_1 = arith.constant 0 : index
    %c0_2 = arith.constant 0 : index
    %1 = vector.load %arg2[%c0_1, %c0_2] : memref<640x128xbf16, #tpu.memory_space<vmem>>, vector<640x128xbf16>
    %cst = arith.constant dense<0.000000e+00> : vector<2x128xf32>
    %2 = tpu.matmul %0, %1, %cst {dimension_numbers = #tpu.dot_dimension_numbers<[1], [0], [0], [1], [0, 0, 1, 1], [], []>} : vector<2x640xbf16>, vector<640x128xbf16>, vector<2x128xf32> -> vector<2x128xf32>
    %c0_3 = arith.constant 0 : index
    %c0_4 = arith.constant 0 : index
    %3 = vector.load %arg3[%c0_3, %c0_4] : memref<2x128xf32, #tpu.memory_space<vmem>>, vector<1x128xf32>
    %c1 = arith.constant 1 : index
    %c0_5 = arith.constant 0 : index
    %4 = vector.load %arg3[%c1, %c0_5] : memref<2x128xf32, #tpu.memory_space<vmem>>, vector<1x128xf32>
    %cst_6 = arith.constant dense<0.000000e+00> : vector<128xf32>
    %5 = vector.multi_reduction <add>, %2, %cst_6 [0] : vector<2x128xf32> to vector<128xf32>
    %6 = vector.shape_cast %5 : vector<128xf32> to vector<1x128xf32>
    %cst_7 = arith.constant 2.000000e+00 : f32
    %7 = vector.broadcast %cst_7 : f32 to vector<1x128xf32>
    %8 = arith.divf %6, %7 : vector<1x128xf32>
    %9 = arith.mulf %2, %2 : vector<2x128xf32>
    %cst_8 = arith.constant dense<0.000000e+00> : vector<128xf32>
    %10 = vector.multi_reduction <add>, %9, %cst_8 [0] : vector<2x128xf32> to vector<128xf32>
    %11 = vector.shape_cast %10 : vector<128xf32> to vector<1x128xf32>
    %cst_9 = arith.constant 2.000000e+00 : f32
    %12 = vector.broadcast %cst_9 : f32 to vector<1x128xf32>
    %13 = arith.divf %11, %12 : vector<1x128xf32>
    %14 = arith.mulf %8, %8 : vector<1x128xf32>
    %15 = arith.subf %13, %14 : vector<1x128xf32>
    %cst_10 = arith.constant 0.000000e+00 : f32
    %16 = vector.broadcast %cst_10 : f32 to vector<1x128xf32>
    %17 = arith.maximumf %15, %16 : vector<1x128xf32>
    %cst_11 = arith.constant 9.99999974E-6 : f32
    %18 = vector.broadcast %cst_11 : f32 to vector<1x128xf32>
    %19 = arith.addf %17, %18 : vector<1x128xf32>
    %20 = math.rsqrt %19 : vector<1x128xf32>
    %21 = arith.mulf %3, %20 : vector<1x128xf32>
    %22 = arith.mulf %8, %21 : vector<1x128xf32>
    %23 = arith.subf %4, %22 : vector<1x128xf32>
    %24 = vector.broadcast %21 : vector<1x128xf32> to vector<2x128xf32>
    %25 = arith.mulf %2, %24 : vector<2x128xf32>
    %26 = vector.broadcast %23 : vector<1x128xf32> to vector<2x128xf32>
    %27 = arith.addf %25, %26 : vector<2x128xf32>
    %cst_12 = arith.constant 0.000000e+00 : f32
    %28 = vector.broadcast %cst_12 : f32 to vector<2x128xf32>
    %29 = arith.subf %28, %27 : vector<2x128xf32>
    %30 = math.exp %29 : vector<2x128xf32>
    %cst_13 = arith.constant 1.000000e+00 : f32
    %31 = vector.broadcast %cst_13 : f32 to vector<2x128xf32>
    %32 = arith.addf %31, %30 : vector<2x128xf32>
    %33 = tpu.reciprocal %32 {approx = true} : vector<2x128xf32> -> vector<2x128xf32>
    %34 = arith.truncf %33 : vector<2x128xf32> to vector<2x128xbf16>
    %c0_14 = arith.constant 0 : index
    %c0_15 = arith.constant 0 : index
    %35 = vector.load %arg4[%c0_14, %c0_15] : memref<128x128xbf16, #tpu.memory_space<vmem>>, vector<128x128xbf16>
    %cst_16 = arith.constant dense<0.000000e+00> : vector<2x128xf32>
    %36 = tpu.matmul %34, %35, %cst_16 {dimension_numbers = #tpu.dot_dimension_numbers<[1], [0], [0], [1], [0, 0, 1, 1], [], []>} : vector<2x128xbf16>, vector<128x128xbf16>, vector<2x128xf32> -> vector<2x128xf32>
    %c0_17 = arith.constant 0 : index
    %c0_18 = arith.constant 0 : index
    %37 = vector.load %arg5[%c0_17, %c0_18] : memref<2x128xf32, #tpu.memory_space<vmem>>, vector<1x128xf32>
    %c1_19 = arith.constant 1 : index
    %c0_20 = arith.constant 0 : index
    %38 = vector.load %arg5[%c1_19, %c0_20] : memref<2x128xf32, #tpu.memory_space<vmem>>, vector<1x128xf32>
    %cst_21 = arith.constant dense<0.000000e+00> : vector<128xf32>
    %39 = vector.multi_reduction <add>, %36, %cst_21 [0] : vector<2x128xf32> to vector<128xf32>
    %40 = vector.shape_cast %39 : vector<128xf32> to vector<1x128xf32>
    %cst_22 = arith.constant 2.000000e+00 : f32
    %41 = vector.broadcast %cst_22 : f32 to vector<1x128xf32>
    %42 = arith.divf %40, %41 : vector<1x128xf32>
    %43 = arith.mulf %36, %36 : vector<2x128xf32>
    %cst_23 = arith.constant dense<0.000000e+00> : vector<128xf32>
    %44 = vector.multi_reduction <add>, %43, %cst_23 [0] : vector<2x128xf32> to vector<128xf32>
    %45 = vector.shape_cast %44 : vector<128xf32> to vector<1x128xf32>
    %cst_24 = arith.constant 2.000000e+00 : f32
    %46 = vector.broadcast %cst_24 : f32 to vector<1x128xf32>
    %47 = arith.divf %45, %46 : vector<1x128xf32>
    %48 = arith.mulf %42, %42 : vector<1x128xf32>
    %49 = arith.subf %47, %48 : vector<1x128xf32>
    %cst_25 = arith.constant 0.000000e+00 : f32
    %50 = vector.broadcast %cst_25 : f32 to vector<1x128xf32>
    %51 = arith.maximumf %49, %50 : vector<1x128xf32>
    %cst_26 = arith.constant 9.99999974E-6 : f32
    %52 = vector.broadcast %cst_26 : f32 to vector<1x128xf32>
    %53 = arith.addf %51, %52 : vector<1x128xf32>
    %54 = math.rsqrt %53 : vector<1x128xf32>
    %55 = arith.mulf %37, %54 : vector<1x128xf32>
    %56 = arith.mulf %42, %55 : vector<1x128xf32>
    %57 = arith.subf %38, %56 : vector<1x128xf32>
    %58 = vector.broadcast %55 : vector<1x128xf32> to vector<2x128xf32>
    %59 = arith.mulf %36, %58 : vector<2x128xf32>
    %60 = vector.broadcast %57 : vector<1x128xf32> to vector<2x128xf32>
    %61 = arith.addf %59, %60 : vector<2x128xf32>
    %cst_27 = arith.constant 0.000000e+00 : f32
    %62 = vector.broadcast %cst_27 : f32 to vector<2x128xf32>
    %63 = arith.subf %62, %61 : vector<2x128xf32>
    %64 = math.exp %63 : vector<2x128xf32>
    %cst_28 = arith.constant 1.000000e+00 : f32
    %65 = vector.broadcast %cst_28 : f32 to vector<2x128xf32>
    %66 = arith.addf %65, %64 : vector<2x128xf32>
    %67 = tpu.reciprocal %66 {approx = true} : vector<2x128xf32> -> vector<2x128xf32>
    %68 = arith.truncf %67 : vector<2x128xf32> to vector<2x128xbf16>
    %c0_29 = arith.constant 0 : index
    %c0_30 = arith.constant 0 : index
    %69 = vector.load %arg6[%c0_29, %c0_30] : memref<128x128xbf16, #tpu.memory_space<vmem>>, vector<128x128xbf16>
    %cst_31 = arith.constant dense<0.000000e+00> : vector<2x128xf32>
    %70 = tpu.matmul %68, %69, %cst_31 {dimension_numbers = #tpu.dot_dimension_numbers<[1], [0], [0], [1], [0, 0, 1, 1], [], []>} : vector<2x128xbf16>, vector<128x128xbf16>, vector<2x128xf32> -> vector<2x128xf32>
    %c0_32 = arith.constant 0 : index
    %c0_33 = arith.constant 0 : index
    %71 = vector.load %arg7[%c0_32, %c0_33] : memref<1x128xf32, #tpu.memory_space<vmem>>, vector<1x128xf32>
    %72 = vector.broadcast %71 : vector<1x128xf32> to vector<2x128xf32>
    %73 = arith.addf %70, %72 : vector<2x128xf32>
    %c0_34 = arith.constant 0 : index
    %c0_35 = arith.constant 0 : index
    %74 = vector.load %arg8[%c0_34, %c0_35] : memref<2x128xf32, #tpu.memory_space<vmem>>, vector<2x128xf32>
    tpu.vector_store %arg8[%c0_34, %c0_35], %73 {strides = array<i32>} : memref<2x128xf32, #tpu.memory_space<vmem>>, vector<2x128xf32>,
    return
  }
  func.func @transform_0(%arg0: i32) -> (i32, i32) {
    %c0_i32 = arith.constant 0 : i32
    %c0_i32_0 = arith.constant 0 : i32
    %c0_i32_1 = arith.constant 0 : i32
    return %c0_i32, %c0_i32_0 : i32, i32
  }
  func.func @transform_1(%arg0: i32) -> (i32, i32) {
    %c0_i32 = arith.constant 0 : i32
    %c0_i32_0 = arith.constant 0 : i32
    %c0_i32_1 = arith.constant 0 : i32
    return %c0_i32, %c0_i32_0 : i32, i32
  }
  func.func @transform_2(%arg0: i32) -> (i32, i32) {
    %c0_i32 = arith.constant 0 : i32
    %c0_i32_0 = arith.constant 0 : i32
    %c0_i32_1 = arith.constant 0 : i32
    return %c0_i32, %c0_i32_0 : i32, i32
  }
  func.func @transform_3(%arg0: i32) -> (i32, i32) {
    %c0_i32 = arith.constant 0 : i32
    %c0_i32_0 = arith.constant 0 : i32
    %c0_i32_1 = arith.constant 0 : i32
    return %c0_i32, %c0_i32_0 : i32, i32
  }
  func.func @transform_4(%arg0: i32) -> (i32, i32) {
    %c0_i32 = arith.constant 0 : i32
    %c0_i32_0 = arith.constant 0 : i32
    %c0_i32_1 = arith.constant 0 : i32
    return %c0_i32, %c0_i32_0 : i32, i32
  }
  func.func @transform_5(%arg0: i32) -> (i32, i32) {
    %c0_i32 = arith.constant 0 : i32
    %c0_i32_0 = arith.constant 0 : i32
    %c0_i32_1 = arith.constant 0 : i32
    return %c0_i32, %c0_i32_0 : i32, i32
  }
  func.func @transform_6(%arg0: i32) -> (i32, i32) {
    %c0_i32 = arith.constant 0 : i32
    %c0_i32_0 = arith.constant 0 : i32
    %c0_i32_1 = arith.constant 0 : i32
    return %c0_i32, %c0_i32_0 : i32, i32
  }
  func.func @transform_7(%arg0: i32) -> (i32, i32) {
    %c0_i32 = arith.constant 0 : i32
    %c0_i32_0 = arith.constant 0 : i32
    %c0_i32_1 = arith.constant 0 : i32
    return %c0_i32, %c0_i32_0 : i32, i32
  }
}

</mosaic_0001>

<llo_original>
// kernel: bn_lenet_forward.5
$region0: #{bn_lenet_forward.5}
  #allocation0 [shape = 'u32[]', space=smem, size = 0x4, offset = 0x4, fixed_abs, tag = 'smem constant byte address 0x4 - core index']
  #allocation1 [shape = 'u32[144,128]{1,0:T(1,128)}', space=vmem, size = 0x12000, scoped, tag = 'internal scratch']
  %s0 = inlined_call_operand.vmem [shape: bf16[2048,128], index: 0, kind: input, shape index: {}]
  %s1 = inlined_call_operand.vmem [shape: bf16[128,128], index: 1, kind: input, shape index: {}]
  %s2 = inlined_call_operand.vmem [shape: f32[2048,128], index: 2, kind: output, shape index: {0}]
  %s3 = inlined_call_operand.vmem [shape: f32[32,128], index: 3, kind: output, shape index: {1}]
  %4 = xla_tuple %s2, %s3
  %s5 = sld [smem:[#allocation0]]
  $region49: #{bn_lenet_forward.5} parent=0
    _
  %s7 = ssub.s32 1, %s5
  %s8 = scalar_select 0, %s7, %s5
  loop: start=0, step=1, limit=6
  $region2: #{bn_lenet_forward.5} parent=0 // loop_pre_header
    _
  $region3: #{bn_lenet_forward.5} parent=0 // loop_header
    %s10 = sphi 0, %s14
    %p11 = scmp.ge.s32.totalorder %s10, 6
    %s20 = sphi 0, %s22
    %s23 = sphi 0, %s20
    %s24 = sphi 0, %s23
    %s40 = sphi 0, %s24
    %s44 = sphi 0, %s44
    %s46 = sphi 0, %s44
    %s47 = sphi 0, %s46
    %s61 = sphi 0, %s47
    %s67 = sphi 0, %s69
    %s70 = sphi 0, %s67
    %s71 = sphi 0, %s70
    %s87 = sphi 0, %s71
    %s93 = sphi 0, %s95
    %s96 = sphi 0, %s93
    %s97 = sphi 0, %s96
    %s113 = sphi 0, %s97
  $region4: #{bn_lenet_forward.5} parent=0 // loop_header_branch
    %13 = sbr.rel (%p11) target = $region8
  $region5: #{bn_lenet_forward.5} parent=0 // loop_body
    %s15 = ssub.s32 %s10, 1
    %s16 = ssub.s32 %s10, 2
    %s17 = sadd.s32 %s10, 1
    %s18 = ssub.s32 %s10, %s17
    %p19 = scmp.eq.s32.totalorder %s18, 0
    %s21 = sadd.s32 %s20, 1
    %s22 = scalar_select %p19, %s20, %s21
    %p25 = pneg %p19
    %p26 = scmp.eq.s32.totalorder %s10, 3
    %p27 = por %p25, %p26
    %p28 = scmp.ne.s32.totalorder %s20, %s23
    %p29 = scmp.eq.s32.totalorder %s10, 0
    %p30 = por %p28, %p29
    %p31 = scmp.ne.s32.totalorder %s20, %s23
    %p32 = scmp.eq.s32.totalorder %s15, 3
    %p33 = por %p31, %p32
    %p34 = scmp.ne.s32.totalorder %s23, %s24
    %p35 = scmp.eq.s32.totalorder %s15, 0
    %p36 = por %p34, %p35
    %p37 = scmp.ne.s32.totalorder %s23, %s24
    %p38 = scmp.eq.s32.totalorder %s16, 3
    %p39 = por %p37, %p38
    %p41 = scmp.ne.s32.totalorder %s24, %s40
    %p42 = scmp.eq.s32.totalorder %s16, 0
    %p43 = por %p41, %p42
    %s45 = sadd.s32 %s44, 1
    %p48 = scmp.eq.s32.totalorder %s10, 3
    %p49 = scmp.ne.s32.totalorder %s44, %s46
    %p50 = scmp.eq.s32.totalorder %s10, 0
    %p51 = por %p49, %p50
    %p52 = scmp.ne.s32.totalorder %s44, %s46
    %p53 = scmp.eq.s32.totalorder %s15, 3
    %p54 = por %p52, %p53
    %p55 = scmp.ne.s32.totalorder %s46, %s47
    %p56 = scmp.eq.s32.totalorder %s15, 0
    %p57 = por %p55, %p56
    %p58 = scmp.ne.s32.totalorder %s46, %s47
    %p59 = scmp.eq.s32.totalorder %s16, 3
    %p60 = por %p58, %p59
    %p62 = scmp.ne.s32.totalorder %s47, %s61
    %p63 = scmp.eq.s32.totalorder %s16, 0
    %p64 = por %p62, %p63
    %s65 = ssub.s32 %s10, %s17
    %p66 = scmp.eq.s32.totalorder %s65, 0
    %s68 = sadd.s32 %s67, 1
    %s69 = scalar_select %p66, %s67, %s68
    %p72 = pneg %p66
    %p73 = scmp.eq.s32.totalorder %s10, 3
    %p74 = por %p72, %p73
    %p75 = scmp.ne.s32.totalorder %s67, %s70
    %p76 = scmp.eq.s32.totalorder %s10, 0
    %p77 = por %p75, %p76
    %p78 = scmp.ne.s32.totalorder %s67, %s70
    %p79 = scmp.eq.s32.totalorder %s15, 3
    %p80 = por %p78, %p79
    %p81 = scmp.ne.s32.totalorder %s70, %s71
    %p82 = scmp.eq.s32.totalorder %s15, 0
    %p83 = por %p81, %p82
    %p84 = scmp.ne.s32.totalorder %s70, %s71
    %p85 = scmp.eq.s32.totalorder %s16, 3
    %p86 = por %p84, %p85
    %p88 = scmp.ne.s32.totalorder %s71, %s87
    %p89 = scmp.eq.s32.totalorder %s16, 0
    %p90 = por %p88, %p89
    %s91 = ssub.s32 %s10, %s17
    %p92 = scmp.eq.s32.totalorder %s91, 0
    %s94 = sadd.s32 %s93, 1
    %s95 = scalar_select %p92, %s93, %s94
    %p98 = pneg %p92
    %p99 = scmp.eq.s32.totalorder %s10, 3
    %p100 = por %p98, %p99
    %p101 = scmp.ne.s32.totalorder %s93, %s96
    %p102 = scmp.eq.s32.totalorder %s10, 0
    %p103 = por %p101, %p102
    %p104 = scmp.ne.s32.totalorder %s93, %s96
    %p105 = scmp.eq.s32.totalorder %s15, 3
    %p106 = por %p104, %p105
    %p107 = scmp.ne.s32.totalorder %s96, %s97
    %p108 = scmp.eq.s32.totalorder %s15, 0
    %p109 = por %p107, %p108
    %p110 = scmp.ne.s32.totalorder %s96, %s97
    %p111 = scmp.eq.s32.totalorder %s16, 3
    %p112 = por %p110, %p111
    %p114 = scmp.ne.s32.totalorder %s97, %s113
    %p115 = scmp.eq.s32.totalorder %s16, 0
    %p116 = por %p114, %p115
    %p117 = scmp.le.s32.totalorder 1, %s10
    %p118 = scmp.lt.s32.totalorder %s10, 5
    %p119 = pnand %p117, %p118
    %p120 = pneg %p119
    // Predicated region
    $region9: #{bn_lenet_forward.5} parent=5 // pred_check
      _
    $region10: #{bn_lenet_forward.5} parent=5 // pred_check_branch
      %122 = sbr.rel (%p119) target = $region12
    $region11: #{bn_lenet_forward.5} parent=5 // pred_region
      %s123 = ssub.s32 %s10, 1
      // Predicated region
      $region13: #{bn_lenet_forward.5} parent=11 // pred_check
        %p124 = pneg %p57
      $region14: #{bn_lenet_forward.5} parent=11 // pred_check_branch
        %126 = sbr.rel (%p124) target = $region16
      $region15: #{bn_lenet_forward.5} parent=11 // pred_region
        _
      $region16: #{bn_lenet_forward.5} parent=11 // pred_fallthru
        _
    $region12: #{bn_lenet_forward.5} parent=5 // pred_fallthru
      _
    %p127 = scmp.lt.s32.totalorder %s10, 4
    // Predicated region
    $region17: #{bn_lenet_forward.5} parent=5 // pred_check
      %p128 = pneg %p127
    $region18: #{bn_lenet_forward.5} parent=5 // pred_check_branch
      %130 = sbr.rel (%p128) target = $region20
    $region19: #{bn_lenet_forward.5} parent=5 // pred_region
      // Predicated region
      $region21: #{bn_lenet_forward.5} parent=19 // pred_check
        %p131 = pneg %p30
      $region22: #{bn_lenet_forward.5} parent=19 // pred_check_branch
        %133 = sbr.rel (%p131) target = $region24
      $region23: #{bn_lenet_forward.5} parent=19 // pred_region
        %s134 = smul.u32 64, %s10
        %p135 = scmp.lt.s32.totalorder %s134, 255
        %s136 = scalar_select %p135, %s134, 255
        %s137 = smul.addr %s136, 4
        %s138 = scalar_lea.vmem %s0, %s137
        %s139 = smul.u32 64, %s10
      $region24: #{bn_lenet_forward.5} parent=19 // pred_fallthru
        _
    $region20: #{bn_lenet_forward.5} parent=5 // pred_fallthru
      _
    %p140 = scmp.le.s32.totalorder 1, %s10
    %p141 = scmp.lt.s32.totalorder %s10, 5
    %p142 = pnand %p140, %p141
    %p143 = pneg %p142
    // Predicated region
    $region25: #{bn_lenet_forward.5} parent=5 // pred_check
      _
    $region26: #{bn_lenet_forward.5} parent=5 // pred_check_branch
      %145 = sbr.rel (%p142) target = $region28
    $region27: #{bn_lenet_forward.5} parent=5 // pred_region
      %s146 = ssub.s32 %s10, 1
      %s147 = smul.u32 64, %s15
      %p148 = scmp.lt.s32.totalorder %s147, 255
      %s149 = scalar_select %p148, %s147, 255
      %s150 = smul.addr %s149, 4
      %s151 = scalar_lea.vmem %s0, %s150
      %p152 = pneg %p36
      %p153 = pneg %p33
      %p154 = pneg %p57
      %p155 = pneg %p54
      %p156 = pneg %p83
      %p157 = pneg %p80
      %s158 = smul.u32 64, %s15
      %p159 = scmp.lt.s32.totalorder %s158, 255
      %s160 = scalar_select %p159, %s158, 255
      %s161 = smul.addr %s160, 8
      %s162 = scalar_lea.vmem %s2, %s161
      %p163 = pneg %p109
      %p164 = pneg %p106
      %p165 = scmp.lt.s32.totalorder %s15, 3
      %s166 = scalar_select %p165, %s15, 3
      %s167 = smul.addr %s166, 8
      %s168 = scalar_lea.vmem %s3, %s167
      %s169 = smul.u32 64, %s15
      %p170 = scmp.lt.s32.totalorder %s169, 255
      %s171 = scalar_select %p170, %s169, 255
      %s172 = smul.addr %s171, 4
      %s173 = scalar_lea.vmem %s0, %s172
      %s174 = smul.u32 64, %s15
      %s175 = smul.u32 64, %s15
      %p176 = scmp.lt.s32.totalorder %s175, 255
      %s177 = scalar_select %p176, %s175, 255
      %s178 = smul.addr %s177, 8
      %s179 = scalar_lea.vmem %s2, %s178
      %s180 = smul.u32 64, %s15
      %p181 = scmp.lt.s32.totalorder %s15, 3
      %s182 = scalar_select %p181, %s15, 3
      %s183 = smul.addr %s182, 8
      %s184 = scalar_lea.vmem %s3, %s183
      %v186 = vld [vmem:[%s173] sm:$0xf]
      %v187 = vld [vmem:[%s173 + $0x4] sm:$0xf]
      %v188 = vld [vmem:[%s173 + $0x8] sm:$0xf]
      %v189 = vld [vmem:[%s173 + $0xc] sm:$0xf]
      %v190 = vld [vmem:[%s173 + $0x10] sm:$0xf]
      %v191 = vld [vmem:[%s173 + $0x14] sm:$0xf]
      %v192 = vld [vmem:[%s173 + $0x18] sm:$0xf]
      %v193 = vld [vmem:[%s173 + $0x1c] sm:$0xf]
      %v194 = vld [vmem:[%s173 + $0x20] sm:$0xf]
      %v195 = vld [vmem:[%s173 + $0x24] sm:$0xf]
      %v196 = vld [vmem:[%s173 + $0x28] sm:$0xf]
      %v197 = vld [vmem:[%s173 + $0x2c] sm:$0xf]
      %v198 = vld [vmem:[%s173 + $0x30] sm:$0xf]
      %v199 = vld [vmem:[%s173 + $0x34] sm:$0xf]
      %v200 = vld [vmem:[%s173 + $0x38] sm:$0xf]
      %v201 = vld [vmem:[%s173 + $0x3c] sm:$0xf]
      %v202 = vld [vmem:[%s173 + $0x40] sm:$0xf]
      %v203 = vld [vmem:[%s173 + $0x44] sm:$0xf]
      %v204 = vld [vmem:[%s173 + $0x48] sm:$0xf]
      %v205 = vld [vmem:[%s173 + $0x4c] sm:$0xf]
      %v206 = vld [vmem:[%s173 + $0x50] sm:$0xf]
      %v207 = vld [vmem:[%s173 + $0x54] sm:$0xf]
      %v208 = vld [vmem:[%s173 + $0x58] sm:$0xf]
      %v209 = vld [vmem:[%s173 + $0x5c] sm:$0xf]
      %v210 = vld [vmem:[%s173 + $0x60] sm:$0xf]
      %v211 = vld [vmem:[%s173 + $0x64] sm:$0xf]
      %v212 = vld [vmem:[%s173 + $0x68] sm:$0xf]
      %v213 = vld [vmem:[%s173 + $0x6c] sm:$0xf]
      %v214 = vld [vmem:[%s173 + $0x70] sm:$0xf]
      %v215 = vld [vmem:[%s173 + $0x74] sm:$0xf]
      %v216 = vld [vmem:[%s173 + $0x78] sm:$0xf]
      %v217 = vld [vmem:[%s173 + $0x7c] sm:$0xf]
      %v218 = vld [vmem:[%s173 + $0x80] sm:$0xf]
      %v219 = vld [vmem:[%s173 + $0x84] sm:$0xf]
      %v220 = vld [vmem:[%s173 + $0x88] sm:$0xf]
      %v221 = vld [vmem:[%s173 + $0x8c] sm:$0xf]
      %v222 = vld [vmem:[%s173 + $0x90] sm:$0xf]
      %v223 = vld [vmem:[%s173 + $0x94] sm:$0xf]
      %v224 = vld [vmem:[%s173 + $0x98] sm:$0xf]
      %v225 = vld [vmem:[%s173 + $0x9c] sm:$0xf]
      %v226 = vld [vmem:[%s173 + $0xa0] sm:$0xf]
      %v227 = vld [vmem:[%s173 + $0xa4] sm:$0xf]
      %v228 = vld [vmem:[%s173 + $0xa8] sm:$0xf]
      %v229 = vld [vmem:[%s173 + $0xac] sm:$0xf]
      %v230 = vld [vmem:[%s173 + $0xb0] sm:$0xf]
      %v231 = vld [vmem:[%s173 + $0xb4] sm:$0xf]
      %v232 = vld [vmem:[%s173 + $0xb8] sm:$0xf]
      %v233 = vld [vmem:[%s173 + $0xbc] sm:$0xf]
      %v234 = vld [vmem:[%s173 + $0xc0] sm:$0xf]
      %v235 = vld [vmem:[%s173 + $0xc4] sm:$0xf]
      %v236 = vld [vmem:[%s173 + $0xc8] sm:$0xf]
      %v237 = vld [vmem:[%s173 + $0xcc] sm:$0xf]
      %v238 = vld [vmem:[%s173 + $0xd0] sm:$0xf]
      %v239 = vld [vmem:[%s173 + $0xd4] sm:$0xf]
      %v240 = vld [vmem:[%s173 + $0xd8] sm:$0xf]
      %v241 = vld [vmem:[%s173 + $0xdc] sm:$0xf]
      %v242 = vld [vmem:[%s173 + $0xe0] sm:$0xf]
      %v243 = vld [vmem:[%s173 + $0xe4] sm:$0xf]
      %v244 = vld [vmem:[%s173 + $0xe8] sm:$0xf]
      %v245 = vld [vmem:[%s173 + $0xec] sm:$0xf]
      %v246 = vld [vmem:[%s173 + $0xf0] sm:$0xf]
      %v247 = vld [vmem:[%s173 + $0xf4] sm:$0xf]
      %v248 = vld [vmem:[%s173 + $0xf8] sm:$0xf]
      %v249 = vld [vmem:[%s173 + $0xfc] sm:$0xf]
      %v250 = vld [vmem:[%s1] sm:$0xf]
      %v251 = vld [vmem:[%s1 + $0x4] sm:$0xf]
      %v252 = vld [vmem:[%s1 + $0x8] sm:$0xf]
      %v253 = vld [vmem:[%s1 + $0xc] sm:$0xf]
      %v254 = vld [vmem:[%s1 + $0x10] sm:$0xf]
      %v255 = vld [vmem:[%s1 + $0x14] sm:$0xf]
      %v256 = vld [vmem:[%s1 + $0x18] sm:$0xf]
      %v257 = vld [vmem:[%s1 + $0x1c] sm:$0xf]
      %v258 = vld [vmem:[%s1 + $0x20] sm:$0xf]
      %v259 = vld [vmem:[%s1 + $0x24] sm:$0xf]
      %v260 = vld [vmem:[%s1 + $0x28] sm:$0xf]
      %v261 = vld [vmem:[%s1 + $0x2c] sm:$0xf]
      %v262 = vld [vmem:[%s1 + $0x30] sm:$0xf]
      %v263 = vld [vmem:[%s1 + $0x34] sm:$0xf]
      %v264 = vld [vmem:[%s1 + $0x38] sm:$0xf]
      %v265 = vld [vmem:[%s1 + $0x3c] sm:$0xf]
      %v330 = vunpack.c.l.b16 %v186
      %v331 = vunpack.c.l.b16 %v187
      %v332 = vunpack.c.l.b16 %v188
      %v333 = vunpack.c.l.b16 %v189
      %v334 = vunpack.c.l.b16 %v190
      %v335 = vunpack.c.l.b16 %v191
      %v336 = vunpack.c.l.b16 %v192
      %v337 = vunpack.c.l.b16 %v193
      %v338 = vunpack.c.l.b16 %v194
      %v339 = vunpack.c.l.b16 %v195
      %v340 = vunpack.c.l.b16 %v196
      %v341 = vunpack.c.l.b16 %v197
      %v342 = vunpack.c.l.b16 %v198
      %v343 = vunpack.c.l.b16 %v199
      %v344 = vunpack.c.l.b16 %v200
      %v345 = vunpack.c.l.b16 %v201
      %v346 = vunpack.c.l.b16 %v202
      %v347 = vunpack.c.l.b16 %v203
      %v348 = vunpack.c.l.b16 %v204
      %v349 = vunpack.c.l.b16 %v205
      %v350 = vunpack.c.l.b16 %v206
      %v351 = vunpack.c.l.b16 %v207
      %v352 = vunpack.c.l.b16 %v208
      %v353 = vunpack.c.l.b16 %v209
      %v354 = vunpack.c.l.b16 %v210
      %v355 = vunpack.c.l.b16 %v211
      %v356 = vunpack.c.l.b16 %v212
      %v357 = vunpack.c.l.b16 %v213
      %v358 = vunpack.c.l.b16 %v214
      %v359 = vunpack.c.l.b16 %v215
      %v360 = vunpack.c.l.b16 %v216
      %v361 = vunpack.c.l.b16 %v217
      %v362 = vunpack.c.l.b16 %v218
      %v363 = vunpack.c.l.b16 %v219
      %v364 = vunpack.c.l.b16 %v220
      %v365 = vunpack.c.l.b16 %v221
      %v366 = vunpack.c.l.b16 %v222
      %v367 = vunpack.c.l.b16 %v223
      %v368 = vunpack.c.l.b16 %v224
      %v369 = vunpack.c.l.b16 %v225
      %v370 = vunpack.c.l.b16 %v226
      %v371 = vunpack.c.l.b16 %v227
      %v372 = vunpack.c.l.b16 %v228
      %v373 = vunpack.c.l.b16 %v229
      %v374 = vunpack.c.l.b16 %v230
      %v375 = vunpack.c.l.b16 %v231
      %v376 = vunpack.c.l.b16 %v232
      %v377 = vunpack.c.l.b16 %v233
      %v378 = vunpack.c.l.b16 %v234
      %v379 = vunpack.c.l.b16 %v235
      %v380 = vunpack.c.l.b16 %v236
      %v381 = vunpack.c.l.b16 %v237
      %v382 = vunpack.c.l.b16 %v238
      %v383 = vunpack.c.l.b16 %v239
      %v384 = vunpack.c.l.b16 %v240
      %v385 = vunpack.c.l.b16 %v241
      %v386 = vunpack.c.l.b16 %v242
      %v387 = vunpack.c.l.b16 %v243
      %v388 = vunpack.c.l.b16 %v244
      %v389 = vunpack.c.l.b16 %v245
      %v390 = vunpack.c.l.b16 %v246
      %v391 = vunpack.c.l.b16 %v247
      %v392 = vunpack.c.l.b16 %v248
      %v393 = vunpack.c.l.b16 %v249
      %v394 = vpack.c.b16 %v331, %v330
      %v395 = vpack.c.b16 %v333, %v332
      %v396 = vpack.c.b16 %v335, %v334
      %v397 = vpack.c.b16 %v337, %v336
      %v398 = vpack.c.b16 %v339, %v338
      %v399 = vpack.c.b16 %v341, %v340
      %v400 = vpack.c.b16 %v343, %v342
      %v401 = vpack.c.b16 %v345, %v344
      %v402 = vpack.c.b16 %v347, %v346
      %v403 = vpack.c.b16 %v349, %v348
      %v404 = vpack.c.b16 %v351, %v350
      %v405 = vpack.c.b16 %v353, %v352
      %v406 = vpack.c.b16 %v355, %v354
      %v407 = vpack.c.b16 %v357, %v356
      %v408 = vpack.c.b16 %v359, %v358
      %v409 = vpack.c.b16 %v361, %v360
      %v410 = vpack.c.b16 %v363, %v362
      %v411 = vpack.c.b16 %v365, %v364
      %v412 = vpack.c.b16 %v367, %v366
      %v413 = vpack.c.b16 %v369, %v368
      %v414 = vpack.c.b16 %v371, %v370
      %v415 = vpack.c.b16 %v373, %v372
      %v416 = vpack.c.b16 %v375, %v374
      %v417 = vpack.c.b16 %v377, %v376
      %v418 = vpack.c.b16 %v379, %v378
      %v419 = vpack.c.b16 %v381, %v380
      %v420 = vpack.c.b16 %v383, %v382
      %v421 = vpack.c.b16 %v385, %v384
      %v422 = vpack.c.b16 %v387, %v386
      %v423 = vpack.c.b16 %v389, %v388
      %v424 = vpack.c.b16 %v391, %v390
      %v425 = vpack.c.b16 %v393, %v392
      %v474 = vunpack.c.l.b16 %v250
      %v475 = vunpack.c.l.b16 %v251
      %v476 = vunpack.c.l.b16 %v252
      %v477 = vunpack.c.l.b16 %v253
      %v478 = vunpack.c.l.b16 %v254
      %v479 = vunpack.c.l.b16 %v255
      %v480 = vunpack.c.l.b16 %v256
      %v481 = vunpack.c.l.b16 %v257
      %v482 = vunpack.c.l.b16 %v258
      %v483 = vunpack.c.l.b16 %v259
      %v484 = vunpack.c.l.b16 %v260
      %v485 = vunpack.c.l.b16 %v261
      %v486 = vunpack.c.l.b16 %v262
      %v487 = vunpack.c.l.b16 %v263
      %v488 = vunpack.c.l.b16 %v264
      %v489 = vunpack.c.l.b16 %v265
      %v490 = vpack.c.b16 %v475, %v474
      %v491 = vpack.c.b16 %v477, %v476
      %v492 = vpack.c.b16 %v479, %v478
      %v493 = vpack.c.b16 %v481, %v480
      %v494 = vpack.c.b16 %v483, %v482
      %v495 = vpack.c.b16 %v485, %v484
      %v496 = vpack.c.b16 %v487, %v486
      %v497 = vpack.c.b16 %v489, %v488
      %506 = vmatprep.subr.bf16.mxu0 0
      %507 = vmatpush1.bf16.msra.mxu0 %v497
      %508 = vmatprep.subr.bf16.mxu0 0
      %509 = vmatpush1.bf16.msra.mxu0 %v496
      %510 = vmatprep.subr.bf16.mxu0 0
      %511 = vmatpush1.bf16.msra.mxu0 %v495
      %512 = vmatprep.subr.bf16.mxu0 0
      %513 = vmatpush1.bf16.msra.mxu0 %v494
      %514 = vmatprep.subr.bf16.mxu0 0
      %515 = vmatpush1.bf16.msra.mxu0 %v493
      %516 = vmatprep.subr.bf16.mxu0 0
      %517 = vmatpush1.bf16.msra.mxu0 %v492
      %518 = vmatprep.subr.bf16.mxu0 0
      %519 = vmatpush1.bf16.msra.mxu0 %v491
      %520 = vmatprep.subr.bf16.mxu0 0
      %521 = vmatpush1.bf16.msra.mxu0 %v490
      %522 = vmatprep.subr.bf16.mxu0 0
      %523 = vmatpush2.bf16.msra.mxu0 0
      %524 = vmatprep.subr.bf16.mxu0 0
      %525 = vmatpush2.bf16.msra.mxu0 0
      %526 = vmatprep.subr.bf16.mxu0 0
      %527 = vmatpush2.bf16.msra.mxu0 0
      %528 = vmatprep.subr.bf16.mxu0 0
      %529 = vmatpush2.bf16.msra.mxu0 0
      %530 = vmatprep.subr.bf16.mxu0 0
      %531 = vmatpush2.bf16.msra.mxu0 0
      %532 = vmatprep.subr.bf16.mxu0 0
      %533 = vmatpush2.bf16.msra.mxu0 0
      %534 = vmatprep.subr.bf16.mxu0 0
      %535 = vmatpush2.bf16.msra.mxu0 0
      %536 = vmatprep.subr.bf16.mxu0 0
      %537 = vmatpush2.bf16.msra.mxu0 0
      %538 = vmatprep.mubr.bf16.mxu0 0
      %539 = vmatmul.mubr.bf16.gmra.mxu0 %v394
      %v540 = vpop.f32.mrf.mxu0
      %v541 = vadd.f32 0.0, %v540
      %v542 = vpop.f32.mrf.mxu0
      %v543 = vpop.f32.mrf.mxu0
      %v544 = vadd.f32 0.0, %v543
      %v545 = vpop.f32.mrf.mxu0
      %546 = vmatprep.mubr.bf16.mxu0 0
      %547 = vmatmul.mubr.bf16.gmra.mxu0 %v395
      %v548 = vpop.f32.mrf.mxu0
      %v549 = vadd.f32 0.0, %v548
      %v550 = vpop.f32.mrf.mxu0
      %v551 = vpop.f32.mrf.mxu0
      %v552 = vadd.f32 0.0, %v551
      %v553 = vpop.f32.mrf.mxu0
      %554 = vmatprep.mubr.bf16.mxu0 0
      %555 = vmatmul.mubr.bf16.gmra.mxu0 %v396
      %v556 = vpop.f32.mrf.mxu0
      %v557 = vadd.f32 0.0, %v556
      %v558 = vpop.f32.mrf.mxu0
      %v559 = vpop.f32.mrf.mxu0
      %v560 = vadd.f32 0.0, %v559
      %v561 = vpop.f32.mrf.mxu0
      %562 = vmatprep.mubr.bf16.mxu0 0
      %563 = vmatmul.mubr.bf16.gmra.mxu0 %v397
      %v564 = vpop.f32.mrf.mxu0
      %v565 = vadd.f32 0.0, %v564
      %v566 = vpop.f32.mrf.mxu0
      %v567 = vpop.f32.mrf.mxu0
      %v568 = vadd.f32 0.0, %v567
      %v569 = vpop.f32.mrf.mxu0
      %570 = vmatprep.mubr.bf16.mxu0 0
      %571 = vmatmul.mubr.bf16.gmra.mxu0 %v398
      %v572 = vpop.f32.mrf.mxu0
      %v573 = vadd.f32 0.0, %v572
      %v574 = vpop.f32.mrf.mxu0
      %v575 = vpop.f32.mrf.mxu0
      %v576 = vadd.f32 0.0, %v575
      %v577 = vpop.f32.mrf.mxu0
      %578 = vmatprep.mubr.bf16.mxu0 0
      %579 = vmatmul.mubr.bf16.gmra.mxu0 %v399
      %v580 = vpop.f32.mrf.mxu0
      %v581 = vadd.f32 0.0, %v580
      %v582 = vpop.f32.mrf.mxu0
      %v583 = vpop.f32.mrf.mxu0
      %v584 = vadd.f32 0.0, %v583
      %v585 = vpop.f32.mrf.mxu0
      %586 = vmatprep.mubr.bf16.mxu0 0
      %587 = vmatmul.mubr.bf16.gmra.mxu0 %v400
      %v588 = vpop.f32.mrf.mxu0
      %v589 = vadd.f32 0.0, %v588
      %v590 = vpop.f32.mrf.mxu0
      %v591 = vpop.f32.mrf.mxu0
      %v592 = vadd.f32 0.0, %v591
      %v593 = vpop.f32.mrf.mxu0
      %594 = vmatprep.mubr.bf16.mxu0 0
      %595 = vmatmul.mubr.bf16.gmra.mxu0 %v401
      %v596 = vpop.f32.mrf.mxu0
      %v597 = vadd.f32 0.0, %v596
      %v598 = vpop.f32.mrf.mxu0
      %v599 = vpop.f32.mrf.mxu0
      %v600 = vadd.f32 0.0, %v599
      %v601 = vpop.f32.mrf.mxu0
      %602 = vmatprep.mubr.bf16.mxu0 0
      %603 = vmatmul.mubr.bf16.gmra.mxu0 %v402
      %v604 = vpop.f32.mrf.mxu0
      %v605 = vadd.f32 0.0, %v604
      %v606 = vpop.f32.mrf.mxu0
      %v607 = vpop.f32.mrf.mxu0
      %v608 = vadd.f32 0.0, %v607
      %v609 = vpop.f32.mrf.mxu0
      %610 = vmatprep.mubr.bf16.mxu0 0
      %611 = vmatmul.mubr.bf16.gmra.mxu0 %v403
      %v612 = vpop.f32.mrf.mxu0
      %v613 = vadd.f32 0.0, %v612
      %v614 = vpop.f32.mrf.mxu0
      %v615 = vpop.f32.mrf.mxu0
      %v616 = vadd.f32 0.0, %v615
      %v617 = vpop.f32.mrf.mxu0
      %618 = vmatprep.mubr.bf16.mxu0 0
      %619 = vmatmul.mubr.bf16.gmra.mxu0 %v404
      %v620 = vpop.f32.mrf.mxu0
      %v621 = vadd.f32 0.0, %v620
      %v622 = vpop.f32.mrf.mxu0
      %v623 = vpop.f32.mrf.mxu0
      %v624 = vadd.f32 0.0, %v623
      %v625 = vpop.f32.mrf.mxu0
      %626 = vmatprep.mubr.bf16.mxu0 0
      %627 = vmatmul.mubr.bf16.gmra.mxu0 %v405
      %v628 = vpop.f32.mrf.mxu0
      %v629 = vadd.f32 0.0, %v628
      %v630 = vpop.f32.mrf.mxu0
      %v631 = vpop.f32.mrf.mxu0
      %v632 = vadd.f32 0.0, %v631
      %v633 = vpop.f32.mrf.mxu0
      %634 = vmatprep.mubr.bf16.mxu0 0
      %635 = vmatmul.mubr.bf16.gmra.mxu0 %v406
      %v636 = vpop.f32.mrf.mxu0
      %v637 = vadd.f32 0.0, %v636
      %v638 = vpop.f32.mrf.mxu0
      %v639 = vpop.f32.mrf.mxu0
      %v640 = vadd.f32 0.0, %v639
      %v641 = vpop.f32.mrf.mxu0
      %642 = vmatprep.mubr.bf16.mxu0 0
      %643 = vmatmul.mubr.bf16.gmra.mxu0 %v407
      %v644 = vpop.f32.mrf.mxu0
      %v645 = vadd.f32 0.0, %v644
      %v646 = vpop.f32.mrf.mxu0
      %v647 = vpop.f32.mrf.mxu0
      %v648 = vadd.f32 0.0, %v647
      %v649 = vpop.f32.mrf.mxu0
      %650 = vmatprep.mubr.bf16.mxu0 0
      %651 = vmatmul.mubr.bf16.gmra.mxu0 %v408
      %v652 = vpop.f32.mrf.mxu0
      %v653 = vadd.f32 0.0, %v652
      %v654 = vpop.f32.mrf.mxu0
      %v655 = vpop.f32.mrf.mxu0
      %v656 = vadd.f32 0.0, %v655
      %v657 = vpop.f32.mrf.mxu0
      %658 = vmatprep.mubr.bf16.mxu0 0
      %659 = vmatmul.mubr.bf16.gmra.mxu0 %v409
      %v660 = vpop.f32.mrf.mxu0
      %v661 = vadd.f32 0.0, %v660
      %v662 = vpop.f32.mrf.mxu0
      %v663 = vpop.f32.mrf.mxu0
      %v664 = vadd.f32 0.0, %v663
      %v665 = vpop.f32.mrf.mxu0
      %666 = vmatprep.mubr.bf16.mxu0 0
      %667 = vmatmul.mubr.bf16.gmra.mxu0 %v410
      %v668 = vpop.f32.mrf.mxu0
      %v669 = vadd.f32 0.0, %v668
      %v670 = vpop.f32.mrf.mxu0
      %v671 = vpop.f32.mrf.mxu0
      %v672 = vadd.f32 0.0, %v671
      %v673 = vpop.f32.mrf.mxu0
      %674 = vmatprep.mubr.bf16.mxu0 0
      %675 = vmatmul.mubr.bf16.gmra.mxu0 %v411
      %v676 = vpop.f32.mrf.mxu0
      %v677 = vadd.f32 0.0, %v676
      %v678 = vpop.f32.mrf.mxu0
      %v679 = vpop.f32.mrf.mxu0
      %v680 = vadd.f32 0.0, %v679
      %v681 = vpop.f32.mrf.mxu0
      %682 = vmatprep.mubr.bf16.mxu0 0
      %683 = vmatmul.mubr.bf16.gmra.mxu0 %v412
      %v684 = vpop.f32.mrf.mxu0
      %v685 = vadd.f32 0.0, %v684
      %v686 = vpop.f32.mrf.mxu0
      %v687 = vpop.f32.mrf.mxu0
      %v688 = vadd.f32 0.0, %v687
      %v689 = vpop.f32.mrf.mxu0
      %690 = vmatprep.mubr.bf16.mxu0 0
      %691 = vmatmul.mubr.bf16.gmra.mxu0 %v413
      %v692 = vpop.f32.mrf.mxu0
      %v693 = vadd.f32 0.0, %v692
      %v694 = vpop.f32.mrf.mxu0
      %v695 = vpop.f32.mrf.mxu0
      %v696 = vadd.f32 0.0, %v695
      %v697 = vpop.f32.mrf.mxu0
      %698 = vmatprep.mubr.bf16.mxu0 0
      %699 = vmatmul.mubr.bf16.gmra.mxu0 %v414
      %v700 = vpop.f32.mrf.mxu0
      %v701 = vadd.f32 0.0, %v700
      %v702 = vpop.f32.mrf.mxu0
      %v703 = vpop.f32.mrf.mxu0
      %v704 = vadd.f32 0.0, %v703
      %v705 = vpop.f32.mrf.mxu0
      %706 = vmatprep.mubr.bf16.mxu0 0
      %707 = vmatmul.mubr.bf16.gmra.mxu0 %v415
      %v708 = vpop.f32.mrf.mxu0
      %v709 = vadd.f32 0.0, %v708
      %v710 = vpop.f32.mrf.mxu0
      %v711 = vpop.f32.mrf.mxu0
      %v712 = vadd.f32 0.0, %v711
      %v713 = vpop.f32.mrf.mxu0
      %714 = vmatprep.mubr.bf16.mxu0 0
      %715 = vmatmul.mubr.bf16.gmra.mxu0 %v416
      %v716 = vpop.f32.mrf.mxu0
      %v717 = vadd.f32 0.0, %v716
      %v718 = vpop.f32.mrf.mxu0
      %v719 = vpop.f32.mrf.mxu0
      %v720 = vadd.f32 0.0, %v719
      %v721 = vpop.f32.mrf.mxu0
      %722 = vmatprep.mubr.bf16.mxu0 0
      %723 = vmatmul.mubr.bf16.gmra.mxu0 %v417
      %v724 = vpop.f32.mrf.mxu0
      %v725 = vadd.f32 0.0, %v724
      %v726 = vpop.f32.mrf.mxu0
      %v727 = vpop.f32.mrf.mxu0
      %v728 = vadd.f32 0.0, %v727
      %v729 = vpop.f32.mrf.mxu0
      %730 = vmatprep.mubr.bf16.mxu0 0
      %731 = vmatmul.mubr.bf16.gmra.mxu0 %v418
      %v732 = vpop.f32.mrf.mxu0
      %v733 = vadd.f32 0.0, %v732
      %v734 = vpop.f32.mrf.mxu0
      %v735 = vpop.f32.mrf.mxu0
      %v736 = vadd.f32 0.0, %v735
      %v737 = vpop.f32.mrf.mxu0
      %738 = vmatprep.mubr.bf16.mxu0 0
      %739 = vmatmul.mubr.bf16.gmra.mxu0 %v419
      %v740 = vpop.f32.mrf.mxu0
      %v741 = vadd.f32 0.0, %v740
      %v742 = vpop.f32.mrf.mxu0
      %v743 = vpop.f32.mrf.mxu0
      %v744 = vadd.f32 0.0, %v743
      %v745 = vpop.f32.mrf.mxu0
      %746 = vmatprep.mubr.bf16.mxu0 0
      %747 = vmatmul.mubr.bf16.gmra.mxu0 %v420
      %v748 = vpop.f32.mrf.mxu0
      %v749 = vadd.f32 0.0, %v748
      %v750 = vpop.f32.mrf.mxu0
      %v751 = vpop.f32.mrf.mxu0
      %v752 = vadd.f32 0.0, %v751
      %v753 = vpop.f32.mrf.mxu0
      %754 = vmatprep.mubr.bf16.mxu0 0
      %755 = vmatmul.mubr.bf16.gmra.mxu0 %v421
      %v756 = vpop.f32.mrf.mxu0
      %v757 = vadd.f32 0.0, %v756
      %v758 = vpop.f32.mrf.mxu0
      %v759 = vpop.f32.mrf.mxu0
      %v760 = vadd.f32 0.0, %v759
      %v761 = vpop.f32.mrf.mxu0
      %762 = vmatprep.mubr.bf16.mxu0 0
      %763 = vmatmul.mubr.bf16.gmra.mxu0 %v422
      %v764 = vpop.f32.mrf.mxu0
      %v765 = vadd.f32 0.0, %v764
      %v766 = vpop.f32.mrf.mxu0
      %v767 = vpop.f32.mrf.mxu0
      %v768 = vadd.f32 0.0, %v767
      %v769 = vpop.f32.mrf.mxu0
      %770 = vmatprep.mubr.bf16.mxu0 0
      %771 = vmatmul.mubr.bf16.gmra.mxu0 %v423
      %v772 = vpop.f32.mrf.mxu0
      %v773 = vadd.f32 0.0, %v772
      %v774 = vpop.f32.mrf.mxu0
      %v775 = vpop.f32.mrf.mxu0
      %v776 = vadd.f32 0.0, %v775
      %v777 = vpop.f32.mrf.mxu0
      %778 = vmatprep.mubr.bf16.mxu0 0
      %779 = vmatmul.mubr.bf16.gmra.mxu0 %v424
      %v780 = vpop.f32.mrf.mxu0
      %v781 = vadd.f32 0.0, %v780
      %v782 = vpop.f32.mrf.mxu0
      %v783 = vpop.f32.mrf.mxu0
      %v784 = vadd.f32 0.0, %v783
      %v785 = vpop.f32.mrf.mxu0
      %786 = vmatprep.mubr.bf16.mxu0 0
      %787 = vmatmul.mubr.bf16.gmra.mxu0 %v425
      %v788 = vpop.f32.mrf.mxu0
      %v789 = vadd.f32 0.0, %v788
      %v790 = vpop.f32.mrf.mxu0
      %v791 = vpop.f32.mrf.mxu0
      %v792 = vadd.f32 0.0, %v791
      %v793 = vpop.f32.mrf.mxu0
      %794 = vdwg.mxu0
      %795 = vst [vmem:[%s179] sm:$0xff] %v541
      %796 = vst [vmem:[%s179 + $0x8] sm:$0xff] %v544
      %797 = vst [vmem:[%s179 + $0x10] sm:$0xff] %v549
      %798 = vst [vmem:[%s179 + $0x18] sm:$0xff] %v552
      %799 = vst [vmem:[%s179 + $0x20] sm:$0xff] %v557
      %800 = vst [vmem:[%s179 + $0x28] sm:$0xff] %v560
      %801 = vst [vmem:[%s179 + $0x30] sm:$0xff] %v565
      %802 = vst [vmem:[%s179 + $0x38] sm:$0xff] %v568
      %803 = vst [vmem:[%s179 + $0x40] sm:$0xff] %v573
      %804 = vst [vmem:[%s179 + $0x48] sm:$0xff] %v576
      %805 = vst [vmem:[%s179 + $0x50] sm:$0xff] %v581
      %806 = vst [vmem:[%s179 + $0x58] sm:$0xff] %v584
      %807 = vst [vmem:[%s179 + $0x60] sm:$0xff] %v589
      %808 = vst [vmem:[%s179 + $0x68] sm:$0xff] %v592
      %809 = vst [vmem:[%s179 + $0x70] sm:$0xff] %v597
      %810 = vst [vmem:[%s179 + $0x78] sm:$0xff] %v600
      %811 = vst [vmem:[%s179 + $0x80] sm:$0xff] %v605
      %812 = vst [vmem:[%s179 + $0x88] sm:$0xff] %v608
      %813 = vst [vmem:[%s179 + $0x90] sm:$0xff] %v613
      %814 = vst [vmem:[%s179 + $0x98] sm:$0xff] %v616
      %815 = vst [vmem:[%s179 + $0xa0] sm:$0xff] %v621
      %816 = vst [vmem:[%s179 + $0xa8] sm:$0xff] %v624
      %817 = vst [vmem:[%s179 + $0xb0] sm:$0xff] %v629
      %818 = vst [vmem:[%s179 + $0xb8] sm:$0xff] %v632
      %819 = vst [vmem:[%s179 + $0xc0] sm:$0xff] %v637
      %820 = vst [vmem:[%s179 + $0xc8] sm:$0xff] %v640
      %821 = vst [vmem:[%s179 + $0xd0] sm:$0xff] %v645
      %822 = vst [vmem:[%s179 + $0xd8] sm:$0xff] %v648
      %823 = vst [vmem:[%s179 + $0xe0] sm:$0xff] %v653
      %824 = vst [vmem:[%s179 + $0xe8] sm:$0xff] %v656
      %825 = vst [vmem:[%s179 + $0xf0] sm:$0xff] %v661
      %826 = vst [vmem:[%s179 + $0xf8] sm:$0xff] %v664
      %827 = vst [vmem:[%s179 + $0x100] sm:$0xff] %v669
      %828 = vst [vmem:[%s179 + $0x108] sm:$0xff] %v672
      %829 = vst [vmem:[%s179 + $0x110] sm:$0xff] %v677
      %830 = vst [vmem:[%s179 + $0x118] sm:$0xff] %v680
      %831 = vst [vmem:[%s179 + $0x120] sm:$0xff] %v685
      %832 = vst [vmem:[%s179 + $0x128] sm:$0xff] %v688
      %833 = vst [vmem:[%s179 + $0x130] sm:$0xff] %v693
      %834 = vst [vmem:[%s179 + $0x138] sm:$0xff] %v696
      %835 = vst [vmem:[%s179 + $0x140] sm:$0xff] %v701
      %836 = vst [vmem:[%s179 + $0x148] sm:$0xff] %v704
      %837 = vst [vmem:[%s179 + $0x150] sm:$0xff] %v709
      %838 = vst [vmem:[%s179 + $0x158] sm:$0xff] %v712
      %839 = vst [vmem:[%s179 + $0x160] sm:$0xff] %v717
      %840 = vst [vmem:[%s179 + $0x168] sm:$0xff] %v720
      %841 = vst [vmem:[%s179 + $0x170] sm:$0xff] %v725
      %842 = vst [vmem:[%s179 + $0x178] sm:$0xff] %v728
      %843 = vst [vmem:[%s179 + $0x180] sm:$0xff] %v733
      %844 = vst [vmem:[%s179 + $0x188] sm:$0xff] %v736
      %845 = vst [vmem:[%s179 + $0x190] sm:$0xff] %v741
      %846 = vst [vmem:[%s179 + $0x198] sm:$0xff] %v744
      %847 = vst [vmem:[%s179 + $0x1a0] sm:$0xff] %v749
      %848 = vst [vmem:[%s179 + $0x1a8] sm:$0xff] %v752
      %849 = vst [vmem:[%s179 + $0x1b0] sm:$0xff] %v757
      %850 = vst [vmem:[%s179 + $0x1b8] sm:$0xff] %v760
      %851 = vst [vmem:[%s179 + $0x1c0] sm:$0xff] %v765
      %852 = vst [vmem:[%s179 + $0x1c8] sm:$0xff] %v768
      %853 = vst [vmem:[%s179 + $0x1d0] sm:$0xff] %v773
      %854 = vst [vmem:[%s179 + $0x1d8] sm:$0xff] %v776
      %855 = vst [vmem:[%s179 + $0x1e0] sm:$0xff] %v781
      %856 = vst [vmem:[%s179 + $0x1e8] sm:$0xff] %v784
      %857 = vst [vmem:[%s179 + $0x1f0] sm:$0xff] %v789
      %858 = vst [vmem:[%s179 + $0x1f8] sm:$0xff] %v792
      %v859 = vadd.f32 %v541, %v544
      %v860 = vadd.f32 %v859, %v549
      %v861 = vadd.f32 %v860, %v552
      %v862 = vadd.f32 %v861, %v557
      %v863 = vadd.f32 %v862, %v560
      %v864 = vadd.f32 %v863, %v565
      %v865 = vadd.f32 %v864, %v568
      %v866 = vadd.f32 %v865, %v573
      %v867 = vadd.f32 %v866, %v576
      %v868 = vadd.f32 %v867, %v581
      %v869 = vadd.f32 %v868, %v584
      %v870 = vadd.f32 %v869, %v589
      %v871 = vadd.f32 %v870, %v592
      %v872 = vadd.f32 %v871, %v597
      %v873 = vadd.f32 %v872, %v600
      %v874 = vadd.f32 %v873, %v605
      %v875 = vadd.f32 %v874, %v608
      %v876 = vadd.f32 %v875, %v613
      %v877 = vadd.f32 %v876, %v616
      %v878 = vadd.f32 %v877, %v621
      %v879 = vadd.f32 %v878, %v624
      %v880 = vadd.f32 %v879, %v629
      %v881 = vadd.f32 %v880, %v632
      %v882 = vadd.f32 %v881, %v637
      %v883 = vadd.f32 %v882, %v640
      %v884 = vadd.f32 %v883, %v645
      %v885 = vadd.f32 %v884, %v648
      %v886 = vadd.f32 %v885, %v653
      %v887 = vadd.f32 %v886, %v656
      %v888 = vadd.f32 %v887, %v661
      %v889 = vadd.f32 %v888, %v664
      %v890 = vadd.f32 %v889, %v669
      %v891 = vadd.f32 %v890, %v672
      %v892 = vadd.f32 %v891, %v677
      %v893 = vadd.f32 %v892, %v680
      %v894 = vadd.f32 %v893, %v685
      %v895 = vadd.f32 %v894, %v688
      %v896 = vadd.f32 %v895, %v693
      %v897 = vadd.f32 %v896, %v696
      %v898 = vadd.f32 %v897, %v701
      %v899 = vadd.f32 %v898, %v704
      %v900 = vadd.f32 %v899, %v709
      %v901 = vadd.f32 %v900, %v712
      %v902 = vadd.f32 %v901, %v717
      %v903 = vadd.f32 %v902, %v720
      %v904 = vadd.f32 %v903, %v725
      %v905 = vadd.f32 %v904, %v728
      %v906 = vadd.f32 %v905, %v733
      %v907 = vadd.f32 %v906, %v736
      %v908 = vadd.f32 %v907, %v741
      %v909 = vadd.f32 %v908, %v744
      %v910 = vadd.f32 %v909, %v749
      %v911 = vadd.f32 %v910, %v752
      %v912 = vadd.f32 %v911, %v757
      %v913 = vadd.f32 %v912, %v760
      %v914 = vadd.f32 %v913, %v765
      %v915 = vadd.f32 %v914, %v768
      %v916 = vadd.f32 %v915, %v773
      %v917 = vadd.f32 %v916, %v776
      %v918 = vadd.f32 %v917, %v781
      %v919 = vadd.f32 %v918, %v784
      %v920 = vadd.f32 %v919, %v789
      %v921 = vadd.f32 %v920, %v792
      %v922 = vrot.slane %v921, 4
      %v923 = vadd.f32 %v921, %v922
      %v924 = vrot.slane %v923, 2
      %v925 = vadd.f32 %v923, %v924
      %v926 = vrot.slane %v925, 1
      %v927 = vadd.f32 %v925, %v926
      %v928 = vmul.f32 %v541, %v541
      %v929 = vmul.f32 %v544, %v544
      %v930 = vmul.f32 %v549, %v549
      %v931 = vmul.f32 %v552, %v552
      %v932 = vmul.f32 %v557, %v557
      %v933 = vmul.f32 %v560, %v560
      %v934 = vmul.f32 %v565, %v565
      %v935 = vmul.f32 %v568, %v568
      %v936 = vmul.f32 %v573, %v573
      %v937 = vmul.f32 %v576, %v576
      %v938 = vmul.f32 %v581, %v581
      %v939 = vmul.f32 %v584, %v584
      %v940 = vmul.f32 %v589, %v589
      %v941 = vmul.f32 %v592, %v592
      %v942 = vmul.f32 %v597, %v597
      %v943 = vmul.f32 %v600, %v600
      %v944 = vmul.f32 %v605, %v605
      %v945 = vmul.f32 %v608, %v608
      %v946 = vmul.f32 %v613, %v613
      %v947 = vmul.f32 %v616, %v616
      %v948 = vmul.f32 %v621, %v621
      %v949 = vmul.f32 %v624, %v624
      %v950 = vmul.f32 %v629, %v629
      %v951 = vmul.f32 %v632, %v632
      %v952 = vmul.f32 %v637, %v637
      %v953 = vmul.f32 %v640, %v640
      %v954 = vmul.f32 %v645, %v645
      %v955 = vmul.f32 %v648, %v648
      %v956 = vmul.f32 %v653, %v653
      %v957 = vmul.f32 %v656, %v656
      %v958 = vmul.f32 %v661, %v661
      %v959 = vmul.f32 %v664, %v664
      %v960 = vmul.f32 %v669, %v669
      %v961 = vmul.f32 %v672, %v672
      %v962 = vmul.f32 %v677, %v677
      %v963 = vmul.f32 %v680, %v680
      %v964 = vmul.f32 %v685, %v685
      %v965 = vmul.f32 %v688, %v688
      %v966 = vmul.f32 %v693, %v693
      %v967 = vmul.f32 %v696, %v696
      %v968 = vmul.f32 %v701, %v701
      %v969 = vmul.f32 %v704, %v704
      %v970 = vmul.f32 %v709, %v709
      %v971 = vmul.f32 %v712, %v712
      %v972 = vmul.f32 %v717, %v717
      %v973 = vmul.f32 %v720, %v720
      %v974 = vmul.f32 %v725, %v725
      %v975 = vmul.f32 %v728, %v728
      %v976 = vmul.f32 %v733, %v733
      %v977 = vmul.f32 %v736, %v736
      %v978 = vmul.f32 %v741, %v741
      %v979 = vmul.f32 %v744, %v744
      %v980 = vmul.f32 %v749, %v749
      %v981 = vmul.f32 %v752, %v752
      %v982 = vmul.f32 %v757, %v757
      %v983 = vmul.f32 %v760, %v760
      %v984 = vmul.f32 %v765, %v765
      %v985 = vmul.f32 %v768, %v768
      %v986 = vmul.f32 %v773, %v773
      %v987 = vmul.f32 %v776, %v776
      %v988 = vmul.f32 %v781, %v781
      %v989 = vmul.f32 %v784, %v784
      %v990 = vmul.f32 %v789, %v789
      %v991 = vmul.f32 %v792, %v792
      %v992 = vadd.f32 %v928, %v929
      %v993 = vadd.f32 %v992, %v930
      %v994 = vadd.f32 %v993, %v931
      %v995 = vadd.f32 %v994, %v932
      %v996 = vadd.f32 %v995, %v933
      %v997 = vadd.f32 %v996, %v934
      %v998 = vadd.f32 %v997, %v935
      %v999 = vadd.f32 %v998, %v936
      %v1000 = vadd.f32 %v999, %v937
      %v1001 = vadd.f32 %v1000, %v938
      %v1002 = vadd.f32 %v1001, %v939
      %v1003 = vadd.f32 %v1002, %v940
      %v1004 = vadd.f32 %v1003, %v941
      %v1005 = vadd.f32 %v1004, %v942
      %v1006 = vadd.f32 %v1005, %v943
      %v1007 = vadd.f32 %v1006, %v944
      %v1008 = vadd.f32 %v1007, %v945
      %v1009 = vadd.f32 %v1008, %v946
      %v1010 = vadd.f32 %v1009, %v947
      %v1011 = vadd.f32 %v1010, %v948
      %v1012 = vadd.f32 %v1011, %v949
      %v1013 = vadd.f32 %v1012, %v950
      %v1014 = vadd.f32 %v1013, %v951
      %v1015 = vadd.f32 %v1014, %v952
      %v1016 = vadd.f32 %v1015, %v953
      %v1017 = vadd.f32 %v1016, %v954
      %v1018 = vadd.f32 %v1017, %v955
      %v1019 = vadd.f32 %v1018, %v956
      %v1020 = vadd.f32 %v1019, %v957
      %v1021 = vadd.f32 %v1020, %v958
      %v1022 = vadd.f32 %v1021, %v959
      %v1023 = vadd.f32 %v1022, %v960
      %v1024 = vadd.f32 %v1023, %v961
      %v1025 = vadd.f32 %v1024, %v962
      %v1026 = vadd.f32 %v1025, %v963
      %v1027 = vadd.f32 %v1026, %v964
      %v1028 = vadd.f32 %v1027, %v965
      %v1029 = vadd.f32 %v1028, %v966
      %v1030 = vadd.f32 %v1029, %v967
      %v1031 = vadd.f32 %v1030, %v968
      %v1032 = vadd.f32 %v1031, %v969
      %v1033 = vadd.f32 %v1032, %v970
      %v1034 = vadd.f32 %v1033, %v971
      %v1035 = vadd.f32 %v1034, %v972
      %v1036 = vadd.f32 %v1035, %v973
      %v1037 = vadd.f32 %v1036, %v974
      %v1038 = vadd.f32 %v1037, %v975
      %v1039 = vadd.f32 %v1038, %v976
      %v1040 = vadd.f32 %v1039, %v977
      %v1041 = vadd.f32 %v1040, %v978
      %v1042 = vadd.f32 %v1041, %v979
      %v1043 = vadd.f32 %v1042, %v980
      %v1044 = vadd.f32 %v1043, %v981
      %v1045 = vadd.f32 %v1044, %v982
      %v1046 = vadd.f32 %v1045, %v983
      %v1047 = vadd.f32 %v1046, %v984
      %v1048 = vadd.f32 %v1047, %v985
      %v1049 = vadd.f32 %v1048, %v986
      %v1050 = vadd.f32 %v1049, %v987
      %v1051 = vadd.f32 %v1050, %v988
      %v1052 = vadd.f32 %v1051, %v989
      %v1053 = vadd.f32 %v1052, %v990
      %v1054 = vadd.f32 %v1053, %v991
      %v1055 = vrot.slane %v1054, 4
      %v1056 = vadd.f32 %v1054, %v1055
      %v1057 = vrot.slane %v1056, 2
      %v1058 = vadd.f32 %v1056, %v1057
      %v1059 = vrot.slane %v1058, 1
      %v1060 = vadd.f32 %v1058, %v1059
      %vm1061 = vcmask 1040384
      %v1062 = vsel %vm1061, %v927, %v1060
      %vm1063 = vcmask 1041408
      %v1064 = vsel %vm1063, %v1062, 0.0
      %1065 = vst [vmem:[%s184] sm:$0xff] %v1064
      %s1066 = smul.u32 64, %s15
      %p1067 = scmp.lt.s32.totalorder %s1066, 255
      %s1068 = scalar_select %p1067, %s1066, 255
      %s1069 = smul.addr %s1068, 8
      %s1070 = scalar_lea.vmem %s2, %s1069
      %p1071 = scmp.lt.s32.totalorder %s15, 3
      %s1072 = scalar_select %p1071, %s15, 3
      %s1073 = smul.addr %s1072, 8
      %s1074 = scalar_lea.vmem %s3, %s1073
      // Predicated region
      $region29: #{bn_lenet_forward.5} parent=27 // pred_check
        %p1075 = pneg %p80
      $region30: #{bn_lenet_forward.5} parent=27 // pred_check_branch
        %1077 = sbr.rel (%p1075) target = $region32
      $region31: #{bn_lenet_forward.5} parent=27 // pred_region
        %s1078 = smul.u32 64, %s15
      $region32: #{bn_lenet_forward.5} parent=27 // pred_fallthru
        _
      // Predicated region
      $region33: #{bn_lenet_forward.5} parent=27 // pred_check
        %p1079 = pneg %p106
      $region34: #{bn_lenet_forward.5} parent=27 // pred_check_branch
        %1081 = sbr.rel (%p1079) target = $region36
      $region35: #{bn_lenet_forward.5} parent=27 // pred_region
        _
      $region36: #{bn_lenet_forward.5} parent=27 // pred_fallthru
        _
    $region28: #{bn_lenet_forward.5} parent=5 // pred_fallthru
      _
    %p1082 = scmp.le.s32.totalorder 2, %s10
    // Predicated region
    $region37: #{bn_lenet_forward.5} parent=5 // pred_check
      %p1083 = pneg %p1082
    $region38: #{bn_lenet_forward.5} parent=5 // pred_check_branch
      %1085 = sbr.rel (%p1083) target = $region40
    $region39: #{bn_lenet_forward.5} parent=5 // pred_region
      %s1086 = ssub.s32 %s10, 2
      // Predicated region
      $region41: #{bn_lenet_forward.5} parent=39 // pred_check
        %p1087 = pneg %p86
      $region42: #{bn_lenet_forward.5} parent=39 // pred_check_branch
        %1089 = sbr.rel (%p1087) target = $region44
      $region43: #{bn_lenet_forward.5} parent=39 // pred_region
        %s1090 = smul.u32 64, %s16
        %p1091 = scmp.lt.s32.totalorder %s1090, 255
        %s1092 = scalar_select %p1091, %s1090, 255
        %s1093 = smul.addr %s1092, 8
        %s1094 = scalar_lea.vmem %s2, %s1093
      $region44: #{bn_lenet_forward.5} parent=39 // pred_fallthru
        _
      // Predicated region
      $region45: #{bn_lenet_forward.5} parent=39 // pred_check
        %p1095 = pneg %p112
      $region46: #{bn_lenet_forward.5} parent=39 // pred_check_branch
        %1097 = sbr.rel (%p1095) target = $region48
      $region47: #{bn_lenet_forward.5} parent=39 // pred_region
        %p1098 = scmp.lt.s32.totalorder %s16, 3
        %s1099 = scalar_select %p1098, %s16, 3
        %s1100 = smul.addr %s1099, 8
        %s1101 = scalar_lea.vmem %s3, %s1100
      $region48: #{bn_lenet_forward.5} parent=39 // pred_fallthru
        _
    $region40: #{bn_lenet_forward.5} parent=5 // pred_fallthru
      _
  $region6: #{bn_lenet_forward.5} parent=0 // loop_footer
    %s14 = sadd.s32 1, %s10
  $region7: #{bn_lenet_forward.5} parent=0 // loop_footer_branch
    %9 = sbr.rel target = $region3
  $region8: #{bn_lenet_forward.5} parent=0 // loop_exit
    _

// kernel: bn_lenet_forward.6
$region0: #{bn_lenet_forward.6}
  #allocation0 [shape = 'u32[]', space=smem, size = 0x4, offset = 0x4, fixed_abs, tag = 'smem constant byte address 0x4 - core index']
  #allocation1 [shape = 'u32[144,128]{1,0:T(1,128)}', space=vmem, size = 0x12000, scoped, tag = 'internal scratch']
  %s0 = inlined_call_operand.vmem [shape: f32[2048,128], index: 0, kind: input, shape index: {}]
  %s1 = inlined_call_operand.vmem [shape: f32[2,128], index: 1, kind: input, shape index: {}]
  %s2 = inlined_call_operand.vmem [shape: bf16[2048,128], index: 2, kind: output, shape index: {}]
  %s3 = sld [smem:[#allocation0]]
  $region41: #{bn_lenet_forward.6} parent=0
    _
  %s5 = ssub.s32 1, %s3
  %s6 = scalar_select 0, %s5, %s3
  loop: start=0, step=1, limit=6
  $region2: #{bn_lenet_forward.6} parent=0 // loop_pre_header
    _
  $region3: #{bn_lenet_forward.6} parent=0 // loop_header
    %s8 = sphi 0, %s12
    %p9 = scmp.ge.s32.totalorder %s8, 6
    %s18 = sphi 0, %s20
    %s21 = sphi 0, %s18
    %s22 = sphi 0, %s21
    %s38 = sphi 0, %s22
    %s42 = sphi 0, %s42
    %s44 = sphi 0, %s42
    %s45 = sphi 0, %s44
    %s59 = sphi 0, %s45
    %s65 = sphi 0, %s67
    %s68 = sphi 0, %s65
    %s69 = sphi 0, %s68
    %s85 = sphi 0, %s69
  $region4: #{bn_lenet_forward.6} parent=0 // loop_header_branch
    %11 = sbr.rel (%p9) target = $region8
  $region5: #{bn_lenet_forward.6} parent=0 // loop_body
    %s13 = ssub.s32 %s8, 1
    %s14 = ssub.s32 %s8, 2
    %s15 = sadd.s32 %s8, 1
    %s16 = ssub.s32 %s8, %s15
    %p17 = scmp.eq.s32.totalorder %s16, 0
    %s19 = sadd.s32 %s18, 1
    %s20 = scalar_select %p17, %s18, %s19
    %p23 = pneg %p17
    %p24 = scmp.eq.s32.totalorder %s8, 3
    %p25 = por %p23, %p24
    %p26 = scmp.ne.s32.totalorder %s18, %s21
    %p27 = scmp.eq.s32.totalorder %s8, 0
    %p28 = por %p26, %p27
    %p29 = scmp.ne.s32.totalorder %s18, %s21
    %p30 = scmp.eq.s32.totalorder %s13, 3
    %p31 = por %p29, %p30
    %p32 = scmp.ne.s32.totalorder %s21, %s22
    %p33 = scmp.eq.s32.totalorder %s13, 0
    %p34 = por %p32, %p33
    %p35 = scmp.ne.s32.totalorder %s21, %s22
    %p36 = scmp.eq.s32.totalorder %s14, 3
    %p37 = por %p35, %p36
    %p39 = scmp.ne.s32.totalorder %s22, %s38
    %p40 = scmp.eq.s32.totalorder %s14, 0
    %p41 = por %p39, %p40
    %s43 = sadd.s32 %s42, 1
    %p46 = scmp.eq.s32.totalorder %s8, 3
    %p47 = scmp.ne.s32.totalorder %s42, %s44
    %p48 = scmp.eq.s32.totalorder %s8, 0
    %p49 = por %p47, %p48
    %p50 = scmp.ne.s32.totalorder %s42, %s44
    %p51 = scmp.eq.s32.totalorder %s13, 3
    %p52 = por %p50, %p51
    %p53 = scmp.ne.s32.totalorder %s44, %s45
    %p54 = scmp.eq.s32.totalorder %s13, 0
    %p55 = por %p53, %p54
    %p56 = scmp.ne.s32.totalorder %s44, %s45
    %p57 = scmp.eq.s32.totalorder %s14, 3
    %p58 = por %p56, %p57
    %p60 = scmp.ne.s32.totalorder %s45, %s59
    %p61 = scmp.eq.s32.totalorder %s14, 0
    %p62 = por %p60, %p61
    %s63 = ssub.s32 %s8, %s15
    %p64 = scmp.eq.s32.totalorder %s63, 0
    %s66 = sadd.s32 %s65, 1
    %s67 = scalar_select %p64, %s65, %s66
    %p70 = pneg %p64
    %p71 = scmp.eq.s32.totalorder %s8, 3
    %p72 = por %p70, %p71
    %p73 = scmp.ne.s32.totalorder %s65, %s68
    %p74 = scmp.eq.s32.totalorder %s8, 0
    %p75 = por %p73, %p74
    %p76 = scmp.ne.s32.totalorder %s65, %s68
    %p77 = scmp.eq.s32.totalorder %s13, 3
    %p78 = por %p76, %p77
    %p79 = scmp.ne.s32.totalorder %s68, %s69
    %p80 = scmp.eq.s32.totalorder %s13, 0
    %p81 = por %p79, %p80
    %p82 = scmp.ne.s32.totalorder %s68, %s69
    %p83 = scmp.eq.s32.totalorder %s14, 3
    %p84 = por %p82, %p83
    %p86 = scmp.ne.s32.totalorder %s69, %s85
    %p87 = scmp.eq.s32.totalorder %s14, 0
    %p88 = por %p86, %p87
    %p89 = scmp.le.s32.totalorder 1, %s8
    %p90 = scmp.lt.s32.totalorder %s8, 5
    %p91 = pnand %p89, %p90
    %p92 = pneg %p91
    // Predicated region
    $region9: #{bn_lenet_forward.6} parent=5 // pred_check
      _
    $region10: #{bn_lenet_forward.6} parent=5 // pred_check_branch
      %94 = sbr.rel (%p91) target = $region12
    $region11: #{bn_lenet_forward.6} parent=5 // pred_region
      %s95 = ssub.s32 %s8, 1
      // Predicated region
      $region13: #{bn_lenet_forward.6} parent=11 // pred_check
        %p96 = pneg %p55
      $region14: #{bn_lenet_forward.6} parent=11 // pred_check_branch
        %98 = sbr.rel (%p96) target = $region16
      $region15: #{bn_lenet_forward.6} parent=11 // pred_region
        _
      $region16: #{bn_lenet_forward.6} parent=11 // pred_fallthru
        _
    $region12: #{bn_lenet_forward.6} parent=5 // pred_fallthru
      _
    %p99 = scmp.lt.s32.totalorder %s8, 4
    // Predicated region
    $region17: #{bn_lenet_forward.6} parent=5 // pred_check
      %p100 = pneg %p99
    $region18: #{bn_lenet_forward.6} parent=5 // pred_check_branch
      %102 = sbr.rel (%p100) target = $region20
    $region19: #{bn_lenet_forward.6} parent=5 // pred_region
      // Predicated region
      $region21: #{bn_lenet_forward.6} parent=19 // pred_check
        %p103 = pneg %p28
      $region22: #{bn_lenet_forward.6} parent=19 // pred_check_branch
        %105 = sbr.rel (%p103) target = $region24
      $region23: #{bn_lenet_forward.6} parent=19 // pred_region
        %s106 = smul.u32 64, %s8
        %p107 = scmp.lt.s32.totalorder %s106, 255
        %s108 = scalar_select %p107, %s106, 255
        %s109 = smul.addr %s108, 8
        %s110 = scalar_lea.vmem %s0, %s109
        %s111 = smul.u32 64, %s8
      $region24: #{bn_lenet_forward.6} parent=19 // pred_fallthru
        _
    $region20: #{bn_lenet_forward.6} parent=5 // pred_fallthru
      _
    %p112 = scmp.le.s32.totalorder 1, %s8
    %p113 = scmp.lt.s32.totalorder %s8, 5
    %p114 = pnand %p112, %p113
    %p115 = pneg %p114
    // Predicated region
    $region25: #{bn_lenet_forward.6} parent=5 // pred_check
      _
    $region26: #{bn_lenet_forward.6} parent=5 // pred_check_branch
      %117 = sbr.rel (%p114) target = $region28
    $region27: #{bn_lenet_forward.6} parent=5 // pred_region
      %s118 = ssub.s32 %s8, 1
      %s119 = smul.u32 64, %s13
      %p120 = scmp.lt.s32.totalorder %s119, 255
      %s121 = scalar_select %p120, %s119, 255
      %s122 = smul.addr %s121, 8
      %s123 = scalar_lea.vmem %s0, %s122
      %p124 = pneg %p34
      %p125 = pneg %p31
      %p126 = pneg %p55
      %p127 = pneg %p52
      %p128 = pneg %p81
      %p129 = pneg %p78
      %s130 = smul.u32 64, %s13
      %p131 = scmp.lt.s32.totalorder %s130, 255
      %s132 = scalar_select %p131, %s130, 255
      %s133 = smul.addr %s132, 4
      %s134 = scalar_lea.vmem %s2, %s133
      %s135 = smul.u32 64, %s13
      %p136 = scmp.lt.s32.totalorder %s135, 255
      %s137 = scalar_select %p136, %s135, 255
      %s138 = smul.addr %s137, 8
      %s139 = scalar_lea.vmem %s0, %s138
      %s140 = smul.u32 64, %s13
      %s141 = smul.u32 64, %s13
      %p142 = scmp.lt.s32.totalorder %s141, 255
      %s143 = scalar_select %p142, %s141, 255
      %s144 = smul.addr %s143, 4
      %s145 = scalar_lea.vmem %s2, %s144
      %s146 = smul.u32 64, %s13
      %v147 = vld [vmem:[%s139] sm:$0xff]
      %v148 = vld [vmem:[%s139 + $0x8] sm:$0xff]
      %v149 = vld [vmem:[%s139 + $0x10] sm:$0xff]
      %v150 = vld [vmem:[%s139 + $0x18] sm:$0xff]
      %v151 = vld [vmem:[%s139 + $0x20] sm:$0xff]
      %v152 = vld [vmem:[%s139 + $0x28] sm:$0xff]
      %v153 = vld [vmem:[%s139 + $0x30] sm:$0xff]
      %v154 = vld [vmem:[%s139 + $0x38] sm:$0xff]
      %v155 = vld [vmem:[%s139 + $0x40] sm:$0xff]
      %v156 = vld [vmem:[%s139 + $0x48] sm:$0xff]
      %v157 = vld [vmem:[%s139 + $0x50] sm:$0xff]
      %v158 = vld [vmem:[%s139 + $0x58] sm:$0xff]
      %v159 = vld [vmem:[%s139 + $0x60] sm:$0xff]
      %v160 = vld [vmem:[%s139 + $0x68] sm:$0xff]
      %v161 = vld [vmem:[%s139 + $0x70] sm:$0xff]
      %v162 = vld [vmem:[%s139 + $0x78] sm:$0xff]
      %v163 = vld [vmem:[%s139 + $0x80] sm:$0xff]
      %v164 = vld [vmem:[%s139 + $0x88] sm:$0xff]
      %v165 = vld [vmem:[%s139 + $0x90] sm:$0xff]
      %v166 = vld [vmem:[%s139 + $0x98] sm:$0xff]
      %v167 = vld [vmem:[%s139 + $0xa0] sm:$0xff]
      %v168 = vld [vmem:[%s139 + $0xa8] sm:$0xff]
      %v169 = vld [vmem:[%s139 + $0xb0] sm:$0xff]
      %v170 = vld [vmem:[%s139 + $0xb8] sm:$0xff]
      %v171 = vld [vmem:[%s139 + $0xc0] sm:$0xff]
      %v172 = vld [vmem:[%s139 + $0xc8] sm:$0xff]
      %v173 = vld [vmem:[%s139 + $0xd0] sm:$0xff]
      %v174 = vld [vmem:[%s139 + $0xd8] sm:$0xff]
      %v175 = vld [vmem:[%s139 + $0xe0] sm:$0xff]
      %v176 = vld [vmem:[%s139 + $0xe8] sm:$0xff]
      %v177 = vld [vmem:[%s139 + $0xf0] sm:$0xff]
      %v178 = vld [vmem:[%s139 + $0xf8] sm:$0xff]
      %v179 = vld [vmem:[%s139 + $0x100] sm:$0xff]
      %v180 = vld [vmem:[%s139 + $0x108] sm:$0xff]
      %v181 = vld [vmem:[%s139 + $0x110] sm:$0xff]
      %v182 = vld [vmem:[%s139 + $0x118] sm:$0xff]
      %v183 = vld [vmem:[%s139 + $0x120] sm:$0xff]
      %v184 = vld [vmem:[%s139 + $0x128] sm:$0xff]
      %v185 = vld [vmem:[%s139 + $0x130] sm:$0xff]
      %v186 = vld [vmem:[%s139 + $0x138] sm:$0xff]
      %v187 = vld [vmem:[%s139 + $0x140] sm:$0xff]
      %v188 = vld [vmem:[%s139 + $0x148] sm:$0xff]
      %v189 = vld [vmem:[%s139 + $0x150] sm:$0xff]
      %v190 = vld [vmem:[%s139 + $0x158] sm:$0xff]
      %v191 = vld [vmem:[%s139 + $0x160] sm:$0xff]
      %v192 = vld [vmem:[%s139 + $0x168] sm:$0xff]
      %v193 = vld [vmem:[%s139 + $0x170] sm:$0xff]
      %v194 = vld [vmem:[%s139 + $0x178] sm:$0xff]
      %v195 = vld [vmem:[%s139 + $0x180] sm:$0xff]
      %v196 = vld [vmem:[%s139 + $0x188] sm:$0xff]
      %v197 = vld [vmem:[%s139 + $0x190] sm:$0xff]
      %v198 = vld [vmem:[%s139 + $0x198] sm:$0xff]
      %v199 = vld [vmem:[%s139 + $0x1a0] sm:$0xff]
      %v200 = vld [vmem:[%s139 + $0x1a8] sm:$0xff]
      %v201 = vld [vmem:[%s139 + $0x1b0] sm:$0xff]
      %v202 = vld [vmem:[%s139 + $0x1b8] sm:$0xff]
      %v203 = vld [vmem:[%s139 + $0x1c0] sm:$0xff]
      %v204 = vld [vmem:[%s139 + $0x1c8] sm:$0xff]
      %v205 = vld [vmem:[%s139 + $0x1d0] sm:$0xff]
      %v206 = vld [vmem:[%s139 + $0x1d8] sm:$0xff]
      %v207 = vld [vmem:[%s139 + $0x1e0] sm:$0xff]
      %v208 = vld [vmem:[%s139 + $0x1e8] sm:$0xff]
      %v209 = vld [vmem:[%s139 + $0x1f0] sm:$0xff]
      %v210 = vld [vmem:[%s139 + $0x1f8] sm:$0xff]
      %v211 = vld [vmem:[%s1] sm:$0x1]
      %v212 = vlaneseq
      %v213 = vshrl.u32 %v212, 7
      %v214 = vsub.s32 0, %v213
      %v215 = vrot.slane %v211, %v214
      %v216 = vmul.f32 %v147, %v215
      %v217 = vmul.f32 %v148, %v215
      %v218 = vmul.f32 %v149, %v215
      %v219 = vmul.f32 %v150, %v215
      %v220 = vmul.f32 %v151, %v215
      %v221 = vmul.f32 %v152, %v215
      %v222 = vmul.f32 %v153, %v215
      %v223 = vmul.f32 %v154, %v215
      %v224 = vmul.f32 %v155, %v215
      %v225 = vmul.f32 %v156, %v215
      %v226 = vmul.f32 %v157, %v215
      %v227 = vmul.f32 %v158, %v215
      %v228 = vmul.f32 %v159, %v215
      %v229 = vmul.f32 %v160, %v215
      %v230 = vmul.f32 %v161, %v215
      %v231 = vmul.f32 %v162, %v215
      %v232 = vmul.f32 %v163, %v215
      %v233 = vmul.f32 %v164, %v215
      %v234 = vmul.f32 %v165, %v215
      %v235 = vmul.f32 %v166, %v215
      %v236 = vmul.f32 %v167, %v215
      %v237 = vmul.f32 %v168, %v215
      %v238 = vmul.f32 %v169, %v215
      %v239 = vmul.f32 %v170, %v215
      %v240 = vmul.f32 %v171, %v215
      %v241 = vmul.f32 %v172, %v215
      %v242 = vmul.f32 %v173, %v215
      %v243 = vmul.f32 %v174, %v215
      %v244 = vmul.f32 %v175, %v215
      %v245 = vmul.f32 %v176, %v215
      %v246 = vmul.f32 %v177, %v215
      %v247 = vmul.f32 %v178, %v215
      %v248 = vmul.f32 %v179, %v215
      %v249 = vmul.f32 %v180, %v215
      %v250 = vmul.f32 %v181, %v215
      %v251 = vmul.f32 %v182, %v215
      %v252 = vmul.f32 %v183, %v215
      %v253 = vmul.f32 %v184, %v215
      %v254 = vmul.f32 %v185, %v215
      %v255 = vmul.f32 %v186, %v215
      %v256 = vmul.f32 %v187, %v215
      %v257 = vmul.f32 %v188, %v215
      %v258 = vmul.f32 %v189, %v215
      %v259 = vmul.f32 %v190, %v215
      %v260 = vmul.f32 %v191, %v215
      %v261 = vmul.f32 %v192, %v215
      %v262 = vmul.f32 %v193, %v215
      %v263 = vmul.f32 %v194, %v215
      %v264 = vmul.f32 %v195, %v215
      %v265 = vmul.f32 %v196, %v215
      %v266 = vmul.f32 %v197, %v215
      %v267 = vmul.f32 %v198, %v215
      %v268 = vmul.f32 %v199, %v215
      %v269 = vmul.f32 %v200, %v215
      %v270 = vmul.f32 %v201, %v215
      %v271 = vmul.f32 %v202, %v215
      %v272 = vmul.f32 %v203, %v215
      %v273 = vmul.f32 %v204, %v215
      %v274 = vmul.f32 %v205, %v215
      %v275 = vmul.f32 %v206, %v215
      %v276 = vmul.f32 %v207, %v215
      %v277 = vmul.f32 %v208, %v215
      %v278 = vmul.f32 %v209, %v215
      %v279 = vmul.f32 %v210, %v215
      %v280 = vld [vmem:[%s1 + $0x1] sm:$0x1]
      %v281 = vlaneseq
      %v282 = vshrl.u32 %v281, 7
      %v283 = vsub.s32 0, %v282
      %v284 = vrot.slane %v280, %v283
      %v285 = vadd.f32 %v216, %v284
      %v286 = vadd.f32 %v217, %v284
      %v287 = vadd.f32 %v218, %v284
      %v288 = vadd.f32 %v219, %v284
      %v289 = vadd.f32 %v220, %v284
      %v290 = vadd.f32 %v221, %v284
      %v291 = vadd.f32 %v222, %v284
      %v292 = vadd.f32 %v223, %v284
      %v293 = vadd.f32 %v224, %v284
      %v294 = vadd.f32 %v225, %v284
      %v295 = vadd.f32 %v226, %v284
      %v296 = vadd.f32 %v227, %v284
      %v297 = vadd.f32 %v228, %v284
      %v298 = vadd.f32 %v229, %v284
      %v299 = vadd.f32 %v230, %v284
      %v300 = vadd.f32 %v231, %v284
      %v301 = vadd.f32 %v232, %v284
      %v302 = vadd.f32 %v233, %v284
      %v303 = vadd.f32 %v234, %v284
      %v304 = vadd.f32 %v235, %v284
      %v305 = vadd.f32 %v236, %v284
      %v306 = vadd.f32 %v237, %v284
      %v307 = vadd.f32 %v238, %v284
      %v308 = vadd.f32 %v239, %v284
      %v309 = vadd.f32 %v240, %v284
      %v310 = vadd.f32 %v241, %v284
      %v311 = vadd.f32 %v242, %v284
      %v312 = vadd.f32 %v243, %v284
      %v313 = vadd.f32 %v244, %v284
      %v314 = vadd.f32 %v245, %v284
      %v315 = vadd.f32 %v246, %v284
      %v316 = vadd.f32 %v247, %v284
      %v317 = vadd.f32 %v248, %v284
      %v318 = vadd.f32 %v249, %v284
      %v319 = vadd.f32 %v250, %v284
      %v320 = vadd.f32 %v251, %v284
      %v321 = vadd.f32 %v252, %v284
      %v322 = vadd.f32 %v253, %v284
      %v323 = vadd.f32 %v254, %v284
      %v324 = vadd.f32 %v255, %v284
      %v325 = vadd.f32 %v256, %v284
      %v326 = vadd.f32 %v257, %v284
      %v327 = vadd.f32 %v258, %v284
      %v328 = vadd.f32 %v259, %v284
      %v329 = vadd.f32 %v260, %v284
      %v330 = vadd.f32 %v261, %v284
      %v331 = vadd.f32 %v262, %v284
      %v332 = vadd.f32 %v263, %v284
      %v333 = vadd.f32 %v264, %v284
      %v334 = vadd.f32 %v265, %v284
      %v335 = vadd.f32 %v266, %v284
      %v336 = vadd.f32 %v267, %v284
      %v337 = vadd.f32 %v268, %v284
      %v338 = vadd.f32 %v269, %v284
      %v339 = vadd.f32 %v270, %v284
      %v340 = vadd.f32 %v271, %v284
      %v341 = vadd.f32 %v272, %v284
      %v342 = vadd.f32 %v273, %v284
      %v343 = vadd.f32 %v274, %v284
      %v344 = vadd.f32 %v275, %v284
      %v345 = vadd.f32 %v276, %v284
      %v346 = vadd.f32 %v277, %v284
      %v347 = vadd.f32 %v278, %v284
      %v348 = vadd.f32 %v279, %v284
      %v349 = vsub.f32 0.0, %v285
      %v350 = vsub.f32 0.0, %v286
      %v351 = vsub.f32 0.0, %v287
      %v352 = vsub.f32 0.0, %v288
      %v353 = vsub.f32 0.0, %v289
      %v354 = vsub.f32 0.0, %v290
      %v355 = vsub.f32 0.0, %v291
      %v356 = vsub.f32 0.0, %v292
      %v357 = vsub.f32 0.0, %v293
      %v358 = vsub.f32 0.0, %v294
      %v359 = vsub.f32 0.0, %v295
      %v360 = vsub.f32 0.0, %v296
      %v361 = vsub.f32 0.0, %v297
      %v362 = vsub.f32 0.0, %v298
      %v363 = vsub.f32 0.0, %v299
      %v364 = vsub.f32 0.0, %v300
      %v365 = vsub.f32 0.0, %v301
      %v366 = vsub.f32 0.0, %v302
      %v367 = vsub.f32 0.0, %v303
      %v368 = vsub.f32 0.0, %v304
      %v369 = vsub.f32 0.0, %v305
      %v370 = vsub.f32 0.0, %v306
      %v371 = vsub.f32 0.0, %v307
      %v372 = vsub.f32 0.0, %v308
      %v373 = vsub.f32 0.0, %v309
      %v374 = vsub.f32 0.0, %v310
      %v375 = vsub.f32 0.0, %v311
      %v376 = vsub.f32 0.0, %v312
      %v377 = vsub.f32 0.0, %v313
      %v378 = vsub.f32 0.0, %v314
      %v379 = vsub.f32 0.0, %v315
      %v380 = vsub.f32 0.0, %v316
      %v381 = vsub.f32 0.0, %v317
      %v382 = vsub.f32 0.0, %v318
      %v383 = vsub.f32 0.0, %v319
      %v384 = vsub.f32 0.0, %v320
      %v385 = vsub.f32 0.0, %v321
      %v386 = vsub.f32 0.0, %v322
      %v387 = vsub.f32 0.0, %v323
      %v388 = vsub.f32 0.0, %v324
      %v389 = vsub.f32 0.0, %v325
      %v390 = vsub.f32 0.0, %v326
      %v391 = vsub.f32 0.0, %v327
      %v392 = vsub.f32 0.0, %v328
      %v393 = vsub.f32 0.0, %v329
      %v394 = vsub.f32 0.0, %v330
      %v395 = vsub.f32 0.0, %v331
      %v396 = vsub.f32 0.0, %v332
      %v397 = vsub.f32 0.0, %v333
      %v398 = vsub.f32 0.0, %v334
      %v399 = vsub.f32 0.0, %v335
      %v400 = vsub.f32 0.0, %v336
      %v401 = vsub.f32 0.0, %v337
      %v402 = vsub.f32 0.0, %v338
      %v403 = vsub.f32 0.0, %v339
      %v404 = vsub.f32 0.0, %v340
      %v405 = vsub.f32 0.0, %v341
      %v406 = vsub.f32 0.0, %v342
      %v407 = vsub.f32 0.0, %v343
      %v408 = vsub.f32 0.0, %v344
      %v409 = vsub.f32 0.0, %v345
      %v410 = vsub.f32 0.0, %v346
      %v411 = vsub.f32 0.0, %v347
      %v412 = vsub.f32 0.0, %v348
      %v413 = vmul.f32 %v349, 1.442695
      %v414 = vpow.pop %v413
      %v415 = vmul.f32 %v350, 1.442695
      %v416 = vpow.pop %v415
      %v417 = vmul.f32 %v351, 1.442695
      %v418 = vpow.pop %v417
      %v419 = vmul.f32 %v352, 1.442695
      %v420 = vpow.pop %v419
      %v421 = vmul.f32 %v353, 1.442695
      %v422 = vpow.pop %v421
      %v423 = vmul.f32 %v354, 1.442695
      %v424 = vpow.pop %v423
      %v425 = vmul.f32 %v355, 1.442695
      %v426 = vpow.pop %v425
      %v427 = vmul.f32 %v356, 1.442695
      %v428 = vpow.pop %v427
      %v429 = vmul.f32 %v357, 1.442695
      %v430 = vpow.pop %v429
      %v431 = vmul.f32 %v358, 1.442695
      %v432 = vpow.pop %v431
      %v433 = vmul.f32 %v359, 1.442695
      %v434 = vpow.pop %v433
      %v435 = vmul.f32 %v360, 1.442695
      %v436 = vpow.pop %v435
      %v437 = vmul.f32 %v361, 1.442695
      %v438 = vpow.pop %v437
      %v439 = vmul.f32 %v362, 1.442695
      %v440 = vpow.pop %v439
      %v441 = vmul.f32 %v363, 1.442695
      %v442 = vpow.pop %v441
      %v443 = vmul.f32 %v364, 1.442695
      %v444 = vpow.pop %v443
      %v445 = vmul.f32 %v365, 1.442695
      %v446 = vpow.pop %v445
      %v447 = vmul.f32 %v366, 1.442695
      %v448 = vpow.pop %v447
      %v449 = vmul.f32 %v367, 1.442695
      %v450 = vpow.pop %v449
      %v451 = vmul.f32 %v368, 1.442695
      %v452 = vpow.pop %v451
      %v453 = vmul.f32 %v369, 1.442695
      %v454 = vpow.pop %v453
      %v455 = vmul.f32 %v370, 1.442695
      %v456 = vpow.pop %v455
      %v457 = vmul.f32 %v371, 1.442695
      %v458 = vpow.pop %v457
      %v459 = vmul.f32 %v372, 1.442695
      %v460 = vpow.pop %v459
      %v461 = vmul.f32 %v373, 1.442695
      %v462 = vpow.pop %v461
      %v463 = vmul.f32 %v374, 1.442695
      %v464 = vpow.pop %v463
      %v465 = vmul.f32 %v375, 1.442695
      %v466 = vpow.pop %v465
      %v467 = vmul.f32 %v376, 1.442695
      %v468 = vpow.pop %v467
      %v469 = vmul.f32 %v377, 1.442695
      %v470 = vpow.pop %v469
      %v471 = vmul.f32 %v378, 1.442695
      %v472 = vpow.pop %v471
      %v473 = vmul.f32 %v379, 1.442695
      %v474 = vpow.pop %v473
      %v475 = vmul.f32 %v380, 1.442695
      %v476 = vpow.pop %v475
      %v477 = vmul.f32 %v381, 1.442695
      %v478 = vpow.pop %v477
      %v479 = vmul.f32 %v382, 1.442695
      %v480 = vpow.pop %v479
      %v481 = vmul.f32 %v383, 1.442695
      %v482 = vpow.pop %v481
      %v483 = vmul.f32 %v384, 1.442695
      %v484 = vpow.pop %v483
      %v485 = vmul.f32 %v385, 1.442695
      %v486 = vpow.pop %v485
      %v487 = vmul.f32 %v386, 1.442695
      %v488 = vpow.pop %v487
      %v489 = vmul.f32 %v387, 1.442695
      %v490 = vpow.pop %v489
      %v491 = vmul.f32 %v388, 1.442695
      %v492 = vpow.pop %v491
      %v493 = vmul.f32 %v389, 1.442695
      %v494 = vpow.pop %v493
      %v495 = vmul.f32 %v390, 1.442695
      %v496 = vpow.pop %v495
      %v497 = vmul.f32 %v391, 1.442695
      %v498 = vpow.pop %v497
      %v499 = vmul.f32 %v392, 1.442695
      %v500 = vpow.pop %v499
      %v501 = vmul.f32 %v393, 1.442695
      %v502 = vpow.pop %v501
      %v503 = vmul.f32 %v394, 1.442695
      %v504 = vpow.pop %v503
      %v505 = vmul.f32 %v395, 1.442695
      %v506 = vpow.pop %v505
      %v507 = vmul.f32 %v396, 1.442695
      %v508 = vpow.pop %v507
      %v509 = vmul.f32 %v397, 1.442695
      %v510 = vpow.pop %v509
      %v511 = vmul.f32 %v398, 1.442695
      %v512 = vpow.pop %v511
      %v513 = vmul.f32 %v399, 1.442695
      %v514 = vpow.pop %v513
      %v515 = vmul.f32 %v400, 1.442695
      %v516 = vpow.pop %v515
      %v517 = vmul.f32 %v401, 1.442695
      %v518 = vpow.pop %v517
      %v519 = vmul.f32 %v402, 1.442695
      %v520 = vpow.pop %v519
      %v521 = vmul.f32 %v403, 1.442695
      %v522 = vpow.pop %v521
      %v523 = vmul.f32 %v404, 1.442695
      %v524 = vpow.pop %v523
      %v525 = vmul.f32 %v405, 1.442695
      %v526 = vpow.pop %v525
      %v527 = vmul.f32 %v406, 1.442695
      %v528 = vpow.pop %v527
      %v529 = vmul.f32 %v407, 1.442695
      %v530 = vpow.pop %v529
      %v531 = vmul.f32 %v408, 1.442695
      %v532 = vpow.pop %v531
      %v533 = vmul.f32 %v409, 1.442695
      %v534 = vpow.pop %v533
      %v535 = vmul.f32 %v410, 1.442695
      %v536 = vpow.pop %v535
      %v537 = vmul.f32 %v411, 1.442695
      %v538 = vpow.pop %v537
      %v539 = vmul.f32 %v412, 1.442695
      %v540 = vpow.pop %v539
      %v541 = vadd.f32 %v414, 1.0
      %v542 = vadd.f32 %v416, 1.0
      %v543 = vadd.f32 %v418, 1.0
      %v544 = vadd.f32 %v420, 1.0
      %v545 = vadd.f32 %v422, 1.0
      %v546 = vadd.f32 %v424, 1.0
      %v547 = vadd.f32 %v426, 1.0
      %v548 = vadd.f32 %v428, 1.0
      %v549 = vadd.f32 %v430, 1.0
      %v550 = vadd.f32 %v432, 1.0
      %v551 = vadd.f32 %v434, 1.0
      %v552 = vadd.f32 %v436, 1.0
      %v553 = vadd.f32 %v438, 1.0
      %v554 = vadd.f32 %v440, 1.0
      %v555 = vadd.f32 %v442, 1.0
      %v556 = vadd.f32 %v444, 1.0
      %v557 = vadd.f32 %v446, 1.0
      %v558 = vadd.f32 %v448, 1.0
      %v559 = vadd.f32 %v450, 1.0
      %v560 = vadd.f32 %v452, 1.0
      %v561 = vadd.f32 %v454, 1.0
      %v562 = vadd.f32 %v456, 1.0
      %v563 = vadd.f32 %v458, 1.0
      %v564 = vadd.f32 %v460, 1.0
      %v565 = vadd.f32 %v462, 1.0
      %v566 = vadd.f32 %v464, 1.0
      %v567 = vadd.f32 %v466, 1.0
      %v568 = vadd.f32 %v468, 1.0
      %v569 = vadd.f32 %v470, 1.0
      %v570 = vadd.f32 %v472, 1.0
      %v571 = vadd.f32 %v474, 1.0
      %v572 = vadd.f32 %v476, 1.0
      %v573 = vadd.f32 %v478, 1.0
      %v574 = vadd.f32 %v480, 1.0
      %v575 = vadd.f32 %v482, 1.0
      %v576 = vadd.f32 %v484, 1.0
      %v577 = vadd.f32 %v486, 1.0
      %v578 = vadd.f32 %v488, 1.0
      %v579 = vadd.f32 %v490, 1.0
      %v580 = vadd.f32 %v492, 1.0
      %v581 = vadd.f32 %v494, 1.0
      %v582 = vadd.f32 %v496, 1.0
      %v583 = vadd.f32 %v498, 1.0
      %v584 = vadd.f32 %v500, 1.0
      %v585 = vadd.f32 %v502, 1.0
      %v586 = vadd.f32 %v504, 1.0
      %v587 = vadd.f32 %v506, 1.0
      %v588 = vadd.f32 %v508, 1.0
      %v589 = vadd.f32 %v510, 1.0
      %v590 = vadd.f32 %v512, 1.0
      %v591 = vadd.f32 %v514, 1.0
      %v592 = vadd.f32 %v516, 1.0
      %v593 = vadd.f32 %v518, 1.0
      %v594 = vadd.f32 %v520, 1.0
      %v595 = vadd.f32 %v522, 1.0
      %v596 = vadd.f32 %v524, 1.0
      %v597 = vadd.f32 %v526, 1.0
      %v598 = vadd.f32 %v528, 1.0
      %v599 = vadd.f32 %v530, 1.0
      %v600 = vadd.f32 %v532, 1.0
      %v601 = vadd.f32 %v534, 1.0
      %v602 = vadd.f32 %v536, 1.0
      %v603 = vadd.f32 %v538, 1.0
      %v604 = vadd.f32 %v540, 1.0
      %v605 = vrcp.pop %v541
      %v606 = vrcp.pop %v542
      %v607 = vrcp.pop %v543
      %v608 = vrcp.pop %v544
      %v609 = vrcp.pop %v545
      %v610 = vrcp.pop %v546
      %v611 = vrcp.pop %v547
      %v612 = vrcp.pop %v548
      %v613 = vrcp.pop %v549
      %v614 = vrcp.pop %v550
      %v615 = vrcp.pop %v551
      %v616 = vrcp.pop %v552
      %v617 = vrcp.pop %v553
      %v618 = vrcp.pop %v554
      %v619 = vrcp.pop %v555
      %v620 = vrcp.pop %v556
      %v621 = vrcp.pop %v557
      %v622 = vrcp.pop %v558
      %v623 = vrcp.pop %v559
      %v624 = vrcp.pop %v560
      %v625 = vrcp.pop %v561
      %v626 = vrcp.pop %v562
      %v627 = vrcp.pop %v563
      %v628 = vrcp.pop %v564
      %v629 = vrcp.pop %v565
      %v630 = vrcp.pop %v566
      %v631 = vrcp.pop %v567
      %v632 = vrcp.pop %v568
      %v633 = vrcp.pop %v569
      %v634 = vrcp.pop %v570
      %v635 = vrcp.pop %v571
      %v636 = vrcp.pop %v572
      %v637 = vrcp.pop %v573
      %v638 = vrcp.pop %v574
      %v639 = vrcp.pop %v575
      %v640 = vrcp.pop %v576
      %v641 = vrcp.pop %v577
      %v642 = vrcp.pop %v578
      %v643 = vrcp.pop %v579
      %v644 = vrcp.pop %v580
      %v645 = vrcp.pop %v581
      %v646 = vrcp.pop %v582
      %v647 = vrcp.pop %v583
      %v648 = vrcp.pop %v584
      %v649 = vrcp.pop %v585
      %v650 = vrcp.pop %v586
      %v651 = vrcp.pop %v587
      %v652 = vrcp.pop %v588
      %v653 = vrcp.pop %v589
      %v654 = vrcp.pop %v590
      %v655 = vrcp.pop %v591
      %v656 = vrcp.pop %v592
      %v657 = vrcp.pop %v593
      %v658 = vrcp.pop %v594
      %v659 = vrcp.pop %v595
      %v660 = vrcp.pop %v596
      %v661 = vrcp.pop %v597
      %v662 = vrcp.pop %v598
      %v663 = vrcp.pop %v599
      %v664 = vrcp.pop %v600
      %v665 = vrcp.pop %v601
      %v666 = vrcp.pop %v602
      %v667 = vrcp.pop %v603
      %v668 = vrcp.pop %v604
      %v669 = vpack.c.bf16 %v606, %v605
      %v670 = vpack.c.bf16 %v608, %v607
      %v671 = vpack.c.bf16 %v610, %v609
      %v672 = vpack.c.bf16 %v612, %v611
      %v673 = vpack.c.bf16 %v614, %v613
      %v674 = vpack.c.bf16 %v616, %v615
      %v675 = vpack.c.bf16 %v618, %v617
      %v676 = vpack.c.bf16 %v620, %v619
      %v677 = vpack.c.bf16 %v622, %v621
      %v678 = vpack.c.bf16 %v624, %v623
      %v679 = vpack.c.bf16 %v626, %v625
      %v680 = vpack.c.bf16 %v628, %v627
      %v681 = vpack.c.bf16 %v630, %v629
      %v682 = vpack.c.bf16 %v632, %v631
      %v683 = vpack.c.bf16 %v634, %v633
      %v684 = vpack.c.bf16 %v636, %v635
      %v685 = vpack.c.bf16 %v638, %v637
      %v686 = vpack.c.bf16 %v640, %v639
      %v687 = vpack.c.bf16 %v642, %v641
      %v688 = vpack.c.bf16 %v644, %v643
      %v689 = vpack.c.bf16 %v646, %v645
      %v690 = vpack.c.bf16 %v648, %v647
      %v691 = vpack.c.bf16 %v650, %v649
      %v692 = vpack.c.bf16 %v652, %v651
      %v693 = vpack.c.bf16 %v654, %v653
      %v694 = vpack.c.bf16 %v656, %v655
      %v695 = vpack.c.bf16 %v658, %v657
      %v696 = vpack.c.bf16 %v660, %v659
      %v697 = vpack.c.bf16 %v662, %v661
      %v698 = vpack.c.bf16 %v664, %v663
      %v699 = vpack.c.bf16 %v666, %v665
      %v700 = vpack.c.bf16 %v668, %v667
      %v733 = vunpack.c.l.b16 %v669
      %v734 = vunpack.c.h.b16 %v669
      %v735 = vunpack.c.l.b16 %v670
      %v736 = vunpack.c.h.b16 %v670
      %v737 = vunpack.c.l.b16 %v671
      %v738 = vunpack.c.h.b16 %v671
      %v739 = vunpack.c.l.b16 %v672
      %v740 = vunpack.c.h.b16 %v672
      %v741 = vunpack.c.l.b16 %v673
      %v742 = vunpack.c.h.b16 %v673
      %v743 = vunpack.c.l.b16 %v674
      %v744 = vunpack.c.h.b16 %v674
      %v745 = vunpack.c.l.b16 %v675
      %v746 = vunpack.c.h.b16 %v675
      %v747 = vunpack.c.l.b16 %v676
      %v748 = vunpack.c.h.b16 %v676
      %v749 = vunpack.c.l.b16 %v677
      %v750 = vunpack.c.h.b16 %v677
      %v751 = vunpack.c.l.b16 %v678
      %v752 = vunpack.c.h.b16 %v678
      %v753 = vunpack.c.l.b16 %v679
      %v754 = vunpack.c.h.b16 %v679
      %v755 = vunpack.c.l.b16 %v680
      %v756 = vunpack.c.h.b16 %v680
      %v757 = vunpack.c.l.b16 %v681
      %v758 = vunpack.c.h.b16 %v681
      %v759 = vunpack.c.l.b16 %v682
      %v760 = vunpack.c.h.b16 %v682
      %v761 = vunpack.c.l.b16 %v683
      %v762 = vunpack.c.h.b16 %v683
      %v763 = vunpack.c.l.b16 %v684
      %v764 = vunpack.c.h.b16 %v684
      %v765 = vunpack.c.l.b16 %v685
      %v766 = vunpack.c.h.b16 %v685
      %v767 = vunpack.c.l.b16 %v686
      %v768 = vunpack.c.h.b16 %v686
      %v769 = vunpack.c.l.b16 %v687
      %v770 = vunpack.c.h.b16 %v687
      %v771 = vunpack.c.l.b16 %v688
      %v772 = vunpack.c.h.b16 %v688
      %v773 = vunpack.c.l.b16 %v689
      %v774 = vunpack.c.h.b16 %v689
      %v775 = vunpack.c.l.b16 %v690
      %v776 = vunpack.c.h.b16 %v690
      %v777 = vunpack.c.l.b16 %v691
      %v778 = vunpack.c.h.b16 %v691
      %v779 = vunpack.c.l.b16 %v692
      %v780 = vunpack.c.h.b16 %v692
      %v781 = vunpack.c.l.b16 %v693
      %v782 = vunpack.c.h.b16 %v693
      %v783 = vunpack.c.l.b16 %v694
      %v784 = vunpack.c.h.b16 %v694
      %v785 = vunpack.c.l.b16 %v695
      %v786 = vunpack.c.h.b16 %v695
      %v787 = vunpack.c.l.b16 %v696
      %v788 = vunpack.c.h.b16 %v696
      %v789 = vunpack.c.l.b16 %v697
      %v790 = vunpack.c.h.b16 %v697
      %v791 = vunpack.c.l.b16 %v698
      %v792 = vunpack.c.h.b16 %v698
      %v793 = vunpack.c.l.b16 %v699
      %v794 = vunpack.c.h.b16 %v699
      %v795 = vunpack.c.l.b16 %v700
      %v796 = vunpack.c.h.b16 %v700
      %v797 = vpack.c.b16 %v733, %v733
      %v798 = vpack.c.b16 %v734, %v734
      %v799 = vpack.c.b16 %v735, %v735
      %v800 = vpack.c.b16 %v736, %v736
      %v801 = vpack.c.b16 %v737, %v737
      %v802 = vpack.c.b16 %v738, %v738
      %v803 = vpack.c.b16 %v739, %v739
      %v804 = vpack.c.b16 %v740, %v740
      %v805 = vpack.c.b16 %v741, %v741
      %v806 = vpack.c.b16 %v742, %v742
      %v807 = vpack.c.b16 %v743, %v743
      %v808 = vpack.c.b16 %v744, %v744
      %v809 = vpack.c.b16 %v745, %v745
      %v810 = vpack.c.b16 %v746, %v746
      %v811 = vpack.c.b16 %v747, %v747
      %v812 = vpack.c.b16 %v748, %v748
      %v813 = vpack.c.b16 %v749, %v749
      %v814 = vpack.c.b16 %v750, %v750
      %v815 = vpack.c.b16 %v751, %v751
      %v816 = vpack.c.b16 %v752, %v752
      %v817 = vpack.c.b16 %v753, %v753
      %v818 = vpack.c.b16 %v754, %v754
      %v819 = vpack.c.b16 %v755, %v755
      %v820 = vpack.c.b16 %v756, %v756
      %v821 = vpack.c.b16 %v757, %v757
      %v822 = vpack.c.b16 %v758, %v758
      %v823 = vpack.c.b16 %v759, %v759
      %v824 = vpack.c.b16 %v760, %v760
      %v825 = vpack.c.b16 %v761, %v761
      %v826 = vpack.c.b16 %v762, %v762
      %v827 = vpack.c.b16 %v763, %v763
      %v828 = vpack.c.b16 %v764, %v764
      %v829 = vpack.c.b16 %v765, %v765
      %v830 = vpack.c.b16 %v766, %v766
      %v831 = vpack.c.b16 %v767, %v767
      %v832 = vpack.c.b16 %v768, %v768
      %v833 = vpack.c.b16 %v769, %v769
      %v834 = vpack.c.b16 %v770, %v770
      %v835 = vpack.c.b16 %v771, %v771
      %v836 = vpack.c.b16 %v772, %v772
      %v837 = vpack.c.b16 %v773, %v773
      %v838 = vpack.c.b16 %v774, %v774
      %v839 = vpack.c.b16 %v775, %v775
      %v840 = vpack.c.b16 %v776, %v776
      %v841 = vpack.c.b16 %v777, %v777
      %v842 = vpack.c.b16 %v778, %v778
      %v843 = vpack.c.b16 %v779, %v779
      %v844 = vpack.c.b16 %v780, %v780
      %v845 = vpack.c.b16 %v781, %v781
      %v846 = vpack.c.b16 %v782, %v782
      %v847 = vpack.c.b16 %v783, %v783
      %v848 = vpack.c.b16 %v784, %v784
      %v849 = vpack.c.b16 %v785, %v785
      %v850 = vpack.c.b16 %v786, %v786
      %v851 = vpack.c.b16 %v787, %v787
      %v852 = vpack.c.b16 %v788, %v788
      %v853 = vpack.c.b16 %v789, %v789
      %v854 = vpack.c.b16 %v790, %v790
      %v855 = vpack.c.b16 %v791, %v791
      %v856 = vpack.c.b16 %v792, %v792
      %v857 = vpack.c.b16 %v793, %v793
      %v858 = vpack.c.b16 %v794, %v794
      %v859 = vpack.c.b16 %v795, %v795
      %v860 = vpack.c.b16 %v796, %v796
      %925 = vst [vmem:[%s145] sm:$0xf] %v797
      %926 = vst [vmem:[%s145 + $0x4] sm:$0xf] %v798
      %927 = vst [vmem:[%s145 + $0x8] sm:$0xf] %v799
      %928 = vst [vmem:[%s145 + $0xc] sm:$0xf] %v800
      %929 = vst [vmem:[%s145 + $0x10] sm:$0xf] %v801
      %930 = vst [vmem:[%s145 + $0x14] sm:$0xf] %v802
      %931 = vst [vmem:[%s145 + $0x18] sm:$0xf] %v803
      %932 = vst [vmem:[%s145 + $0x1c] sm:$0xf] %v804
      %933 = vst [vmem:[%s145 + $0x20] sm:$0xf] %v805
      %934 = vst [vmem:[%s145 + $0x24] sm:$0xf] %v806
      %935 = vst [vmem:[%s145 + $0x28] sm:$0xf] %v807
      %936 = vst [vmem:[%s145 + $0x2c] sm:$0xf] %v808
      %937 = vst [vmem:[%s145 + $0x30] sm:$0xf] %v809
      %938 = vst [vmem:[%s145 + $0x34] sm:$0xf] %v810
      %939 = vst [vmem:[%s145 + $0x38] sm:$0xf] %v811
      %940 = vst [vmem:[%s145 + $0x3c] sm:$0xf] %v812
      %941 = vst [vmem:[%s145 + $0x40] sm:$0xf] %v813
      %942 = vst [vmem:[%s145 + $0x44] sm:$0xf] %v814
      %943 = vst [vmem:[%s145 + $0x48] sm:$0xf] %v815
      %944 = vst [vmem:[%s145 + $0x4c] sm:$0xf] %v816
      %945 = vst [vmem:[%s145 + $0x50] sm:$0xf] %v817
      %946 = vst [vmem:[%s145 + $0x54] sm:$0xf] %v818
      %947 = vst [vmem:[%s145 + $0x58] sm:$0xf] %v819
      %948 = vst [vmem:[%s145 + $0x5c] sm:$0xf] %v820
      %949 = vst [vmem:[%s145 + $0x60] sm:$0xf] %v821
      %950 = vst [vmem:[%s145 + $0x64] sm:$0xf] %v822
      %951 = vst [vmem:[%s145 + $0x68] sm:$0xf] %v823
      %952 = vst [vmem:[%s145 + $0x6c] sm:$0xf] %v824
      %953 = vst [vmem:[%s145 + $0x70] sm:$0xf] %v825
      %954 = vst [vmem:[%s145 + $0x74] sm:$0xf] %v826
      %955 = vst [vmem:[%s145 + $0x78] sm:$0xf] %v827
      %956 = vst [vmem:[%s145 + $0x7c] sm:$0xf] %v828
      %957 = vst [vmem:[%s145 + $0x80] sm:$0xf] %v829
      %958 = vst [vmem:[%s145 + $0x84] sm:$0xf] %v830
      %959 = vst [vmem:[%s145 + $0x88] sm:$0xf] %v831
      %960 = vst [vmem:[%s145 + $0x8c] sm:$0xf] %v832
      %961 = vst [vmem:[%s145 + $0x90] sm:$0xf] %v833
      %962 = vst [vmem:[%s145 + $0x94] sm:$0xf] %v834
      %963 = vst [vmem:[%s145 + $0x98] sm:$0xf] %v835
      %964 = vst [vmem:[%s145 + $0x9c] sm:$0xf] %v836
      %965 = vst [vmem:[%s145 + $0xa0] sm:$0xf] %v837
      %966 = vst [vmem:[%s145 + $0xa4] sm:$0xf] %v838
      %967 = vst [vmem:[%s145 + $0xa8] sm:$0xf] %v839
      %968 = vst [vmem:[%s145 + $0xac] sm:$0xf] %v840
      %969 = vst [vmem:[%s145 + $0xb0] sm:$0xf] %v841
      %970 = vst [vmem:[%s145 + $0xb4] sm:$0xf] %v842
      %971 = vst [vmem:[%s145 + $0xb8] sm:$0xf] %v843
      %972 = vst [vmem:[%s145 + $0xbc] sm:$0xf] %v844
      %973 = vst [vmem:[%s145 + $0xc0] sm:$0xf] %v845
      %974 = vst [vmem:[%s145 + $0xc4] sm:$0xf] %v846
      %975 = vst [vmem:[%s145 + $0xc8] sm:$0xf] %v847
      %976 = vst [vmem:[%s145 + $0xcc] sm:$0xf] %v848
      %977 = vst [vmem:[%s145 + $0xd0] sm:$0xf] %v849
      %978 = vst [vmem:[%s145 + $0xd4] sm:$0xf] %v850
      %979 = vst [vmem:[%s145 + $0xd8] sm:$0xf] %v851
      %980 = vst [vmem:[%s145 + $0xdc] sm:$0xf] %v852
      %981 = vst [vmem:[%s145 + $0xe0] sm:$0xf] %v853
      %982 = vst [vmem:[%s145 + $0xe4] sm:$0xf] %v854
      %983 = vst [vmem:[%s145 + $0xe8] sm:$0xf] %v855
      %984 = vst [vmem:[%s145 + $0xec] sm:$0xf] %v856
      %985 = vst [vmem:[%s145 + $0xf0] sm:$0xf] %v857
      %986 = vst [vmem:[%s145 + $0xf4] sm:$0xf] %v858
      %987 = vst [vmem:[%s145 + $0xf8] sm:$0xf] %v859
      %988 = vst [vmem:[%s145 + $0xfc] sm:$0xf] %v860
      %s989 = smul.u32 64, %s13
      %p990 = scmp.lt.s32.totalorder %s989, 255
      %s991 = scalar_select %p990, %s989, 255
      %s992 = smul.addr %s991, 4
      %s993 = scalar_lea.vmem %s2, %s992
      // Predicated region
      $region29: #{bn_lenet_forward.6} parent=27 // pred_check
        %p994 = pneg %p78
      $region30: #{bn_lenet_forward.6} parent=27 // pred_check_branch
        %996 = sbr.rel (%p994) target = $region32
      $region31: #{bn_lenet_forward.6} parent=27 // pred_region
        %s997 = smul.u32 64, %s13
      $region32: #{bn_lenet_forward.6} parent=27 // pred_fallthru
        _
    $region28: #{bn_lenet_forward.6} parent=5 // pred_fallthru
      _
    %p998 = scmp.le.s32.totalorder 2, %s8
    // Predicated region
    $region33: #{bn_lenet_forward.6} parent=5 // pred_check
      %p999 = pneg %p998
    $region34: #{bn_lenet_forward.6} parent=5 // pred_check_branch
      %1001 = sbr.rel (%p999) target = $region36
    $region35: #{bn_lenet_forward.6} parent=5 // pred_region
      %s1002 = ssub.s32 %s8, 2
      // Predicated region
      $region37: #{bn_lenet_forward.6} parent=35 // pred_check
        %p1003 = pneg %p84
      $region38: #{bn_lenet_forward.6} parent=35 // pred_check_branch
        %1005 = sbr.rel (%p1003) target = $region40
      $region39: #{bn_lenet_forward.6} parent=35 // pred_region
        %s1006 = smul.u32 64, %s14
        %p1007 = scmp.lt.s32.totalorder %s1006, 255
        %s1008 = scalar_select %p1007, %s1006, 255
        %s1009 = smul.addr %s1008, 4
        %s1010 = scalar_lea.vmem %s2, %s1009
      $region40: #{bn_lenet_forward.6} parent=35 // pred_fallthru
        _
    $region36: #{bn_lenet_forward.6} parent=5 // pred_fallthru
      _
  $region6: #{bn_lenet_forward.6} parent=0 // loop_footer
    %s12 = sadd.s32 1, %s8
  $region7: #{bn_lenet_forward.6} parent=0 // loop_footer_branch
    %7 = sbr.rel target = $region3
  $region8: #{bn_lenet_forward.6} parent=0 // loop_exit
    _

// kernel: bn_lenet_forward.7
$region0: #{bn_lenet_forward.7}
  #allocation0 [shape = 'u32[]', space=smem, size = 0x4, offset = 0x4, fixed_abs, tag = 'smem constant byte address 0x4 - core index']
  #allocation1 [shape = 'u32[144,128]{1,0:T(1,128)}', space=vmem, size = 0x12000, scoped, tag = 'internal scratch']
  %s0 = inlined_call_operand.vmem [shape: bf16[288,256], index: 0, kind: input, shape index: {}]
  %s1 = inlined_call_operand.vmem [shape: bf16[256,128], index: 1, kind: input, shape index: {}]
  %s2 = inlined_call_operand.vmem [shape: f32[288,128], index: 2, kind: output, shape index: {0}]
  %s3 = inlined_call_operand.vmem [shape: f32[8,128], index: 3, kind: output, shape index: {1}]
  %4 = xla_tuple %s2, %s3
  %s5 = sld [smem:[#allocation0]]
  $region26: #{bn_lenet_forward.7} parent=0
    _
  %s7 = ssub.s32 1, %s5
  %s8 = scalar_select 0, %s7, %s5
  // Predicated region
  $region2: #{bn_lenet_forward.7} parent=0 // pred_check
    _
  $region3: #{bn_lenet_forward.7} parent=0 // pred_check_branch
    %10 = sbr.rel (0) target = $region5
  $region4: #{bn_lenet_forward.7} parent=0 // pred_region
    _
  $region5: #{bn_lenet_forward.7} parent=0 // pred_fallthru
    _
  // Predicated region
  $region6: #{bn_lenet_forward.7} parent=0 // pred_check
    _
  $region7: #{bn_lenet_forward.7} parent=0 // pred_check_branch
    %12 = sbr.rel (0) target = $region9
  $region8: #{bn_lenet_forward.7} parent=0 // pred_region
    _
  $region9: #{bn_lenet_forward.7} parent=0 // pred_fallthru
    _
  %v14 = vld [vmem:[%s0] sm:$0xff]
  %v15 = vld [vmem:[%s0 + $0x8] sm:$0xff]
  %v16 = vld [vmem:[%s0 + $0x10] sm:$0xff]
  %v17 = vld [vmem:[%s0 + $0x18] sm:$0xff]
  %v18 = vld [vmem:[%s0 + $0x20] sm:$0xff]
  %v19 = vld [vmem:[%s0 + $0x28] sm:$0xff]
  %v20 = vld [vmem:[%s0 + $0x30] sm:$0xff]
  %v21 = vld [vmem:[%s0 + $0x38] sm:$0xff]
  %v22 = vld [vmem:[%s0 + $0x40] sm:$0xff]
  %v23 = vld [vmem:[%s0 + $0x48] sm:$0xff]
  %v24 = vld [vmem:[%s0 + $0x50] sm:$0xff]
  %v25 = vld [vmem:[%s0 + $0x58] sm:$0xff]
  %v26 = vld [vmem:[%s0 + $0x60] sm:$0xff]
  %v27 = vld [vmem:[%s0 + $0x68] sm:$0xff]
  %v28 = vld [vmem:[%s0 + $0x70] sm:$0xff]
  %v29 = vld [vmem:[%s0 + $0x78] sm:$0xff]
  %v30 = vld [vmem:[%s0 + $0x80] sm:$0xff]
  %v31 = vld [vmem:[%s0 + $0x88] sm:$0xff]
  %v32 = vld [vmem:[%s0 + $0x90] sm:$0xff]
  %v33 = vld [vmem:[%s0 + $0x98] sm:$0xff]
  %v34 = vld [vmem:[%s0 + $0xa0] sm:$0xff]
  %v35 = vld [vmem:[%s0 + $0xa8] sm:$0xff]
  %v36 = vld [vmem:[%s0 + $0xb0] sm:$0xff]
  %v37 = vld [vmem:[%s0 + $0xb8] sm:$0xff]
  %v38 = vld [vmem:[%s0 + $0xc0] sm:$0xff]
  %v39 = vld [vmem:[%s0 + $0xc8] sm:$0xff]
  %v40 = vld [vmem:[%s0 + $0xd0] sm:$0xff]
  %v41 = vld [vmem:[%s0 + $0xd8] sm:$0xff]
  %v42 = vld [vmem:[%s0 + $0xe0] sm:$0xff]
  %v43 = vld [vmem:[%s0 + $0xe8] sm:$0xff]
  %v44 = vld [vmem:[%s0 + $0xf0] sm:$0xff]
  %v45 = vld [vmem:[%s0 + $0xf8] sm:$0xff]
  %v46 = vld [vmem:[%s0 + $0x100] sm:$0xff]
  %v47 = vld [vmem:[%s0 + $0x108] sm:$0xff]
  %v48 = vld [vmem:[%s0 + $0x110] sm:$0xff]
  %v49 = vld [vmem:[%s0 + $0x118] sm:$0xff]
  %v50 = vld [vmem:[%s1] sm:$0xf]
  %v51 = vld [vmem:[%s1 + $0x4] sm:$0xf]
  %v52 = vld [vmem:[%s1 + $0x8] sm:$0xf]
  %v53 = vld [vmem:[%s1 + $0xc] sm:$0xf]
  %v54 = vld [vmem:[%s1 + $0x10] sm:$0xf]
  %v55 = vld [vmem:[%s1 + $0x14] sm:$0xf]
  %v56 = vld [vmem:[%s1 + $0x18] sm:$0xf]
  %v57 = vld [vmem:[%s1 + $0x1c] sm:$0xf]
  %v58 = vld [vmem:[%s1 + $0x20] sm:$0xf]
  %v59 = vld [vmem:[%s1 + $0x24] sm:$0xf]
  %v60 = vld [vmem:[%s1 + $0x28] sm:$0xf]
  %v61 = vld [vmem:[%s1 + $0x2c] sm:$0xf]
  %v62 = vld [vmem:[%s1 + $0x30] sm:$0xf]
  %v63 = vld [vmem:[%s1 + $0x34] sm:$0xf]
  %v64 = vld [vmem:[%s1 + $0x38] sm:$0xf]
  %v65 = vld [vmem:[%s1 + $0x3c] sm:$0xf]
  %v66 = vld [vmem:[%s1 + $0x40] sm:$0xf]
  %v67 = vld [vmem:[%s1 + $0x44] sm:$0xf]
  %v68 = vld [vmem:[%s1 + $0x48] sm:$0xf]
  %v69 = vld [vmem:[%s1 + $0x4c] sm:$0xf]
  %v70 = vld [vmem:[%s1 + $0x50] sm:$0xf]
  %v71 = vld [vmem:[%s1 + $0x54] sm:$0xf]
  %v72 = vld [vmem:[%s1 + $0x58] sm:$0xf]
  %v73 = vld [vmem:[%s1 + $0x5c] sm:$0xf]
  %v74 = vld [vmem:[%s1 + $0x60] sm:$0xf]
  %v75 = vld [vmem:[%s1 + $0x64] sm:$0xf]
  %v76 = vld [vmem:[%s1 + $0x68] sm:$0xf]
  %v77 = vld [vmem:[%s1 + $0x6c] sm:$0xf]
  %v78 = vld [vmem:[%s1 + $0x70] sm:$0xf]
  %v79 = vld [vmem:[%s1 + $0x74] sm:$0xf]
  %v80 = vld [vmem:[%s1 + $0x78] sm:$0xf]
  %v81 = vld [vmem:[%s1 + $0x7c] sm:$0xf]
  %v118 = vunpack.c.l.b16 %v14
  %v119 = vunpack.c.h.b16 %v14
  %v120 = vunpack.c.l.b16 %v15
  %v121 = vunpack.c.h.b16 %v15
  %v122 = vunpack.c.l.b16 %v16
  %v123 = vunpack.c.h.b16 %v16
  %v124 = vunpack.c.l.b16 %v17
  %v125 = vunpack.c.h.b16 %v17
  %v126 = vunpack.c.l.b16 %v18
  %v127 = vunpack.c.h.b16 %v18
  %v128 = vunpack.c.l.b16 %v19
  %v129 = vunpack.c.h.b16 %v19
  %v130 = vunpack.c.l.b16 %v20
  %v131 = vunpack.c.h.b16 %v20
  %v132 = vunpack.c.l.b16 %v21
  %v133 = vunpack.c.h.b16 %v21
  %v134 = vunpack.c.l.b16 %v22
  %v135 = vunpack.c.h.b16 %v22
  %v136 = vunpack.c.l.b16 %v23
  %v137 = vunpack.c.h.b16 %v23
  %v138 = vunpack.c.l.b16 %v24
  %v139 = vunpack.c.h.b16 %v24
  %v140 = vunpack.c.l.b16 %v25
  %v141 = vunpack.c.h.b16 %v25
  %v142 = vunpack.c.l.b16 %v26
  %v143 = vunpack.c.h.b16 %v26
  %v144 = vunpack.c.l.b16 %v27
  %v145 = vunpack.c.h.b16 %v27
  %v146 = vunpack.c.l.b16 %v28
  %v147 = vunpack.c.h.b16 %v28
  %v148 = vunpack.c.l.b16 %v29
  %v149 = vunpack.c.h.b16 %v29
  %v150 = vunpack.c.l.b16 %v30
  %v151 = vunpack.c.h.b16 %v30
  %v152 = vunpack.c.l.b16 %v31
  %v153 = vunpack.c.h.b16 %v31
  %v154 = vunpack.c.l.b16 %v32
  %v155 = vunpack.c.h.b16 %v32
  %v156 = vunpack.c.l.b16 %v33
  %v157 = vunpack.c.h.b16 %v33
  %v158 = vunpack.c.l.b16 %v34
  %v159 = vunpack.c.h.b16 %v34
  %v160 = vunpack.c.l.b16 %v35
  %v161 = vunpack.c.h.b16 %v35
  %v162 = vunpack.c.l.b16 %v36
  %v163 = vunpack.c.h.b16 %v36
  %v164 = vunpack.c.l.b16 %v37
  %v165 = vunpack.c.h.b16 %v37
  %v166 = vunpack.c.l.b16 %v38
  %v167 = vunpack.c.h.b16 %v38
  %v168 = vunpack.c.l.b16 %v39
  %v169 = vunpack.c.h.b16 %v39
  %v170 = vunpack.c.l.b16 %v40
  %v171 = vunpack.c.h.b16 %v40
  %v172 = vunpack.c.l.b16 %v41
  %v173 = vunpack.c.h.b16 %v41
  %v174 = vunpack.c.l.b16 %v42
  %v175 = vunpack.c.h.b16 %v42
  %v176 = vunpack.c.l.b16 %v43
  %v177 = vunpack.c.h.b16 %v43
  %v178 = vunpack.c.l.b16 %v44
  %v179 = vunpack.c.h.b16 %v44
  %v180 = vunpack.c.l.b16 %v45
  %v181 = vunpack.c.h.b16 %v45
  %v182 = vunpack.c.l.b16 %v46
  %v183 = vunpack.c.h.b16 %v46
  %v184 = vunpack.c.l.b16 %v47
  %v185 = vunpack.c.h.b16 %v47
  %v186 = vunpack.c.l.b16 %v48
  %v187 = vunpack.c.h.b16 %v48
  %v188 = vunpack.c.l.b16 %v49
  %v189 = vunpack.c.h.b16 %v49
  %v190 = vpack.c.b16 %v120, %v118
  %v191 = vpack.c.b16 %v121, %v119
  %v192 = vpack.c.b16 %v124, %v122
  %v193 = vpack.c.b16 %v125, %v123
  %v194 = vpack.c.b16 %v128, %v126
  %v195 = vpack.c.b16 %v129, %v127
  %v196 = vpack.c.b16 %v132, %v130
  %v197 = vpack.c.b16 %v133, %v131
  %v198 = vpack.c.b16 %v136, %v134
  %v199 = vpack.c.b16 %v137, %v135
  %v200 = vpack.c.b16 %v140, %v138
  %v201 = vpack.c.b16 %v141, %v139
  %v202 = vpack.c.b16 %v144, %v142
  %v203 = vpack.c.b16 %v145, %v143
  %v204 = vpack.c.b16 %v148, %v146
  %v205 = vpack.c.b16 %v149, %v147
  %v206 = vpack.c.b16 %v152, %v150
  %v207 = vpack.c.b16 %v153, %v151
  %v208 = vpack.c.b16 %v156, %v154
  %v209 = vpack.c.b16 %v157, %v155
  %v210 = vpack.c.b16 %v160, %v158
  %v211 = vpack.c.b16 %v161, %v159
  %v212 = vpack.c.b16 %v164, %v162
  %v213 = vpack.c.b16 %v165, %v163
  %v214 = vpack.c.b16 %v168, %v166
  %v215 = vpack.c.b16 %v169, %v167
  %v216 = vpack.c.b16 %v172, %v170
  %v217 = vpack.c.b16 %v173, %v171
  %v218 = vpack.c.b16 %v176, %v174
  %v219 = vpack.c.b16 %v177, %v175
  %v220 = vpack.c.b16 %v180, %v178
  %v221 = vpack.c.b16 %v181, %v179
  %v222 = vpack.c.b16 %v184, %v182
  %v223 = vpack.c.b16 %v185, %v183
  %v224 = vpack.c.b16 %v188, %v186
  %v225 = vpack.c.b16 %v189, %v187
  %v294 = vunpack.c.l.b16 %v50
  %v295 = vunpack.c.l.b16 %v51
  %v296 = vunpack.c.l.b16 %v52
  %v297 = vunpack.c.l.b16 %v53
  %v298 = vunpack.c.l.b16 %v54
  %v299 = vunpack.c.l.b16 %v55
  %v300 = vunpack.c.l.b16 %v56
  %v301 = vunpack.c.l.b16 %v57
  %v302 = vunpack.c.l.b16 %v58
  %v303 = vunpack.c.l.b16 %v59
  %v304 = vunpack.c.l.b16 %v60
  %v305 = vunpack.c.l.b16 %v61
  %v306 = vunpack.c.l.b16 %v62
  %v307 = vunpack.c.l.b16 %v63
  %v308 = vunpack.c.l.b16 %v64
  %v309 = vunpack.c.l.b16 %v65
  %v310 = vunpack.c.l.b16 %v66
  %v311 = vunpack.c.l.b16 %v67
  %v312 = vunpack.c.l.b16 %v68
  %v313 = vunpack.c.l.b16 %v69
  %v314 = vunpack.c.l.b16 %v70
  %v315 = vunpack.c.l.b16 %v71
  %v316 = vunpack.c.l.b16 %v72
  %v317 = vunpack.c.l.b16 %v73
  %v318 = vunpack.c.l.b16 %v74
  %v319 = vunpack.c.l.b16 %v75
  %v320 = vunpack.c.l.b16 %v76
  %v321 = vunpack.c.l.b16 %v77
  %v322 = vunpack.c.l.b16 %v78
  %v323 = vunpack.c.l.b16 %v79
  %v324 = vunpack.c.l.b16 %v80
  %v325 = vunpack.c.l.b16 %v81
  %v326 = vpack.c.b16 %v295, %v294
  %v327 = vpack.c.b16 %v297, %v296
  %v328 = vpack.c.b16 %v299, %v298
  %v329 = vpack.c.b16 %v301, %v300
  %v330 = vpack.c.b16 %v303, %v302
  %v331 = vpack.c.b16 %v305, %v304
  %v332 = vpack.c.b16 %v307, %v306
  %v333 = vpack.c.b16 %v309, %v308
  %v334 = vpack.c.b16 %v311, %v310
  %v335 = vpack.c.b16 %v313, %v312
  %v336 = vpack.c.b16 %v315, %v314
  %v337 = vpack.c.b16 %v317, %v316
  %v338 = vpack.c.b16 %v319, %v318
  %v339 = vpack.c.b16 %v321, %v320
  %v340 = vpack.c.b16 %v323, %v322
  %v341 = vpack.c.b16 %v325, %v324
  %358 = vmatprep.subr.bf16.mxu0 0
  %359 = vmatpush1.bf16.msra.mxu0 %v333
  %360 = vmatprep.subr.bf16.mxu0 0
  %361 = vmatpush1.bf16.msra.mxu0 %v332
  %362 = vmatprep.subr.bf16.mxu0 0
  %363 = vmatpush1.bf16.msra.mxu0 %v331
  %364 = vmatprep.subr.bf16.mxu0 0
  %365 = vmatpush1.bf16.msra.mxu0 %v330
  %366 = vmatprep.subr.bf16.mxu0 0
  %367 = vmatpush1.bf16.msra.mxu0 %v329
  %368 = vmatprep.subr.bf16.mxu0 0
  %369 = vmatpush1.bf16.msra.mxu0 %v328
  %370 = vmatprep.subr.bf16.mxu0 0
  %371 = vmatpush1.bf16.msra.mxu0 %v327
  %372 = vmatprep.subr.bf16.mxu0 0
  %373 = vmatpush1.bf16.msra.mxu0 %v326
  %374 = vmatprep.subr.bf16.mxu0 0
  %375 = vmatpush2.bf16.msra.mxu0 %v341
  %376 = vmatprep.subr.bf16.mxu0 0
  %377 = vmatpush2.bf16.msra.mxu0 %v340
  %378 = vmatprep.subr.bf16.mxu0 0
  %379 = vmatpush2.bf16.msra.mxu0 %v339
  %380 = vmatprep.subr.bf16.mxu0 0
  %381 = vmatpush2.bf16.msra.mxu0 %v338
  %382 = vmatprep.subr.bf16.mxu0 0
  %383 = vmatpush2.bf16.msra.mxu0 %v337
  %384 = vmatprep.subr.bf16.mxu0 0
  %385 = vmatpush2.bf16.msra.mxu0 %v336
  %386 = vmatprep.subr.bf16.mxu0 0
  %387 = vmatpush2.bf16.msra.mxu0 %v335
  %388 = vmatprep.subr.bf16.mxu0 0
  %389 = vmatpush2.bf16.msra.mxu0 %v334
  %390 = vmatprep.mubr.bf16.mxu0 %v191
  %391 = vmatmul.mubr.bf16.gmra.mxu0 %v190
  %v392 = vpop.f32.mrf.mxu0
  %v393 = vadd.f32 0.0, %v392
  %v394 = vpop.f32.mrf.mxu0
  %v395 = vpop.f32.mrf.mxu0
  %v396 = vadd.f32 0.0, %v395
  %v397 = vpop.f32.mrf.mxu0
  %398 = vmatprep.mubr.bf16.mxu0 %v193
  %399 = vmatmul.mubr.bf16.gmra.mxu0 %v192
  %v400 = vpop.f32.mrf.mxu0
  %v401 = vadd.f32 0.0, %v400
  %v402 = vpop.f32.mrf.mxu0
  %v403 = vpop.f32.mrf.mxu0
  %v404 = vadd.f32 0.0, %v403
  %v405 = vpop.f32.mrf.mxu0
  %406 = vmatprep.mubr.bf16.mxu0 %v195
  %407 = vmatmul.mubr.bf16.gmra.mxu0 %v194
  %v408 = vpop.f32.mrf.mxu0
  %v409 = vadd.f32 0.0, %v408
  %v410 = vpop.f32.mrf.mxu0
  %v411 = vpop.f32.mrf.mxu0
  %v412 = vadd.f32 0.0, %v411
  %v413 = vpop.f32.mrf.mxu0
  %414 = vmatprep.mubr.bf16.mxu0 %v197
  %415 = vmatmul.mubr.bf16.gmra.mxu0 %v196
  %v416 = vpop.f32.mrf.mxu0
  %v417 = vadd.f32 0.0, %v416
  %v418 = vpop.f32.mrf.mxu0
  %v419 = vpop.f32.mrf.mxu0
  %v420 = vadd.f32 0.0, %v419
  %v421 = vpop.f32.mrf.mxu0
  %422 = vmatprep.mubr.bf16.mxu0 %v199
  %423 = vmatmul.mubr.bf16.gmra.mxu0 %v198
  %v424 = vpop.f32.mrf.mxu0
  %v425 = vadd.f32 0.0, %v424
  %v426 = vpop.f32.mrf.mxu0
  %v427 = vpop.f32.mrf.mxu0
  %v428 = vadd.f32 0.0, %v427
  %v429 = vpop.f32.mrf.mxu0
  %430 = vmatprep.mubr.bf16.mxu0 %v201
  %431 = vmatmul.mubr.bf16.gmra.mxu0 %v200
  %v432 = vpop.f32.mrf.mxu0
  %v433 = vadd.f32 0.0, %v432
  %v434 = vpop.f32.mrf.mxu0
  %v435 = vpop.f32.mrf.mxu0
  %v436 = vadd.f32 0.0, %v435
  %v437 = vpop.f32.mrf.mxu0
  %438 = vmatprep.mubr.bf16.mxu0 %v203
  %439 = vmatmul.mubr.bf16.gmra.mxu0 %v202
  %v440 = vpop.f32.mrf.mxu0
  %v441 = vadd.f32 0.0, %v440
  %v442 = vpop.f32.mrf.mxu0
  %v443 = vpop.f32.mrf.mxu0
  %v444 = vadd.f32 0.0, %v443
  %v445 = vpop.f32.mrf.mxu0
  %446 = vmatprep.mubr.bf16.mxu0 %v205
  %447 = vmatmul.mubr.bf16.gmra.mxu0 %v204
  %v448 = vpop.f32.mrf.mxu0
  %v449 = vadd.f32 0.0, %v448
  %v450 = vpop.f32.mrf.mxu0
  %v451 = vpop.f32.mrf.mxu0
  %v452 = vadd.f32 0.0, %v451
  %v453 = vpop.f32.mrf.mxu0
  %454 = vmatprep.mubr.bf16.mxu0 %v207
  %455 = vmatmul.mubr.bf16.gmra.mxu0 %v206
  %v456 = vpop.f32.mrf.mxu0
  %v457 = vadd.f32 0.0, %v456
  %v458 = vpop.f32.mrf.mxu0
  %v459 = vpop.f32.mrf.mxu0
  %v460 = vadd.f32 0.0, %v459
  %v461 = vpop.f32.mrf.mxu0
  %462 = vmatprep.mubr.bf16.mxu0 %v209
  %463 = vmatmul.mubr.bf16.gmra.mxu0 %v208
  %v464 = vpop.f32.mrf.mxu0
  %v465 = vadd.f32 0.0, %v464
  %v466 = vpop.f32.mrf.mxu0
  %v467 = vpop.f32.mrf.mxu0
  %v468 = vadd.f32 0.0, %v467
  %v469 = vpop.f32.mrf.mxu0
  %470 = vmatprep.mubr.bf16.mxu0 %v211
  %471 = vmatmul.mubr.bf16.gmra.mxu0 %v210
  %v472 = vpop.f32.mrf.mxu0
  %v473 = vadd.f32 0.0, %v472
  %v474 = vpop.f32.mrf.mxu0
  %v475 = vpop.f32.mrf.mxu0
  %v476 = vadd.f32 0.0, %v475
  %v477 = vpop.f32.mrf.mxu0
  %478 = vmatprep.mubr.bf16.mxu0 %v213
  %479 = vmatmul.mubr.bf16.gmra.mxu0 %v212
  %v480 = vpop.f32.mrf.mxu0
  %v481 = vadd.f32 0.0, %v480
  %v482 = vpop.f32.mrf.mxu0
  %v483 = vpop.f32.mrf.mxu0
  %v484 = vadd.f32 0.0, %v483
  %v485 = vpop.f32.mrf.mxu0
  %486 = vmatprep.mubr.bf16.mxu0 %v215
  %487 = vmatmul.mubr.bf16.gmra.mxu0 %v214
  %v488 = vpop.f32.mrf.mxu0
  %v489 = vadd.f32 0.0, %v488
  %v490 = vpop.f32.mrf.mxu0
  %v491 = vpop.f32.mrf.mxu0
  %v492 = vadd.f32 0.0, %v491
  %v493 = vpop.f32.mrf.mxu0
  %494 = vmatprep.mubr.bf16.mxu0 %v217
  %495 = vmatmul.mubr.bf16.gmra.mxu0 %v216
  %v496 = vpop.f32.mrf.mxu0
  %v497 = vadd.f32 0.0, %v496
  %v498 = vpop.f32.mrf.mxu0
  %v499 = vpop.f32.mrf.mxu0
  %v500 = vadd.f32 0.0, %v499
  %v501 = vpop.f32.mrf.mxu0
  %502 = vmatprep.mubr.bf16.mxu0 %v219
  %503 = vmatmul.mubr.bf16.gmra.mxu0 %v218
  %v504 = vpop.f32.mrf.mxu0
  %v505 = vadd.f32 0.0, %v504
  %v506 = vpop.f32.mrf.mxu0
  %v507 = vpop.f32.mrf.mxu0
  %v508 = vadd.f32 0.0, %v507
  %v509 = vpop.f32.mrf.mxu0
  %510 = vmatprep.mubr.bf16.mxu0 %v221
  %511 = vmatmul.mubr.bf16.gmra.mxu0 %v220
  %v512 = vpop.f32.mrf.mxu0
  %v513 = vadd.f32 0.0, %v512
  %v514 = vpop.f32.mrf.mxu0
  %v515 = vpop.f32.mrf.mxu0
  %v516 = vadd.f32 0.0, %v515
  %v517 = vpop.f32.mrf.mxu0
  %518 = vmatprep.mubr.bf16.mxu0 %v223
  %519 = vmatmul.mubr.bf16.gmra.mxu0 %v222
  %v520 = vpop.f32.mrf.mxu0
  %v521 = vadd.f32 0.0, %v520
  %v522 = vpop.f32.mrf.mxu0
  %v523 = vpop.f32.mrf.mxu0
  %v524 = vadd.f32 0.0, %v523
  %v525 = vpop.f32.mrf.mxu0
  %526 = vmatprep.mubr.bf16.mxu0 %v225
  %527 = vmatmul.mubr.bf16.gmra.mxu0 %v224
  %v528 = vpop.f32.mrf.mxu0
  %v529 = vadd.f32 0.0, %v528
  %v530 = vpop.f32.mrf.mxu0
  %v531 = vpop.f32.mrf.mxu0
  %v532 = vadd.f32 0.0, %v531
  %v533 = vpop.f32.mrf.mxu0
  %534 = vdwg.mxu0
  %535 = vst [vmem:[%s2] sm:$0xff] %v393
  %536 = vst [vmem:[%s2 + $0x8] sm:$0xff] %v396
  %537 = vst [vmem:[%s2 + $0x10] sm:$0xff] %v401
  %538 = vst [vmem:[%s2 + $0x18] sm:$0xff] %v404
  %539 = vst [vmem:[%s2 + $0x20] sm:$0xff] %v409
  %540 = vst [vmem:[%s2 + $0x28] sm:$0xff] %v412
  %541 = vst [vmem:[%s2 + $0x30] sm:$0xff] %v417
  %542 = vst [vmem:[%s2 + $0x38] sm:$0xff] %v420
  %543 = vst [vmem:[%s2 + $0x40] sm:$0xff] %v425
  %544 = vst [vmem:[%s2 + $0x48] sm:$0xff] %v428
  %545 = vst [vmem:[%s2 + $0x50] sm:$0xff] %v433
  %546 = vst [vmem:[%s2 + $0x58] sm:$0xff] %v436
  %547 = vst [vmem:[%s2 + $0x60] sm:$0xff] %v441
  %548 = vst [vmem:[%s2 + $0x68] sm:$0xff] %v444
  %549 = vst [vmem:[%s2 + $0x70] sm:$0xff] %v449
  %550 = vst [vmem:[%s2 + $0x78] sm:$0xff] %v452
  %551 = vst [vmem:[%s2 + $0x80] sm:$0xff] %v457
  %552 = vst [vmem:[%s2 + $0x88] sm:$0xff] %v460
  %553 = vst [vmem:[%s2 + $0x90] sm:$0xff] %v465
  %554 = vst [vmem:[%s2 + $0x98] sm:$0xff] %v468
  %555 = vst [vmem:[%s2 + $0xa0] sm:$0xff] %v473
  %556 = vst [vmem:[%s2 + $0xa8] sm:$0xff] %v476
  %557 = vst [vmem:[%s2 + $0xb0] sm:$0xff] %v481
  %558 = vst [vmem:[%s2 + $0xb8] sm:$0xff] %v484
  %559 = vst [vmem:[%s2 + $0xc0] sm:$0xff] %v489
  %560 = vst [vmem:[%s2 + $0xc8] sm:$0xff] %v492
  %561 = vst [vmem:[%s2 + $0xd0] sm:$0xff] %v497
  %562 = vst [vmem:[%s2 + $0xd8] sm:$0xff] %v500
  %563 = vst [vmem:[%s2 + $0xe0] sm:$0xff] %v505
  %564 = vst [vmem:[%s2 + $0xe8] sm:$0xff] %v508
  %565 = vst [vmem:[%s2 + $0xf0] sm:$0xff] %v513
  %566 = vst [vmem:[%s2 + $0xf8] sm:$0xff] %v516
  %567 = vst [vmem:[%s2 + $0x100] sm:$0xff] %v521
  %568 = vst [vmem:[%s2 + $0x108] sm:$0xff] %v524
  %569 = vst [vmem:[%s2 + $0x110] sm:$0xff] %v529
  %570 = vst [vmem:[%s2 + $0x118] sm:$0xff] %v532
  %v571 = vadd.f32 %v393, %v396
  %v572 = vadd.f32 %v571, %v401
  %v573 = vadd.f32 %v572, %v404
  %v574 = vadd.f32 %v573, %v409
  %v575 = vadd.f32 %v574, %v412
  %v576 = vadd.f32 %v575, %v417
  %v577 = vadd.f32 %v576, %v420
  %v578 = vadd.f32 %v577, %v425
  %v579 = vadd.f32 %v578, %v428
  %v580 = vadd.f32 %v579, %v433
  %v581 = vadd.f32 %v580, %v436
  %v582 = vadd.f32 %v581, %v441
  %v583 = vadd.f32 %v582, %v444
  %v584 = vadd.f32 %v583, %v449
  %v585 = vadd.f32 %v584, %v452
  %v586 = vadd.f32 %v585, %v457
  %v587 = vadd.f32 %v586, %v460
  %v588 = vadd.f32 %v587, %v465
  %v589 = vadd.f32 %v588, %v468
  %v590 = vadd.f32 %v589, %v473
  %v591 = vadd.f32 %v590, %v476
  %v592 = vadd.f32 %v591, %v481
  %v593 = vadd.f32 %v592, %v484
  %v594 = vadd.f32 %v593, %v489
  %v595 = vadd.f32 %v594, %v492
  %v596 = vadd.f32 %v595, %v497
  %v597 = vadd.f32 %v596, %v500
  %v598 = vadd.f32 %v597, %v505
  %v599 = vadd.f32 %v598, %v508
  %v600 = vadd.f32 %v599, %v513
  %v601 = vadd.f32 %v600, %v516
  %v602 = vadd.f32 %v601, %v521
  %v603 = vadd.f32 %v602, %v524
  %v604 = vadd.f32 %v603, %v529
  %v605 = vadd.f32 %v604, %v532
  %v606 = vrot.slane %v605, 4
  %v607 = vadd.f32 %v605, %v606
  %v608 = vrot.slane %v607, 2
  %v609 = vadd.f32 %v607, %v608
  %v610 = vrot.slane %v609, 1
  %v611 = vadd.f32 %v609, %v610
  %v612 = vmul.f32 %v393, %v393
  %v613 = vmul.f32 %v396, %v396
  %v614 = vmul.f32 %v401, %v401
  %v615 = vmul.f32 %v404, %v404
  %v616 = vmul.f32 %v409, %v409
  %v617 = vmul.f32 %v412, %v412
  %v618 = vmul.f32 %v417, %v417
  %v619 = vmul.f32 %v420, %v420
  %v620 = vmul.f32 %v425, %v425
  %v621 = vmul.f32 %v428, %v428
  %v622 = vmul.f32 %v433, %v433
  %v623 = vmul.f32 %v436, %v436
  %v624 = vmul.f32 %v441, %v441
  %v625 = vmul.f32 %v444, %v444
  %v626 = vmul.f32 %v449, %v449
  %v627 = vmul.f32 %v452, %v452
  %v628 = vmul.f32 %v457, %v457
  %v629 = vmul.f32 %v460, %v460
  %v630 = vmul.f32 %v465, %v465
  %v631 = vmul.f32 %v468, %v468
  %v632 = vmul.f32 %v473, %v473
  %v633 = vmul.f32 %v476, %v476
  %v634 = vmul.f32 %v481, %v481
  %v635 = vmul.f32 %v484, %v484
  %v636 = vmul.f32 %v489, %v489
  %v637 = vmul.f32 %v492, %v492
  %v638 = vmul.f32 %v497, %v497
  %v639 = vmul.f32 %v500, %v500
  %v640 = vmul.f32 %v505, %v505
  %v641 = vmul.f32 %v508, %v508
  %v642 = vmul.f32 %v513, %v513
  %v643 = vmul.f32 %v516, %v516
  %v644 = vmul.f32 %v521, %v521
  %v645 = vmul.f32 %v524, %v524
  %v646 = vmul.f32 %v529, %v529
  %v647 = vmul.f32 %v532, %v532
  %v648 = vadd.f32 %v612, %v613
  %v649 = vadd.f32 %v648, %v614
  %v650 = vadd.f32 %v649, %v615
  %v651 = vadd.f32 %v650, %v616
  %v652 = vadd.f32 %v651, %v617
  %v653 = vadd.f32 %v652, %v618
  %v654 = vadd.f32 %v653, %v619
  %v655 = vadd.f32 %v654, %v620
  %v656 = vadd.f32 %v655, %v621
  %v657 = vadd.f32 %v656, %v622
  %v658 = vadd.f32 %v657, %v623
  %v659 = vadd.f32 %v658, %v624
  %v660 = vadd.f32 %v659, %v625
  %v661 = vadd.f32 %v660, %v626
  %v662 = vadd.f32 %v661, %v627
  %v663 = vadd.f32 %v662, %v628
  %v664 = vadd.f32 %v663, %v629
  %v665 = vadd.f32 %v664, %v630
  %v666 = vadd.f32 %v665, %v631
  %v667 = vadd.f32 %v666, %v632
  %v668 = vadd.f32 %v667, %v633
  %v669 = vadd.f32 %v668, %v634
  %v670 = vadd.f32 %v669, %v635
  %v671 = vadd.f32 %v670, %v636
  %v672 = vadd.f32 %v671, %v637
  %v673 = vadd.f32 %v672, %v638
  %v674 = vadd.f32 %v673, %v639
  %v675 = vadd.f32 %v674, %v640
  %v676 = vadd.f32 %v675, %v641
  %v677 = vadd.f32 %v676, %v642
  %v678 = vadd.f32 %v677, %v643
  %v679 = vadd.f32 %v678, %v644
  %v680 = vadd.f32 %v679, %v645
  %v681 = vadd.f32 %v680, %v646
  %v682 = vadd.f32 %v681, %v647
  %v683 = vrot.slane %v682, 4
  %v684 = vadd.f32 %v682, %v683
  %v685 = vrot.slane %v684, 2
  %v686 = vadd.f32 %v684, %v685
  %v687 = vrot.slane %v686, 1
  %v688 = vadd.f32 %v686, %v687
  %vm689 = vcmask 1040384
  %v690 = vsel %vm689, %v611, %v688
  %vm691 = vcmask 1041408
  %v692 = vsel %vm691, %v690, 0.0
  %693 = vst [vmem:[%s3] sm:$0xff] %v692
  // Predicated region
  $region10: #{bn_lenet_forward.7} parent=0 // pred_check
    _
  $region11: #{bn_lenet_forward.7} parent=0 // pred_check_branch
    %695 = sbr.rel (0) target = $region13
  $region12: #{bn_lenet_forward.7} parent=0 // pred_region
    _
  $region13: #{bn_lenet_forward.7} parent=0 // pred_fallthru
    _
  // Predicated region
  $region14: #{bn_lenet_forward.7} parent=0 // pred_check
    _
  $region15: #{bn_lenet_forward.7} parent=0 // pred_check_branch
    %697 = sbr.rel (0) target = $region17
  $region16: #{bn_lenet_forward.7} parent=0 // pred_region
    _
  $region17: #{bn_lenet_forward.7} parent=0 // pred_fallthru
    _
  // Predicated region
  $region18: #{bn_lenet_forward.7} parent=0 // pred_check
    _
  $region19: #{bn_lenet_forward.7} parent=0 // pred_check_branch
    %699 = sbr.rel (0) target = $region21
  $region20: #{bn_lenet_forward.7} parent=0 // pred_region
    _
  $region21: #{bn_lenet_forward.7} parent=0 // pred_fallthru
    _
  // Predicated region
  $region22: #{bn_lenet_forward.7} parent=0 // pred_check
    _
  $region23: #{bn_lenet_forward.7} parent=0 // pred_check_branch
    %701 = sbr.rel (0) target = $region25
  $region24: #{bn_lenet_forward.7} parent=0 // pred_region
    _
  $region25: #{bn_lenet_forward.7} parent=0 // pred_fallthru
    _

// kernel: bn_lenet_forward.8
$region0: #{bn_lenet_forward.8}
  #allocation0 [shape = 'u32[]', space=smem, size = 0x4, offset = 0x4, fixed_abs, tag = 'smem constant byte address 0x4 - core index']
  #allocation1 [shape = 'u32[144,128]{1,0:T(1,128)}', space=vmem, size = 0x12000, scoped, tag = 'internal scratch']
  %s0 = inlined_call_operand.vmem [shape: f32[288,128], index: 0, kind: input, shape index: {}]
  %s1 = inlined_call_operand.vmem [shape: f32[2,128], index: 1, kind: input, shape index: {}]
  %s2 = inlined_call_operand.vmem [shape: bf16[288,128], index: 2, kind: output, shape index: {}]
  %s3 = sld [smem:[#allocation0]]
  $region18: #{bn_lenet_forward.8} parent=0
    _
  %s5 = ssub.s32 1, %s3
  %s6 = scalar_select 0, %s5, %s3
  // Predicated region
  $region2: #{bn_lenet_forward.8} parent=0 // pred_check
    _
  $region3: #{bn_lenet_forward.8} parent=0 // pred_check_branch
    %8 = sbr.rel (0) target = $region5
  $region4: #{bn_lenet_forward.8} parent=0 // pred_region
    _
  $region5: #{bn_lenet_forward.8} parent=0 // pred_fallthru
    _
  // Predicated region
  $region6: #{bn_lenet_forward.8} parent=0 // pred_check
    _
  $region7: #{bn_lenet_forward.8} parent=0 // pred_check_branch
    %10 = sbr.rel (0) target = $region9
  $region8: #{bn_lenet_forward.8} parent=0 // pred_region
    _
  $region9: #{bn_lenet_forward.8} parent=0 // pred_fallthru
    _
  %v11 = vld [vmem:[%s0] sm:$0xff]
  %v12 = vld [vmem:[%s0 + $0x8] sm:$0xff]
  %v13 = vld [vmem:[%s0 + $0x10] sm:$0xff]
  %v14 = vld [vmem:[%s0 + $0x18] sm:$0xff]
  %v15 = vld [vmem:[%s0 + $0x20] sm:$0xff]
  %v16 = vld [vmem:[%s0 + $0x28] sm:$0xff]
  %v17 = vld [vmem:[%s0 + $0x30] sm:$0xff]
  %v18 = vld [vmem:[%s0 + $0x38] sm:$0xff]
  %v19 = vld [vmem:[%s0 + $0x40] sm:$0xff]
  %v20 = vld [vmem:[%s0 + $0x48] sm:$0xff]
  %v21 = vld [vmem:[%s0 + $0x50] sm:$0xff]
  %v22 = vld [vmem:[%s0 + $0x58] sm:$0xff]
  %v23 = vld [vmem:[%s0 + $0x60] sm:$0xff]
  %v24 = vld [vmem:[%s0 + $0x68] sm:$0xff]
  %v25 = vld [vmem:[%s0 + $0x70] sm:$0xff]
  %v26 = vld [vmem:[%s0 + $0x78] sm:$0xff]
  %v27 = vld [vmem:[%s0 + $0x80] sm:$0xff]
  %v28 = vld [vmem:[%s0 + $0x88] sm:$0xff]
  %v29 = vld [vmem:[%s0 + $0x90] sm:$0xff]
  %v30 = vld [vmem:[%s0 + $0x98] sm:$0xff]
  %v31 = vld [vmem:[%s0 + $0xa0] sm:$0xff]
  %v32 = vld [vmem:[%s0 + $0xa8] sm:$0xff]
  %v33 = vld [vmem:[%s0 + $0xb0] sm:$0xff]
  %v34 = vld [vmem:[%s0 + $0xb8] sm:$0xff]
  %v35 = vld [vmem:[%s0 + $0xc0] sm:$0xff]
  %v36 = vld [vmem:[%s0 + $0xc8] sm:$0xff]
  %v37 = vld [vmem:[%s0 + $0xd0] sm:$0xff]
  %v38 = vld [vmem:[%s0 + $0xd8] sm:$0xff]
  %v39 = vld [vmem:[%s0 + $0xe0] sm:$0xff]
  %v40 = vld [vmem:[%s0 + $0xe8] sm:$0xff]
  %v41 = vld [vmem:[%s0 + $0xf0] sm:$0xff]
  %v42 = vld [vmem:[%s0 + $0xf8] sm:$0xff]
  %v43 = vld [vmem:[%s0 + $0x100] sm:$0xff]
  %v44 = vld [vmem:[%s0 + $0x108] sm:$0xff]
  %v45 = vld [vmem:[%s0 + $0x110] sm:$0xff]
  %v46 = vld [vmem:[%s0 + $0x118] sm:$0xff]
  %v47 = vld [vmem:[%s1] sm:$0x1]
  %v48 = vlaneseq
  %v49 = vshrl.u32 %v48, 7
  %v50 = vsub.s32 0, %v49
  %v51 = vrot.slane %v47, %v50
  %v52 = vmul.f32 %v11, %v51
  %v53 = vmul.f32 %v12, %v51
  %v54 = vmul.f32 %v13, %v51
  %v55 = vmul.f32 %v14, %v51
  %v56 = vmul.f32 %v15, %v51
  %v57 = vmul.f32 %v16, %v51
  %v58 = vmul.f32 %v17, %v51
  %v59 = vmul.f32 %v18, %v51
  %v60 = vmul.f32 %v19, %v51
  %v61 = vmul.f32 %v20, %v51
  %v62 = vmul.f32 %v21, %v51
  %v63 = vmul.f32 %v22, %v51
  %v64 = vmul.f32 %v23, %v51
  %v65 = vmul.f32 %v24, %v51
  %v66 = vmul.f32 %v25, %v51
  %v67 = vmul.f32 %v26, %v51
  %v68 = vmul.f32 %v27, %v51
  %v69 = vmul.f32 %v28, %v51
  %v70 = vmul.f32 %v29, %v51
  %v71 = vmul.f32 %v30, %v51
  %v72 = vmul.f32 %v31, %v51
  %v73 = vmul.f32 %v32, %v51
  %v74 = vmul.f32 %v33, %v51
  %v75 = vmul.f32 %v34, %v51
  %v76 = vmul.f32 %v35, %v51
  %v77 = vmul.f32 %v36, %v51
  %v78 = vmul.f32 %v37, %v51
  %v79 = vmul.f32 %v38, %v51
  %v80 = vmul.f32 %v39, %v51
  %v81 = vmul.f32 %v40, %v51
  %v82 = vmul.f32 %v41, %v51
  %v83 = vmul.f32 %v42, %v51
  %v84 = vmul.f32 %v43, %v51
  %v85 = vmul.f32 %v44, %v51
  %v86 = vmul.f32 %v45, %v51
  %v87 = vmul.f32 %v46, %v51
  %v88 = vld [vmem:[%s1 + $0x1] sm:$0x1]
  %v89 = vlaneseq
  %v90 = vshrl.u32 %v89, 7
  %v91 = vsub.s32 0, %v90
  %v92 = vrot.slane %v88, %v91
  %v93 = vadd.f32 %v52, %v92
  %v94 = vadd.f32 %v53, %v92
  %v95 = vadd.f32 %v54, %v92
  %v96 = vadd.f32 %v55, %v92
  %v97 = vadd.f32 %v56, %v92
  %v98 = vadd.f32 %v57, %v92
  %v99 = vadd.f32 %v58, %v92
  %v100 = vadd.f32 %v59, %v92
  %v101 = vadd.f32 %v60, %v92
  %v102 = vadd.f32 %v61, %v92
  %v103 = vadd.f32 %v62, %v92
  %v104 = vadd.f32 %v63, %v92
  %v105 = vadd.f32 %v64, %v92
  %v106 = vadd.f32 %v65, %v92
  %v107 = vadd.f32 %v66, %v92
  %v108 = vadd.f32 %v67, %v92
  %v109 = vadd.f32 %v68, %v92
  %v110 = vadd.f32 %v69, %v92
  %v111 = vadd.f32 %v70, %v92
  %v112 = vadd.f32 %v71, %v92
  %v113 = vadd.f32 %v72, %v92
  %v114 = vadd.f32 %v73, %v92
  %v115 = vadd.f32 %v74, %v92
  %v116 = vadd.f32 %v75, %v92
  %v117 = vadd.f32 %v76, %v92
  %v118 = vadd.f32 %v77, %v92
  %v119 = vadd.f32 %v78, %v92
  %v120 = vadd.f32 %v79, %v92
  %v121 = vadd.f32 %v80, %v92
  %v122 = vadd.f32 %v81, %v92
  %v123 = vadd.f32 %v82, %v92
  %v124 = vadd.f32 %v83, %v92
  %v125 = vadd.f32 %v84, %v92
  %v126 = vadd.f32 %v85, %v92
  %v127 = vadd.f32 %v86, %v92
  %v128 = vadd.f32 %v87, %v92
  %v129 = vsub.f32 0.0, %v93
  %v130 = vsub.f32 0.0, %v94
  %v131 = vsub.f32 0.0, %v95
  %v132 = vsub.f32 0.0, %v96
  %v133 = vsub.f32 0.0, %v97
  %v134 = vsub.f32 0.0, %v98
  %v135 = vsub.f32 0.0, %v99
  %v136 = vsub.f32 0.0, %v100
  %v137 = vsub.f32 0.0, %v101
  %v138 = vsub.f32 0.0, %v102
  %v139 = vsub.f32 0.0, %v103
  %v140 = vsub.f32 0.0, %v104
  %v141 = vsub.f32 0.0, %v105
  %v142 = vsub.f32 0.0, %v106
  %v143 = vsub.f32 0.0, %v107
  %v144 = vsub.f32 0.0, %v108
  %v145 = vsub.f32 0.0, %v109
  %v146 = vsub.f32 0.0, %v110
  %v147 = vsub.f32 0.0, %v111
  %v148 = vsub.f32 0.0, %v112
  %v149 = vsub.f32 0.0, %v113
  %v150 = vsub.f32 0.0, %v114
  %v151 = vsub.f32 0.0, %v115
  %v152 = vsub.f32 0.0, %v116
  %v153 = vsub.f32 0.0, %v117
  %v154 = vsub.f32 0.0, %v118
  %v155 = vsub.f32 0.0, %v119
  %v156 = vsub.f32 0.0, %v120
  %v157 = vsub.f32 0.0, %v121
  %v158 = vsub.f32 0.0, %v122
  %v159 = vsub.f32 0.0, %v123
  %v160 = vsub.f32 0.0, %v124
  %v161 = vsub.f32 0.0, %v125
  %v162 = vsub.f32 0.0, %v126
  %v163 = vsub.f32 0.0, %v127
  %v164 = vsub.f32 0.0, %v128
  %v165 = vmul.f32 %v129, 1.442695
  %v166 = vpow.pop %v165
  %v167 = vmul.f32 %v130, 1.442695
  %v168 = vpow.pop %v167
  %v169 = vmul.f32 %v131, 1.442695
  %v170 = vpow.pop %v169
  %v171 = vmul.f32 %v132, 1.442695
  %v172 = vpow.pop %v171
  %v173 = vmul.f32 %v133, 1.442695
  %v174 = vpow.pop %v173
  %v175 = vmul.f32 %v134, 1.442695
  %v176 = vpow.pop %v175
  %v177 = vmul.f32 %v135, 1.442695
  %v178 = vpow.pop %v177
  %v179 = vmul.f32 %v136, 1.442695
  %v180 = vpow.pop %v179
  %v181 = vmul.f32 %v137, 1.442695
  %v182 = vpow.pop %v181
  %v183 = vmul.f32 %v138, 1.442695
  %v184 = vpow.pop %v183
  %v185 = vmul.f32 %v139, 1.442695
  %v186 = vpow.pop %v185
  %v187 = vmul.f32 %v140, 1.442695
  %v188 = vpow.pop %v187
  %v189 = vmul.f32 %v141, 1.442695
  %v190 = vpow.pop %v189
  %v191 = vmul.f32 %v142, 1.442695
  %v192 = vpow.pop %v191
  %v193 = vmul.f32 %v143, 1.442695
  %v194 = vpow.pop %v193
  %v195 = vmul.f32 %v144, 1.442695
  %v196 = vpow.pop %v195
  %v197 = vmul.f32 %v145, 1.442695
  %v198 = vpow.pop %v197
  %v199 = vmul.f32 %v146, 1.442695
  %v200 = vpow.pop %v199
  %v201 = vmul.f32 %v147, 1.442695
  %v202 = vpow.pop %v201
  %v203 = vmul.f32 %v148, 1.442695
  %v204 = vpow.pop %v203
  %v205 = vmul.f32 %v149, 1.442695
  %v206 = vpow.pop %v205
  %v207 = vmul.f32 %v150, 1.442695
  %v208 = vpow.pop %v207
  %v209 = vmul.f32 %v151, 1.442695
  %v210 = vpow.pop %v209
  %v211 = vmul.f32 %v152, 1.442695
  %v212 = vpow.pop %v211
  %v213 = vmul.f32 %v153, 1.442695
  %v214 = vpow.pop %v213
  %v215 = vmul.f32 %v154, 1.442695
  %v216 = vpow.pop %v215
  %v217 = vmul.f32 %v155, 1.442695
  %v218 = vpow.pop %v217
  %v219 = vmul.f32 %v156, 1.442695
  %v220 = vpow.pop %v219
  %v221 = vmul.f32 %v157, 1.442695
  %v222 = vpow.pop %v221
  %v223 = vmul.f32 %v158, 1.442695
  %v224 = vpow.pop %v223
  %v225 = vmul.f32 %v159, 1.442695
  %v226 = vpow.pop %v225
  %v227 = vmul.f32 %v160, 1.442695
  %v228 = vpow.pop %v227
  %v229 = vmul.f32 %v161, 1.442695
  %v230 = vpow.pop %v229
  %v231 = vmul.f32 %v162, 1.442695
  %v232 = vpow.pop %v231
  %v233 = vmul.f32 %v163, 1.442695
  %v234 = vpow.pop %v233
  %v235 = vmul.f32 %v164, 1.442695
  %v236 = vpow.pop %v235
  %v237 = vadd.f32 %v166, 1.0
  %v238 = vadd.f32 %v168, 1.0
  %v239 = vadd.f32 %v170, 1.0
  %v240 = vadd.f32 %v172, 1.0
  %v241 = vadd.f32 %v174, 1.0
  %v242 = vadd.f32 %v176, 1.0
  %v243 = vadd.f32 %v178, 1.0
  %v244 = vadd.f32 %v180, 1.0
  %v245 = vadd.f32 %v182, 1.0
  %v246 = vadd.f32 %v184, 1.0
  %v247 = vadd.f32 %v186, 1.0
  %v248 = vadd.f32 %v188, 1.0
  %v249 = vadd.f32 %v190, 1.0
  %v250 = vadd.f32 %v192, 1.0
  %v251 = vadd.f32 %v194, 1.0
  %v252 = vadd.f32 %v196, 1.0
  %v253 = vadd.f32 %v198, 1.0
  %v254 = vadd.f32 %v200, 1.0
  %v255 = vadd.f32 %v202, 1.0
  %v256 = vadd.f32 %v204, 1.0
  %v257 = vadd.f32 %v206, 1.0
  %v258 = vadd.f32 %v208, 1.0
  %v259 = vadd.f32 %v210, 1.0
  %v260 = vadd.f32 %v212, 1.0
  %v261 = vadd.f32 %v214, 1.0
  %v262 = vadd.f32 %v216, 1.0
  %v263 = vadd.f32 %v218, 1.0
  %v264 = vadd.f32 %v220, 1.0
  %v265 = vadd.f32 %v222, 1.0
  %v266 = vadd.f32 %v224, 1.0
  %v267 = vadd.f32 %v226, 1.0
  %v268 = vadd.f32 %v228, 1.0
  %v269 = vadd.f32 %v230, 1.0
  %v270 = vadd.f32 %v232, 1.0
  %v271 = vadd.f32 %v234, 1.0
  %v272 = vadd.f32 %v236, 1.0
  %v273 = vrcp.pop %v237
  %v274 = vrcp.pop %v238
  %v275 = vrcp.pop %v239
  %v276 = vrcp.pop %v240
  %v277 = vrcp.pop %v241
  %v278 = vrcp.pop %v242
  %v279 = vrcp.pop %v243
  %v280 = vrcp.pop %v244
  %v281 = vrcp.pop %v245
  %v282 = vrcp.pop %v246
  %v283 = vrcp.pop %v247
  %v284 = vrcp.pop %v248
  %v285 = vrcp.pop %v249
  %v286 = vrcp.pop %v250
  %v287 = vrcp.pop %v251
  %v288 = vrcp.pop %v252
  %v289 = vrcp.pop %v253
  %v290 = vrcp.pop %v254
  %v291 = vrcp.pop %v255
  %v292 = vrcp.pop %v256
  %v293 = vrcp.pop %v257
  %v294 = vrcp.pop %v258
  %v295 = vrcp.pop %v259
  %v296 = vrcp.pop %v260
  %v297 = vrcp.pop %v261
  %v298 = vrcp.pop %v262
  %v299 = vrcp.pop %v263
  %v300 = vrcp.pop %v264
  %v301 = vrcp.pop %v265
  %v302 = vrcp.pop %v266
  %v303 = vrcp.pop %v267
  %v304 = vrcp.pop %v268
  %v305 = vrcp.pop %v269
  %v306 = vrcp.pop %v270
  %v307 = vrcp.pop %v271
  %v308 = vrcp.pop %v272
  %v309 = vpack.c.bf16 %v274, %v273
  %v310 = vpack.c.bf16 %v276, %v275
  %v311 = vpack.c.bf16 %v278, %v277
  %v312 = vpack.c.bf16 %v280, %v279
  %v313 = vpack.c.bf16 %v282, %v281
  %v314 = vpack.c.bf16 %v284, %v283
  %v315 = vpack.c.bf16 %v286, %v285
  %v316 = vpack.c.bf16 %v288, %v287
  %v317 = vpack.c.bf16 %v290, %v289
  %v318 = vpack.c.bf16 %v292, %v291
  %v319 = vpack.c.bf16 %v294, %v293
  %v320 = vpack.c.bf16 %v296, %v295
  %v321 = vpack.c.bf16 %v298, %v297
  %v322 = vpack.c.bf16 %v300, %v299
  %v323 = vpack.c.bf16 %v302, %v301
  %v324 = vpack.c.bf16 %v304, %v303
  %v325 = vpack.c.bf16 %v306, %v305
  %v326 = vpack.c.bf16 %v308, %v307
  %v345 = vunpack.c.l.b16 %v309
  %v346 = vunpack.c.h.b16 %v309
  %v347 = vunpack.c.l.b16 %v310
  %v348 = vunpack.c.h.b16 %v310
  %v349 = vunpack.c.l.b16 %v311
  %v350 = vunpack.c.h.b16 %v311
  %v351 = vunpack.c.l.b16 %v312
  %v352 = vunpack.c.h.b16 %v312
  %v353 = vunpack.c.l.b16 %v313
  %v354 = vunpack.c.h.b16 %v313
  %v355 = vunpack.c.l.b16 %v314
  %v356 = vunpack.c.h.b16 %v314
  %v357 = vunpack.c.l.b16 %v315
  %v358 = vunpack.c.h.b16 %v315
  %v359 = vunpack.c.l.b16 %v316
  %v360 = vunpack.c.h.b16 %v316
  %v361 = vunpack.c.l.b16 %v317
  %v362 = vunpack.c.h.b16 %v317
  %v363 = vunpack.c.l.b16 %v318
  %v364 = vunpack.c.h.b16 %v318
  %v365 = vunpack.c.l.b16 %v319
  %v366 = vunpack.c.h.b16 %v319
  %v367 = vunpack.c.l.b16 %v320
  %v368 = vunpack.c.h.b16 %v320
  %v369 = vunpack.c.l.b16 %v321
  %v370 = vunpack.c.h.b16 %v321
  %v371 = vunpack.c.l.b16 %v322
  %v372 = vunpack.c.h.b16 %v322
  %v373 = vunpack.c.l.b16 %v323
  %v374 = vunpack.c.h.b16 %v323
  %v375 = vunpack.c.l.b16 %v324
  %v376 = vunpack.c.h.b16 %v324
  %v377 = vunpack.c.l.b16 %v325
  %v378 = vunpack.c.h.b16 %v325
  %v379 = vunpack.c.l.b16 %v326
  %v380 = vunpack.c.h.b16 %v326
  %v381 = vpack.c.b16 %v345, %v345
  %v382 = vpack.c.b16 %v346, %v346
  %v383 = vpack.c.b16 %v347, %v347
  %v384 = vpack.c.b16 %v348, %v348
  %v385 = vpack.c.b16 %v349, %v349
  %v386 = vpack.c.b16 %v350, %v350
  %v387 = vpack.c.b16 %v351, %v351
  %v388 = vpack.c.b16 %v352, %v352
  %v389 = vpack.c.b16 %v353, %v353
  %v390 = vpack.c.b16 %v354, %v354
  %v391 = vpack.c.b16 %v355, %v355
  %v392 = vpack.c.b16 %v356, %v356
  %v393 = vpack.c.b16 %v357, %v357
  %v394 = vpack.c.b16 %v358, %v358
  %v395 = vpack.c.b16 %v359, %v359
  %v396 = vpack.c.b16 %v360, %v360
  %v397 = vpack.c.b16 %v361, %v361
  %v398 = vpack.c.b16 %v362, %v362
  %v399 = vpack.c.b16 %v363, %v363
  %v400 = vpack.c.b16 %v364, %v364
  %v401 = vpack.c.b16 %v365, %v365
  %v402 = vpack.c.b16 %v366, %v366
  %v403 = vpack.c.b16 %v367, %v367
  %v404 = vpack.c.b16 %v368, %v368
  %v405 = vpack.c.b16 %v369, %v369
  %v406 = vpack.c.b16 %v370, %v370
  %v407 = vpack.c.b16 %v371, %v371
  %v408 = vpack.c.b16 %v372, %v372
  %v409 = vpack.c.b16 %v373, %v373
  %v410 = vpack.c.b16 %v374, %v374
  %v411 = vpack.c.b16 %v375, %v375
  %v412 = vpack.c.b16 %v376, %v376
  %v413 = vpack.c.b16 %v377, %v377
  %v414 = vpack.c.b16 %v378, %v378
  %v415 = vpack.c.b16 %v379, %v379
  %v416 = vpack.c.b16 %v380, %v380
  %453 = vst [vmem:[%s2] sm:$0xf] %v381
  %454 = vst [vmem:[%s2 + $0x4] sm:$0xf] %v382
  %455 = vst [vmem:[%s2 + $0x8] sm:$0xf] %v383
  %456 = vst [vmem:[%s2 + $0xc] sm:$0xf] %v384
  %457 = vst [vmem:[%s2 + $0x10] sm:$0xf] %v385
  %458 = vst [vmem:[%s2 + $0x14] sm:$0xf] %v386
  %459 = vst [vmem:[%s2 + $0x18] sm:$0xf] %v387
  %460 = vst [vmem:[%s2 + $0x1c] sm:$0xf] %v388
  %461 = vst [vmem:[%s2 + $0x20] sm:$0xf] %v389
  %462 = vst [vmem:[%s2 + $0x24] sm:$0xf] %v390
  %463 = vst [vmem:[%s2 + $0x28] sm:$0xf] %v391
  %464 = vst [vmem:[%s2 + $0x2c] sm:$0xf] %v392
  %465 = vst [vmem:[%s2 + $0x30] sm:$0xf] %v393
  %466 = vst [vmem:[%s2 + $0x34] sm:$0xf] %v394
  %467 = vst [vmem:[%s2 + $0x38] sm:$0xf] %v395
  %468 = vst [vmem:[%s2 + $0x3c] sm:$0xf] %v396
  %469 = vst [vmem:[%s2 + $0x40] sm:$0xf] %v397
  %470 = vst [vmem:[%s2 + $0x44] sm:$0xf] %v398
  %471 = vst [vmem:[%s2 + $0x48] sm:$0xf] %v399
  %472 = vst [vmem:[%s2 + $0x4c] sm:$0xf] %v400
  %473 = vst [vmem:[%s2 + $0x50] sm:$0xf] %v401
  %474 = vst [vmem:[%s2 + $0x54] sm:$0xf] %v402
  %475 = vst [vmem:[%s2 + $0x58] sm:$0xf] %v403
  %476 = vst [vmem:[%s2 + $0x5c] sm:$0xf] %v404
  %477 = vst [vmem:[%s2 + $0x60] sm:$0xf] %v405
  %478 = vst [vmem:[%s2 + $0x64] sm:$0xf] %v406
  %479 = vst [vmem:[%s2 + $0x68] sm:$0xf] %v407
  %480 = vst [vmem:[%s2 + $0x6c] sm:$0xf] %v408
  %481 = vst [vmem:[%s2 + $0x70] sm:$0xf] %v409
  %482 = vst [vmem:[%s2 + $0x74] sm:$0xf] %v410
  %483 = vst [vmem:[%s2 + $0x78] sm:$0xf] %v411
  %484 = vst [vmem:[%s2 + $0x7c] sm:$0xf] %v412
  %485 = vst [vmem:[%s2 + $0x80] sm:$0xf] %v413
  %486 = vst [vmem:[%s2 + $0x84] sm:$0xf] %v414
  %487 = vst [vmem:[%s2 + $0x88] sm:$0xf] %v415
  %488 = vst [vmem:[%s2 + $0x8c] sm:$0xf] %v416
  // Predicated region
  $region10: #{bn_lenet_forward.8} parent=0 // pred_check
    _
  $region11: #{bn_lenet_forward.8} parent=0 // pred_check_branch
    %490 = sbr.rel (0) target = $region13
  $region12: #{bn_lenet_forward.8} parent=0 // pred_region
    _
  $region13: #{bn_lenet_forward.8} parent=0 // pred_fallthru
    _
  // Predicated region
  $region14: #{bn_lenet_forward.8} parent=0 // pred_check
    _
  $region15: #{bn_lenet_forward.8} parent=0 // pred_check_branch
    %492 = sbr.rel (0) target = $region17
  $region16: #{bn_lenet_forward.8} parent=0 // pred_region
    _
  $region17: #{bn_lenet_forward.8} parent=0 // pred_fallthru
    _

// kernel: bn_lenet_forward.9
$region0: #{bn_lenet_forward.9}
  #allocation0 [shape = 'u32[]', space=smem, size = 0x4, offset = 0x4, fixed_abs, tag = 'smem constant byte address 0x4 - core index']
  #allocation1 [shape = 'u32[144,128]{1,0:T(1,128)}', space=vmem, size = 0x12000, scoped, tag = 'internal scratch']
  %s0 = inlined_call_operand.vmem [shape: bf16[2,640], index: 0, kind: input, shape index: {}]
  %s1 = inlined_call_operand.vmem [shape: bf16[640,128], index: 1, kind: input, shape index: {}]
  %s2 = inlined_call_operand.vmem [shape: f32[2,128], index: 2, kind: input, shape index: {}]
  %s3 = inlined_call_operand.vmem [shape: bf16[128,128], index: 3, kind: input, shape index: {}]
  %s4 = inlined_call_operand.vmem [shape: f32[2,128], index: 4, kind: input, shape index: {}]
  %s5 = inlined_call_operand.vmem [shape: bf16[128,128], index: 5, kind: input, shape index: {}]
  %s6 = inlined_call_operand.vmem [shape: f32[1,128], index: 6, kind: input, shape index: {}]
  %s7 = inlined_call_operand.hbm [shape: f32[2,128], index: 7, kind: output, shape index: {}]
  %s8 = sld [smem:[#allocation0]]
  $region38: #{bn_lenet_forward.9} parent=0
    _
  %s10 = ssub.s32 1, %s8
  %s11 = scalar_select 0, %s10, %s8
  $region1: #{bn_lenet_forward.9} parent=0
    #allocation2 [shape = 'u8[1024]{0}', space=vmem, size = 0x400, scoped, tag = 'output window, operand 0, single buffered']
    #allocation3 [shape = 's32[1]{0}', space=sflag, size = 0x4, scoped, tag = 'scoped memory for bn_lenet_forward.9']
    %12 = vsyncpa [#allocation3], 0
    // Predicated region
    $region2: #{bn_lenet_forward.9} parent=1 // pred_check
      _
    $region3: #{bn_lenet_forward.9} parent=1 // pred_check_branch
      %14 = sbr.rel (0) target = $region5
    $region4: #{bn_lenet_forward.9} parent=1 // pred_region
      _
    $region5: #{bn_lenet_forward.9} parent=1 // pred_fallthru
      _
    // Predicated region
    $region6: #{bn_lenet_forward.9} parent=1 // pred_check
      _
    $region7: #{bn_lenet_forward.9} parent=1 // pred_check_branch
      %16 = sbr.rel (0) target = $region9
    $region8: #{bn_lenet_forward.9} parent=1 // pred_region
      _
    $region9: #{bn_lenet_forward.9} parent=1 // pred_fallthru
      _
    // Predicated region
    $region10: #{bn_lenet_forward.9} parent=1 // pred_check
      _
    $region11: #{bn_lenet_forward.9} parent=1 // pred_check_branch
      %18 = sbr.rel (0) target = $region13
    $region12: #{bn_lenet_forward.9} parent=1 // pred_region
      _
    $region13: #{bn_lenet_forward.9} parent=1 // pred_fallthru
      _
    // Predicated region
    $region14: #{bn_lenet_forward.9} parent=1 // pred_check
      _
    $region15: #{bn_lenet_forward.9} parent=1 // pred_check_branch
      %20 = sbr.rel (0) target = $region17
    $region16: #{bn_lenet_forward.9} parent=1 // pred_region
      _
    $region17: #{bn_lenet_forward.9} parent=1 // pred_fallthru
      _
    // Predicated region
    $region18: #{bn_lenet_forward.9} parent=1 // pred_check
      _
    $region19: #{bn_lenet_forward.9} parent=1 // pred_check_branch
      %22 = sbr.rel (0) target = $region21
    $region20: #{bn_lenet_forward.9} parent=1 // pred_region
      _
    $region21: #{bn_lenet_forward.9} parent=1 // pred_fallthru
      _
    // Predicated region
    $region22: #{bn_lenet_forward.9} parent=1 // pred_check
      _
    $region23: #{bn_lenet_forward.9} parent=1 // pred_check_branch
      %24 = sbr.rel (0) target = $region25
    $region24: #{bn_lenet_forward.9} parent=1 // pred_region
      _
    $region25: #{bn_lenet_forward.9} parent=1 // pred_fallthru
      _
    // Predicated region
    $region26: #{bn_lenet_forward.9} parent=1 // pred_check
      _
    $region27: #{bn_lenet_forward.9} parent=1 // pred_check_branch
      %26 = sbr.rel (0) target = $region29
    $region28: #{bn_lenet_forward.9} parent=1 // pred_region
      _
    $region29: #{bn_lenet_forward.9} parent=1 // pred_fallthru
      _
    %v28 = vld [vmem:[%s0] sm:$0x1f]
    %v29 = vld [vmem:[%s1] sm:$0xf]
    %v30 = vld [vmem:[%s1 + $0x4] sm:$0xf]
    %v31 = vld [vmem:[%s1 + $0x8] sm:$0xf]
    %v32 = vld [vmem:[%s1 + $0xc] sm:$0xf]
    %v33 = vld [vmem:[%s1 + $0x10] sm:$0xf]
    %v34 = vld [vmem:[%s1 + $0x14] sm:$0xf]
    %v35 = vld [vmem:[%s1 + $0x18] sm:$0xf]
    %v36 = vld [vmem:[%s1 + $0x1c] sm:$0xf]
    %v37 = vld [vmem:[%s1 + $0x20] sm:$0xf]
    %v38 = vld [vmem:[%s1 + $0x24] sm:$0xf]
    %v39 = vld [vmem:[%s1 + $0x28] sm:$0xf]
    %v40 = vld [vmem:[%s1 + $0x2c] sm:$0xf]
    %v41 = vld [vmem:[%s1 + $0x30] sm:$0xf]
    %v42 = vld [vmem:[%s1 + $0x34] sm:$0xf]
    %v43 = vld [vmem:[%s1 + $0x38] sm:$0xf]
    %v44 = vld [vmem:[%s1 + $0x3c] sm:$0xf]
    %v45 = vld [vmem:[%s1 + $0x40] sm:$0xf]
    %v46 = vld [vmem:[%s1 + $0x44] sm:$0xf]
    %v47 = vld [vmem:[%s1 + $0x48] sm:$0xf]
    %v48 = vld [vmem:[%s1 + $0x4c] sm:$0xf]
    %v49 = vld [vmem:[%s1 + $0x50] sm:$0xf]
    %v50 = vld [vmem:[%s1 + $0x54] sm:$0xf]
    %v51 = vld [vmem:[%s1 + $0x58] sm:$0xf]
    %v52 = vld [vmem:[%s1 + $0x5c] sm:$0xf]
    %v53 = vld [vmem:[%s1 + $0x60] sm:$0xf]
    %v54 = vld [vmem:[%s1 + $0x64] sm:$0xf]
    %v55 = vld [vmem:[%s1 + $0x68] sm:$0xf]
    %v56 = vld [vmem:[%s1 + $0x6c] sm:$0xf]
    %v57 = vld [vmem:[%s1 + $0x70] sm:$0xf]
    %v58 = vld [vmem:[%s1 + $0x74] sm:$0xf]
    %v59 = vld [vmem:[%s1 + $0x78] sm:$0xf]
    %v60 = vld [vmem:[%s1 + $0x7c] sm:$0xf]
    %v61 = vld [vmem:[%s1 + $0x80] sm:$0xf]
    %v62 = vld [vmem:[%s1 + $0x84] sm:$0xf]
    %v63 = vld [vmem:[%s1 + $0x88] sm:$0xf]
    %v64 = vld [vmem:[%s1 + $0x8c] sm:$0xf]
    %v65 = vld [vmem:[%s1 + $0x90] sm:$0xf]
    %v66 = vld [vmem:[%s1 + $0x94] sm:$0xf]
    %v67 = vld [vmem:[%s1 + $0x98] sm:$0xf]
    %v68 = vld [vmem:[%s1 + $0x9c] sm:$0xf]
    %v69 = vld [vmem:[%s1 + $0xa0] sm:$0xf]
    %v70 = vld [vmem:[%s1 + $0xa4] sm:$0xf]
    %v71 = vld [vmem:[%s1 + $0xa8] sm:$0xf]
    %v72 = vld [vmem:[%s1 + $0xac] sm:$0xf]
    %v73 = vld [vmem:[%s1 + $0xb0] sm:$0xf]
    %v74 = vld [vmem:[%s1 + $0xb4] sm:$0xf]
    %v75 = vld [vmem:[%s1 + $0xb8] sm:$0xf]
    %v76 = vld [vmem:[%s1 + $0xbc] sm:$0xf]
    %v77 = vld [vmem:[%s1 + $0xc0] sm:$0xf]
    %v78 = vld [vmem:[%s1 + $0xc4] sm:$0xf]
    %v79 = vld [vmem:[%s1 + $0xc8] sm:$0xf]
    %v80 = vld [vmem:[%s1 + $0xcc] sm:$0xf]
    %v81 = vld [vmem:[%s1 + $0xd0] sm:$0xf]
    %v82 = vld [vmem:[%s1 + $0xd4] sm:$0xf]
    %v83 = vld [vmem:[%s1 + $0xd8] sm:$0xf]
    %v84 = vld [vmem:[%s1 + $0xdc] sm:$0xf]
    %v85 = vld [vmem:[%s1 + $0xe0] sm:$0xf]
    %v86 = vld [vmem:[%s1 + $0xe4] sm:$0xf]
    %v87 = vld [vmem:[%s1 + $0xe8] sm:$0xf]
    %v88 = vld [vmem:[%s1 + $0xec] sm:$0xf]
    %v89 = vld [vmem:[%s1 + $0xf0] sm:$0xf]
    %v90 = vld [vmem:[%s1 + $0xf4] sm:$0xf]
    %v91 = vld [vmem:[%s1 + $0xf8] sm:$0xf]
    %v92 = vld [vmem:[%s1 + $0xfc] sm:$0xf]
    %v93 = vld [vmem:[%s1 + $0x100] sm:$0xf]
    %v94 = vld [vmem:[%s1 + $0x104] sm:$0xf]
    %v95 = vld [vmem:[%s1 + $0x108] sm:$0xf]
    %v96 = vld [vmem:[%s1 + $0x10c] sm:$0xf]
    %v97 = vld [vmem:[%s1 + $0x110] sm:$0xf]
    %v98 = vld [vmem:[%s1 + $0x114] sm:$0xf]
    %v99 = vld [vmem:[%s1 + $0x118] sm:$0xf]
    %v100 = vld [vmem:[%s1 + $0x11c] sm:$0xf]
    %v101 = vld [vmem:[%s1 + $0x120] sm:$0xf]
    %v102 = vld [vmem:[%s1 + $0x124] sm:$0xf]
    %v103 = vld [vmem:[%s1 + $0x128] sm:$0xf]
    %v104 = vld [vmem:[%s1 + $0x12c] sm:$0xf]
    %v105 = vld [vmem:[%s1 + $0x130] sm:$0xf]
    %v106 = vld [vmem:[%s1 + $0x134] sm:$0xf]
    %v107 = vld [vmem:[%s1 + $0x138] sm:$0xf]
    %v108 = vld [vmem:[%s1 + $0x13c] sm:$0xf]
    %v110 = vcombine.high %v28, %v28
    %v112 = vunpack.c.l.s4 1966171168
    %v113 = vunpack.c.0.s8 %v112
    %v114 = vlaneseq
    %v115 = vshrl.u32 %v114, 7
    %v116 = vsub.s32 %v113, %v115
    %v117 = vrot.slane %v28, %v116
    %v119 = vunpack.c.l.s4 1966171168
    %v120 = vunpack.c.0.s8 %v119
    %v121 = vlaneseq
    %v122 = vshrl.u32 %v121, 7
    %v123 = vsub.s32 %v120, %v122
    %v124 = vrot.slane %v110, %v123
    %v125 = vcombine.high %v117, %v117
    %v127 = vunpack.c.l.s4 1966171168
    %v128 = vunpack.c.0.s8 %v127
    %v129 = vlaneseq
    %v130 = vshrl.u32 %v129, 7
    %v131 = vsub.s32 %v128, %v130
    %v132 = vrot.slane %v117, %v131
    %v134 = vunpack.c.l.s4 1966171168
    %v135 = vunpack.c.0.s8 %v134
    %v136 = vlaneseq
    %v137 = vshrl.u32 %v136, 7
    %v138 = vsub.s32 %v135, %v137
    %v139 = vrot.slane %v124, %v138
    %v141 = vunpack.c.l.s4 1966171168
    %v142 = vunpack.c.0.s8 %v141
    %v143 = vlaneseq
    %v144 = vshrl.u32 %v143, 7
    %v145 = vsub.s32 %v142, %v144
    %v146 = vrot.slane %v125, %v145
    %v147 = vcombine.high %v132, %v132
    %v148 = vcombine.high %v146, %v146
    %v234 = vunpack.c.l.b16 %v29
    %v235 = vunpack.c.l.b16 %v30
    %v236 = vunpack.c.l.b16 %v31
    %v237 = vunpack.c.l.b16 %v32
    %v238 = vunpack.c.l.b16 %v33
    %v239 = vunpack.c.l.b16 %v34
    %v240 = vunpack.c.l.b16 %v35
    %v241 = vunpack.c.l.b16 %v36
    %v242 = vunpack.c.l.b16 %v37
    %v243 = vunpack.c.l.b16 %v38
    %v244 = vunpack.c.l.b16 %v39
    %v245 = vunpack.c.l.b16 %v40
    %v246 = vunpack.c.l.b16 %v41
    %v247 = vunpack.c.l.b16 %v42
    %v248 = vunpack.c.l.b16 %v43
    %v249 = vunpack.c.l.b16 %v44
    %v250 = vunpack.c.l.b16 %v45
    %v251 = vunpack.c.l.b16 %v46
    %v252 = vunpack.c.l.b16 %v47
    %v253 = vunpack.c.l.b16 %v48
    %v254 = vunpack.c.l.b16 %v49
    %v255 = vunpack.c.l.b16 %v50
    %v256 = vunpack.c.l.b16 %v51
    %v257 = vunpack.c.l.b16 %v52
    %v258 = vunpack.c.l.b16 %v53
    %v259 = vunpack.c.l.b16 %v54
    %v260 = vunpack.c.l.b16 %v55
    %v261 = vunpack.c.l.b16 %v56
    %v262 = vunpack.c.l.b16 %v57
    %v263 = vunpack.c.l.b16 %v58
    %v264 = vunpack.c.l.b16 %v59
    %v265 = vunpack.c.l.b16 %v60
    %v266 = vunpack.c.l.b16 %v61
    %v267 = vunpack.c.l.b16 %v62
    %v268 = vunpack.c.l.b16 %v63
    %v269 = vunpack.c.l.b16 %v64
    %v270 = vunpack.c.l.b16 %v65
    %v271 = vunpack.c.l.b16 %v66
    %v272 = vunpack.c.l.b16 %v67
    %v273 = vunpack.c.l.b16 %v68
    %v274 = vunpack.c.l.b16 %v69
    %v275 = vunpack.c.l.b16 %v70
    %v276 = vunpack.c.l.b16 %v71
    %v277 = vunpack.c.l.b16 %v72
    %v278 = vunpack.c.l.b16 %v73
    %v279 = vunpack.c.l.b16 %v74
    %v280 = vunpack.c.l.b16 %v75
    %v281 = vunpack.c.l.b16 %v76
    %v282 = vunpack.c.l.b16 %v77
    %v283 = vunpack.c.l.b16 %v78
    %v284 = vunpack.c.l.b16 %v79
    %v285 = vunpack.c.l.b16 %v80
    %v286 = vunpack.c.l.b16 %v81
    %v287 = vunpack.c.l.b16 %v82
    %v288 = vunpack.c.l.b16 %v83
    %v289 = vunpack.c.l.b16 %v84
    %v290 = vunpack.c.l.b16 %v85
    %v291 = vunpack.c.l.b16 %v86
    %v292 = vunpack.c.l.b16 %v87
    %v293 = vunpack.c.l.b16 %v88
    %v294 = vunpack.c.l.b16 %v89
    %v295 = vunpack.c.l.b16 %v90
    %v296 = vunpack.c.l.b16 %v91
    %v297 = vunpack.c.l.b16 %v92
    %v298 = vunpack.c.l.b16 %v93
    %v299 = vunpack.c.l.b16 %v94
    %v300 = vunpack.c.l.b16 %v95
    %v301 = vunpack.c.l.b16 %v96
    %v302 = vunpack.c.l.b16 %v97
    %v303 = vunpack.c.l.b16 %v98
    %v304 = vunpack.c.l.b16 %v99
    %v305 = vunpack.c.l.b16 %v100
    %v306 = vunpack.c.l.b16 %v101
    %v307 = vunpack.c.l.b16 %v102
    %v308 = vunpack.c.l.b16 %v103
    %v309 = vunpack.c.l.b16 %v104
    %v310 = vunpack.c.l.b16 %v105
    %v311 = vunpack.c.l.b16 %v106
    %v312 = vunpack.c.l.b16 %v107
    %v313 = vunpack.c.l.b16 %v108
    %v314 = vpack.c.b16 %v235, %v234
    %v315 = vpack.c.b16 %v237, %v236
    %v316 = vpack.c.b16 %v239, %v238
    %v317 = vpack.c.b16 %v241, %v240
    %v318 = vpack.c.b16 %v243, %v242
    %v319 = vpack.c.b16 %v245, %v244
    %v320 = vpack.c.b16 %v247, %v246
    %v321 = vpack.c.b16 %v249, %v248
    %v322 = vpack.c.b16 %v251, %v250
    %v323 = vpack.c.b16 %v253, %v252
    %v324 = vpack.c.b16 %v255, %v254
    %v325 = vpack.c.b16 %v257, %v256
    %v326 = vpack.c.b16 %v259, %v258
    %v327 = vpack.c.b16 %v261, %v260
    %v328 = vpack.c.b16 %v263, %v262
    %v329 = vpack.c.b16 %v265, %v264
    %v330 = vpack.c.b16 %v267, %v266
    %v331 = vpack.c.b16 %v269, %v268
    %v332 = vpack.c.b16 %v271, %v270
    %v333 = vpack.c.b16 %v273, %v272
    %v334 = vpack.c.b16 %v275, %v274
    %v335 = vpack.c.b16 %v277, %v276
    %v336 = vpack.c.b16 %v279, %v278
    %v337 = vpack.c.b16 %v281, %v280
    %v338 = vpack.c.b16 %v283, %v282
    %v339 = vpack.c.b16 %v285, %v284
    %v340 = vpack.c.b16 %v287, %v286
    %v341 = vpack.c.b16 %v289, %v288
    %v342 = vpack.c.b16 %v291, %v290
    %v343 = vpack.c.b16 %v293, %v292
    %v344 = vpack.c.b16 %v295, %v294
    %v345 = vpack.c.b16 %v297, %v296
    %v346 = vpack.c.b16 %v299, %v298
    %v347 = vpack.c.b16 %v301, %v300
    %v348 = vpack.c.b16 %v303, %v302
    %v349 = vpack.c.b16 %v305, %v304
    %v350 = vpack.c.b16 %v307, %v306
    %v351 = vpack.c.b16 %v309, %v308
    %v352 = vpack.c.b16 %v311, %v310
    %v353 = vpack.c.b16 %v313, %v312
    %394 = vmatprep.subr.bf16.mxu0 0
    %395 = vmatpush1.bf16.msra.mxu0 %v321
    %396 = vmatprep.subr.bf16.mxu0 0
    %397 = vmatpush1.bf16.msra.mxu0 %v320
    %398 = vmatprep.subr.bf16.mxu0 0
    %399 = vmatpush1.bf16.msra.mxu0 %v319
    %400 = vmatprep.subr.bf16.mxu0 0
    %401 = vmatpush1.bf16.msra.mxu0 %v318
    %402 = vmatprep.subr.bf16.mxu0 0
    %403 = vmatpush1.bf16.msra.mxu0 %v317
    %404 = vmatprep.subr.bf16.mxu0 0
    %405 = vmatpush1.bf16.msra.mxu0 %v316
    %406 = vmatprep.subr.bf16.mxu0 0
    %407 = vmatpush1.bf16.msra.mxu0 %v315
    %408 = vmatprep.subr.bf16.mxu0 0
    %409 = vmatpush1.bf16.msra.mxu0 %v314
    %410 = vmatprep.subr.bf16.mxu0 0
    %411 = vmatpush2.bf16.msra.mxu0 %v329
    %412 = vmatprep.subr.bf16.mxu0 0
    %413 = vmatpush2.bf16.msra.mxu0 %v328
    %414 = vmatprep.subr.bf16.mxu0 0
    %415 = vmatpush2.bf16.msra.mxu0 %v327
    %416 = vmatprep.subr.bf16.mxu0 0
    %417 = vmatpush2.bf16.msra.mxu0 %v326
    %418 = vmatprep.subr.bf16.mxu0 0
    %419 = vmatpush2.bf16.msra.mxu0 %v325
    %420 = vmatprep.subr.bf16.mxu0 0
    %421 = vmatpush2.bf16.msra.mxu0 %v324
    %422 = vmatprep.subr.bf16.mxu0 0
    %423 = vmatpush2.bf16.msra.mxu0 %v323
    %424 = vmatprep.subr.bf16.mxu0 0
    %425 = vmatpush2.bf16.msra.mxu0 %v322
    %426 = vmatprep.mubr.bf16.mxu0 %v146
    %427 = vmatmul.mubr.bf16.gmra.mxu0 %v132
    %v428 = vpop.f32.mrf.mxu0
    %v429 = vadd.f32 0.0, %v428
    %v430 = vpop.f32.mrf.mxu0
    %v431 = vpop.f32.mrf.mxu0
    %v432 = vpop.f32.mrf.mxu0
    %433 = vdwg.mxu0
    %434 = vmatprep.subr.bf16.mxu0 0
    %435 = vmatpush1.bf16.msra.mxu0 %v337
    %436 = vmatprep.subr.bf16.mxu0 0
    %437 = vmatpush1.bf16.msra.mxu0 %v336
    %438 = vmatprep.subr.bf16.mxu0 0
    %439 = vmatpush1.bf16.msra.mxu0 %v335
    %440 = vmatprep.subr.bf16.mxu0 0
    %441 = vmatpush1.bf16.msra.mxu0 %v334
    %442 = vmatprep.subr.bf16.mxu0 0
    %443 = vmatpush1.bf16.msra.mxu0 %v333
    %444 = vmatprep.subr.bf16.mxu0 0
    %445 = vmatpush1.bf16.msra.mxu0 %v332
    %446 = vmatprep.subr.bf16.mxu0 0
    %447 = vmatpush1.bf16.msra.mxu0 %v331
    %448 = vmatprep.subr.bf16.mxu0 0
    %449 = vmatpush1.bf16.msra.mxu0 %v330
    %450 = vmatprep.subr.bf16.mxu0 0
    %451 = vmatpush2.bf16.msra.mxu0 %v345
    %452 = vmatprep.subr.bf16.mxu0 0
    %453 = vmatpush2.bf16.msra.mxu0 %v344
    %454 = vmatprep.subr.bf16.mxu0 0
    %455 = vmatpush2.bf16.msra.mxu0 %v343
    %456 = vmatprep.subr.bf16.mxu0 0
    %457 = vmatpush2.bf16.msra.mxu0 %v342
    %458 = vmatprep.subr.bf16.mxu0 0
    %459 = vmatpush2.bf16.msra.mxu0 %v341
    %460 = vmatprep.subr.bf16.mxu0 0
    %461 = vmatpush2.bf16.msra.mxu0 %v340
    %462 = vmatprep.subr.bf16.mxu0 0
    %463 = vmatpush2.bf16.msra.mxu0 %v339
    %464 = vmatprep.subr.bf16.mxu0 0
    %465 = vmatpush2.bf16.msra.mxu0 %v338
    %466 = vmatprep.mubr.bf16.mxu0 %v148
    %467 = vmatmul.mubr.bf16.gmra.mxu0 %v147
    %v468 = vpop.f32.mrf.mxu0
    %v469 = vadd.f32 %v429, %v468
    %v470 = vpop.f32.mrf.mxu0
    %v471 = vpop.f32.mrf.mxu0
    %v472 = vpop.f32.mrf.mxu0
    %473 = vdwg.mxu0
    %474 = vmatprep.subr.bf16.mxu0 0
    %475 = vmatpush1.bf16.msra.mxu0 %v353
    %476 = vmatprep.subr.bf16.mxu0 0
    %477 = vmatpush1.bf16.msra.mxu0 %v352
    %478 = vmatprep.subr.bf16.mxu0 0
    %479 = vmatpush1.bf16.msra.mxu0 %v351
    %480 = vmatprep.subr.bf16.mxu0 0
    %481 = vmatpush1.bf16.msra.mxu0 %v350
    %482 = vmatprep.subr.bf16.mxu0 0
    %483 = vmatpush1.bf16.msra.mxu0 %v349
    %484 = vmatprep.subr.bf16.mxu0 0
    %485 = vmatpush1.bf16.msra.mxu0 %v348
    %486 = vmatprep.subr.bf16.mxu0 0
    %487 = vmatpush1.bf16.msra.mxu0 %v347
    %488 = vmatprep.subr.bf16.mxu0 0
    %489 = vmatpush1.bf16.msra.mxu0 %v346
    %490 = vmatprep.subr.bf16.mxu0 0
    %491 = vmatpush2.bf16.msra.mxu0 0
    %492 = vmatprep.subr.bf16.mxu0 0
    %493 = vmatpush2.bf16.msra.mxu0 0
    %494 = vmatprep.subr.bf16.mxu0 0
    %495 = vmatpush2.bf16.msra.mxu0 0
    %496 = vmatprep.subr.bf16.mxu0 0
    %497 = vmatpush2.bf16.msra.mxu0 0
    %498 = vmatprep.subr.bf16.mxu0 0
    %499 = vmatpush2.bf16.msra.mxu0 0
    %500 = vmatprep.subr.bf16.mxu0 0
    %501 = vmatpush2.bf16.msra.mxu0 0
    %502 = vmatprep.subr.bf16.mxu0 0
    %503 = vmatpush2.bf16.msra.mxu0 0
    %504 = vmatprep.subr.bf16.mxu0 0
    %505 = vmatpush2.bf16.msra.mxu0 0
    %506 = vmatprep.mubr.bf16.mxu0 0
    %507 = vmatmul.mubr.bf16.gmra.mxu0 %v139
    %v508 = vpop.f32.mrf.mxu0
    %v509 = vadd.f32 %v469, %v508
    %v510 = vpop.f32.mrf.mxu0
    %v511 = vpop.f32.mrf.mxu0
    %v512 = vpop.f32.mrf.mxu0
    %513 = vdwg.mxu0
    %v514 = vld [vmem:[%s2] sm:$0x1]
    %v515 = vld [vmem:[%s2 + $0x1] sm:$0x1]
    %vm516 = vcmask 1041408
    %v517 = vsel %vm516, %v509, 0.0
    %v518 = vrot.slane %v517, 4
    %v519 = vadd.f32 %v517, %v518
    %v520 = vrot.slane %v519, 2
    %v521 = vadd.f32 %v519, %v520
    %v522 = vrot.slane %v521, 1
    %v523 = vadd.f32 %v521, %v522
    %v524 = vrcp.pop 2.0
    %v525 = vmul.f32 %v523, %v524
    %v526 = vmul.f32 %v509, %v509
    %v527 = vsel %vm516, %v526, 0.0
    %v528 = vrot.slane %v527, 4
    %v529 = vadd.f32 %v527, %v528
    %v530 = vrot.slane %v529, 2
    %v531 = vadd.f32 %v529, %v530
    %v532 = vrot.slane %v531, 1
    %v533 = vadd.f32 %v531, %v532
    %v534 = vmul.f32 %v533, %v524
    %v535 = vmul.f32 %v525, %v525
    %v536 = vsub.f32 %v534, %v535
    %v537 = vmax.f32 %v536, 0.0
    %v538 = vadd.f32 %v537, 1e-05
    %v539 = vrsqrt.pop %v538
    %v540 = vmul.f32 %v514, %v539
    %v541 = vmul.f32 %v525, %v540
    %v542 = vsub.f32 %v515, %v541
    %v543 = vlaneseq
    %v544 = vshrl.u32 %v543, 7
    %v545 = vsub.s32 0, %v544
    %v546 = vrot.slane %v540, %v545
    %v547 = vmul.f32 %v509, %v546
    %v548 = vlaneseq
    %v549 = vshrl.u32 %v548, 7
    %v550 = vsub.s32 0, %v549
    %v551 = vrot.slane %v542, %v550
    %v552 = vadd.f32 %v547, %v551
    %v553 = vsub.f32 0.0, %v552
    %v554 = vmul.f32 %v553, 1.442695
    %v555 = vpow.pop %v554
    %v556 = vadd.f32 %v555, 1.0
    %v557 = vrcp.pop %v556
    %v558 = vpack.c.bf16 %v557, %v557
    %v559 = vld [vmem:[%s3] sm:$0xf]
    %v560 = vld [vmem:[%s3 + $0x4] sm:$0xf]
    %v561 = vld [vmem:[%s3 + $0x8] sm:$0xf]
    %v562 = vld [vmem:[%s3 + $0xc] sm:$0xf]
    %v563 = vld [vmem:[%s3 + $0x10] sm:$0xf]
    %v564 = vld [vmem:[%s3 + $0x14] sm:$0xf]
    %v565 = vld [vmem:[%s3 + $0x18] sm:$0xf]
    %v566 = vld [vmem:[%s3 + $0x1c] sm:$0xf]
    %v567 = vld [vmem:[%s3 + $0x20] sm:$0xf]
    %v568 = vld [vmem:[%s3 + $0x24] sm:$0xf]
    %v569 = vld [vmem:[%s3 + $0x28] sm:$0xf]
    %v570 = vld [vmem:[%s3 + $0x2c] sm:$0xf]
    %v571 = vld [vmem:[%s3 + $0x30] sm:$0xf]
    %v572 = vld [vmem:[%s3 + $0x34] sm:$0xf]
    %v573 = vld [vmem:[%s3 + $0x38] sm:$0xf]
    %v574 = vld [vmem:[%s3 + $0x3c] sm:$0xf]
    %v591 = vunpack.c.l.b16 %v559
    %v592 = vunpack.c.l.b16 %v560
    %v593 = vunpack.c.l.b16 %v561
    %v594 = vunpack.c.l.b16 %v562
    %v595 = vunpack.c.l.b16 %v563
    %v596 = vunpack.c.l.b16 %v564
    %v597 = vunpack.c.l.b16 %v565
    %v598 = vunpack.c.l.b16 %v566
    %v599 = vunpack.c.l.b16 %v567
    %v600 = vunpack.c.l.b16 %v568
    %v601 = vunpack.c.l.b16 %v569
    %v602 = vunpack.c.l.b16 %v570
    %v603 = vunpack.c.l.b16 %v571
    %v604 = vunpack.c.l.b16 %v572
    %v605 = vunpack.c.l.b16 %v573
    %v606 = vunpack.c.l.b16 %v574
    %v607 = vpack.c.b16 %v592, %v591
    %v608 = vpack.c.b16 %v594, %v593
    %v609 = vpack.c.b16 %v596, %v595
    %v610 = vpack.c.b16 %v598, %v597
    %v611 = vpack.c.b16 %v600, %v599
    %v612 = vpack.c.b16 %v602, %v601
    %v613 = vpack.c.b16 %v604, %v603
    %v614 = vpack.c.b16 %v606, %v605
    %623 = vmatprep.subr.bf16.mxu0 0
    %624 = vmatpush1.bf16.msra.mxu0 %v614
    %625 = vmatprep.subr.bf16.mxu0 0
    %626 = vmatpush1.bf16.msra.mxu0 %v613
    %627 = vmatprep.subr.bf16.mxu0 0
    %628 = vmatpush1.bf16.msra.mxu0 %v612
    %629 = vmatprep.subr.bf16.mxu0 0
    %630 = vmatpush1.bf16.msra.mxu0 %v611
    %631 = vmatprep.subr.bf16.mxu0 0
    %632 = vmatpush1.bf16.msra.mxu0 %v610
    %633 = vmatprep.subr.bf16.mxu0 0
    %634 = vmatpush1.bf16.msra.mxu0 %v609
    %635 = vmatprep.subr.bf16.mxu0 0
    %636 = vmatpush1.bf16.msra.mxu0 %v608
    %637 = vmatprep.subr.bf16.mxu0 0
    %638 = vmatpush1.bf16.msra.mxu0 %v607
    %639 = vmatprep.subr.bf16.mxu0 0
    %640 = vmatpush2.bf16.msra.mxu0 0
    %641 = vmatprep.subr.bf16.mxu0 0
    %642 = vmatpush2.bf16.msra.mxu0 0
    %643 = vmatprep.subr.bf16.mxu0 0
    %644 = vmatpush2.bf16.msra.mxu0 0
    %645 = vmatprep.subr.bf16.mxu0 0
    %646 = vmatpush2.bf16.msra.mxu0 0
    %647 = vmatprep.subr.bf16.mxu0 0
    %648 = vmatpush2.bf16.msra.mxu0 0
    %649 = vmatprep.subr.bf16.mxu0 0
    %650 = vmatpush2.bf16.msra.mxu0 0
    %651 = vmatprep.subr.bf16.mxu0 0
    %652 = vmatpush2.bf16.msra.mxu0 0
    %653 = vmatprep.subr.bf16.mxu0 0
    %654 = vmatpush2.bf16.msra.mxu0 0
    %655 = vmatprep.mubr.bf16.mxu0 0
    %656 = vmatmul.mubr.bf16.gmra.mxu0 %v558
    %v657 = vpop.f32.mrf.mxu0
    %v658 = vadd.f32 0.0, %v657
    %v659 = vpop.f32.mrf.mxu0
    %v660 = vpop.f32.mrf.mxu0
    %v661 = vpop.f32.mrf.mxu0
    %662 = vdwg.mxu0
    %v663 = vld [vmem:[%s4] sm:$0x1]
    %v664 = vld [vmem:[%s4 + $0x1] sm:$0x1]
    %v665 = vsel %vm516, %v658, 0.0
    %v666 = vrot.slane %v665, 4
    %v667 = vadd.f32 %v665, %v666
    %v668 = vrot.slane %v667, 2
    %v669 = vadd.f32 %v667, %v668
    %v670 = vrot.slane %v669, 1
    %v671 = vadd.f32 %v669, %v670
    %v672 = vmul.f32 %v671, %v524
    %v673 = vmul.f32 %v658, %v658
    %v674 = vsel %vm516, %v673, 0.0
    %v675 = vrot.slane %v674, 4
    %v676 = vadd.f32 %v674, %v675
    %v677 = vrot.slane %v676, 2
    %v678 = vadd.f32 %v676, %v677
    %v679 = vrot.slane %v678, 1
    %v680 = vadd.f32 %v678, %v679
    %v681 = vmul.f32 %v680, %v524
    %v682 = vmul.f32 %v672, %v672
    %v683 = vsub.f32 %v681, %v682
    %v684 = vmax.f32 %v683, 0.0
    %v685 = vadd.f32 %v684, 1e-05
    %v686 = vrsqrt.pop %v685
    %v687 = vmul.f32 %v663, %v686
    %v688 = vmul.f32 %v672, %v687
    %v689 = vsub.f32 %v664, %v688
    %v690 = vlaneseq
    %v691 = vshrl.u32 %v690, 7
    %v692 = vsub.s32 0, %v691
    %v693 = vrot.slane %v687, %v692
    %v694 = vmul.f32 %v658, %v693
    %v695 = vlaneseq
    %v696 = vshrl.u32 %v695, 7
    %v697 = vsub.s32 0, %v696
    %v698 = vrot.slane %v689, %v697
    %v699 = vadd.f32 %v694, %v698
    %v700 = vsub.f32 0.0, %v699
    %v701 = vmul.f32 %v700, 1.442695
    %v702 = vpow.pop %v701
    %v703 = vadd.f32 %v702, 1.0
    %v704 = vrcp.pop %v703
    %v705 = vpack.c.bf16 %v704, %v704
    %v706 = vld [vmem:[%s5] sm:$0xf]
    %v707 = vld [vmem:[%s5 + $0x4] sm:$0xf]
    %v708 = vld [vmem:[%s5 + $0x8] sm:$0xf]
    %v709 = vld [vmem:[%s5 + $0xc] sm:$0xf]
    %v710 = vld [vmem:[%s5 + $0x10] sm:$0xf]
    %v711 = vld [vmem:[%s5 + $0x14] sm:$0xf]
    %v712 = vld [vmem:[%s5 + $0x18] sm:$0xf]
    %v713 = vld [vmem:[%s5 + $0x1c] sm:$0xf]
    %v714 = vld [vmem:[%s5 + $0x20] sm:$0xf]
    %v715 = vld [vmem:[%s5 + $0x24] sm:$0xf]
    %v716 = vld [vmem:[%s5 + $0x28] sm:$0xf]
    %v717 = vld [vmem:[%s5 + $0x2c] sm:$0xf]
    %v718 = vld [vmem:[%s5 + $0x30] sm:$0xf]
    %v719 = vld [vmem:[%s5 + $0x34] sm:$0xf]
    %v720 = vld [vmem:[%s5 + $0x38] sm:$0xf]
    %v721 = vld [vmem:[%s5 + $0x3c] sm:$0xf]
    %v722 = vld [vmem:[%s6] sm:$0x1]
    %v724 = vlaneseq
    %v725 = vshrl.u32 %v724, 7
    %v726 = vsub.s32 0, %v725
    %v727 = vrot.slane %v722, %v726
    %v745 = vunpack.c.l.b16 %v706
    %v746 = vunpack.c.l.b16 %v707
    %v747 = vunpack.c.l.b16 %v708
    %v748 = vunpack.c.l.b16 %v709
    %v749 = vunpack.c.l.b16 %v710
    %v750 = vunpack.c.l.b16 %v711
    %v751 = vunpack.c.l.b16 %v712
    %v752 = vunpack.c.l.b16 %v713
    %v753 = vunpack.c.l.b16 %v714
    %v754 = vunpack.c.l.b16 %v715
    %v755 = vunpack.c.l.b16 %v716
    %v756 = vunpack.c.l.b16 %v717
    %v757 = vunpack.c.l.b16 %v718
    %v758 = vunpack.c.l.b16 %v719
    %v759 = vunpack.c.l.b16 %v720
    %v760 = vunpack.c.l.b16 %v721
    %v761 = vpack.c.b16 %v746, %v745
    %v762 = vpack.c.b16 %v748, %v747
    %v763 = vpack.c.b16 %v750, %v749
    %v764 = vpack.c.b16 %v752, %v751
    %v765 = vpack.c.b16 %v754, %v753
    %v766 = vpack.c.b16 %v756, %v755
    %v767 = vpack.c.b16 %v758, %v757
    %v768 = vpack.c.b16 %v760, %v759
    %777 = vmatprep.subr.bf16.mxu0 0
    %778 = vmatpush1.bf16.msra.mxu0 %v768
    %779 = vmatprep.subr.bf16.mxu0 0
    %780 = vmatpush1.bf16.msra.mxu0 %v767
    %781 = vmatprep.subr.bf16.mxu0 0
    %782 = vmatpush1.bf16.msra.mxu0 %v766
    %783 = vmatprep.subr.bf16.mxu0 0
    %784 = vmatpush1.bf16.msra.mxu0 %v765
    %785 = vmatprep.subr.bf16.mxu0 0
    %786 = vmatpush1.bf16.msra.mxu0 %v764
    %787 = vmatprep.subr.bf16.mxu0 0
    %788 = vmatpush1.bf16.msra.mxu0 %v763
    %789 = vmatprep.subr.bf16.mxu0 0
    %790 = vmatpush1.bf16.msra.mxu0 %v762
    %791 = vmatprep.subr.bf16.mxu0 0
    %792 = vmatpush1.bf16.msra.mxu0 %v761
    %793 = vmatprep.subr.bf16.mxu0 0
    %794 = vmatpush2.bf16.msra.mxu0 0
    %795 = vmatprep.subr.bf16.mxu0 0
    %796 = vmatpush2.bf16.msra.mxu0 0
    %797 = vmatprep.subr.bf16.mxu0 0
    %798 = vmatpush2.bf16.msra.mxu0 0
    %799 = vmatprep.subr.bf16.mxu0 0
    %800 = vmatpush2.bf16.msra.mxu0 0
    %801 = vmatprep.subr.bf16.mxu0 0
    %802 = vmatpush2.bf16.msra.mxu0 0
    %803 = vmatprep.subr.bf16.mxu0 0
    %804 = vmatpush2.bf16.msra.mxu0 0
    %805 = vmatprep.subr.bf16.mxu0 0
    %806 = vmatpush2.bf16.msra.mxu0 0
    %807 = vmatprep.subr.bf16.mxu0 0
    %808 = vmatpush2.bf16.msra.mxu0 0
    %809 = vmatprep.mubr.bf16.mxu0 0
    %810 = vmatmul.mubr.bf16.gmra.mxu0 %v705
    %v811 = vpop.f32.mrf.mxu0
    %v812 = vadd.f32 %v727, %v811
    %v813 = vpop.f32.mrf.mxu0
    %v814 = vpop.f32.mrf.mxu0
    %v815 = vpop.f32.mrf.mxu0
    %816 = vdwg.mxu0
    %817 = vst [vmem:[#allocation2] sm:$0x3] %v812
    // Predicated region
    $region30: #{bn_lenet_forward.9} parent=1 // pred_check
      _
    $region31: #{bn_lenet_forward.9} parent=1 // pred_check_branch
      %819 = sbr.rel (0) target = $region33
    $region32: #{bn_lenet_forward.9} parent=1 // pred_region
      %s821 = ssub.s32 32, 32
      %822 = vsyncadd [#allocation3], %s821
      %s824 = sshll.u32 [#allocation2], 4
      %s825 = int_to_ptr.vmem [resolvable:$true] %s824
      %827 = dma.vmem_to_hbm [thread:$0]  %s825, 32, %s7, [#allocation3]
    $region33: #{bn_lenet_forward.9} parent=1 // pred_fallthru
      _
    // Predicated region
    $region34: #{bn_lenet_forward.9} parent=1 // pred_check
      _
    $region35: #{bn_lenet_forward.9} parent=1 // pred_check_branch
      %829 = sbr.rel (0) target = $region37
    $region36: #{bn_lenet_forward.9} parent=1 // pred_region
      %830 = dma.done [#allocation3], 32
    $region37: #{bn_lenet_forward.9} parent=1 // pred_fallthru
      _
    %831 = vsyncpa [#allocation3], 1

</llo_original>
